<compile_context>
chip_gen: v5e
topology: v5e:2x2
jax: 0.10.0
libtpu: 0.0.40
codegen_flags: <defaults>
</compile_context>

<pallas_src>
import functools

import jax
import jax.numpy as jnp
from jax.experimental import pallas as pl
from jax.experimental.pallas import tpu as pltpu

LANE = 128


def _round_up(n, m=LANE):
    return ((n + m - 1) // m) * m


# ---------------------------------------------------------------------------
# In-kernel helpers (operate on values, not refs, except weight refs).
# ---------------------------------------------------------------------------
def _masked_layer_norm(x, gamma, beta, mask, n_valid, eps=1e-5):
    """LayerNorm over the padded last dim; padded columns of x are exactly 0."""
    mean = jnp.sum(x, axis=-1, keepdims=True) * (1.0 / n_valid)
    cent = x - mean
    var = jnp.sum(cent * cent * mask, axis=-1, keepdims=True) * (1.0 / n_valid)
    # gamma/beta are zero on padded columns -> padded outputs stay exactly 0.
    return cent * jax.lax.rsqrt(var + eps) * gamma + beta


def _transformer_block(x, wq, wk, wv, wo, bq, bk, bv, bo,
                       w1, b1, w2, b2, g1, be1, g2, be2,
                       *, scale, mask, n_valid):
    """Single-head post-LN transformer block on one [S, Hp] slab (f32 in/out)."""
    xb = x.astype(jnp.bfloat16)
    q = jnp.dot(xb, wq[...], preferred_element_type=jnp.float32) + bq[...]
    k = jnp.dot(xb, wk[...], preferred_element_type=jnp.float32) + bk[...]
    v = jnp.dot(xb, wv[...], preferred_element_type=jnp.float32) + bv[...]
    q = q * scale                                    # fold 1/sqrt(H) into q

    # scores: contract the last dims of q and k (no explicit transpose).
    s = jax.lax.dot_general(
        q.astype(jnp.bfloat16), k.astype(jnp.bfloat16),
        dimension_numbers=(((1,), (1,)), ((), ())),
        preferred_element_type=jnp.float32)          # [S, S]
    s = s - jnp.max(s, axis=-1, keepdims=True)
    p = jnp.exp(s)
    p = p * pl.reciprocal(jnp.sum(p, axis=-1, keepdims=True), approx=True)

    a = jnp.dot(p.astype(jnp.bfloat16), v.astype(jnp.bfloat16),
                preferred_element_type=jnp.float32)  # [S, Hp]
    attn = jnp.dot(a.astype(jnp.bfloat16), wo[...],
                   preferred_element_type=jnp.float32) + bo[...]

    h = _masked_layer_norm(x + attn, g1[...], be1[...], mask, n_valid)

    ff = jnp.dot(h.astype(jnp.bfloat16), w1[...],
                 preferred_element_type=jnp.float32) + b1[...]
    ff = jnp.maximum(ff, 0.0)
    ff = jnp.dot(ff.astype(jnp.bfloat16), w2[...],
                 preferred_element_type=jnp.float32) + b2[...]

    return _masked_layer_norm(h + ff, g2[...], be2[...], mask, n_valid)


# ---------------------------------------------------------------------------
# Fused autoencoder kernel: one grid step == one batch element, everything
# (encoder, enc block, bottleneck, expand, dec block, output) in VMEM.
# ---------------------------------------------------------------------------
def _fused_ae_kernel(x_ref, *rest, hidden):
    o_ref = rest[-1]
    (enc_w, enc_b,
     e_wq, e_wk, e_wv, e_wo, e_bq, e_bk, e_bv, e_bo,
     e_w1, e_b1, e_w2, e_b2, e_g1, e_be1, e_g2, e_be2,
     bot_w, bot_b, exp_w, exp_b,
     d_wq, d_wk, d_wv, d_wo, d_bq, d_bk, d_bv, d_bo,
     d_w1, d_b1, d_w2, d_b2, d_g1, d_be1, d_g2, d_be2,
     out_w, out_b) = rest[:-1]

    hp = enc_w.shape[1]                              # padded hidden width
    n_valid = float(hidden)
    scale = 1.0 / (float(hidden) ** 0.5)

    # Hidden-dim validity mask (hoisted once; used by all 4 LayerNorms).
    col = jax.lax.broadcasted_iota(jnp.int32, (1, hp), 1)
    h_mask = (col < hidden).astype(jnp.float32)

    x = x_ref[0].astype(jnp.bfloat16)                # [S, Dp]

    # encoder projection + ReLU
    h = jnp.dot(x, enc_w[...], preferred_element_type=jnp.float32) + enc_b[...]
    h = jnp.maximum(h, 0.0)

    # transformer encoder block
    h = _transformer_block(h, e_wq, e_wk, e_wv, e_wo, e_bq, e_bk, e_bv, e_bo,
                           e_w1, e_b1, e_w2, e_b2, e_g1, e_be1, e_g2, e_be2,
                           scale=scale, mask=h_mask, n_valid=n_valid)

    # bottleneck (latent) and expansion (+ReLU)
    z = jnp.dot(h.astype(jnp.bfloat16), bot_w[...],
                preferred_element_type=jnp.float32) + bot_b[...]
    d = jnp.dot(z.astype(jnp.bfloat16), exp_w[...],
                preferred_element_type=jnp.float32) + exp_b[...]
    d = jnp.maximum(d, 0.0)

    # transformer decoder block
    d = _transformer_block(d, d_wq, d_wk, d_wv, d_wo, d_bq, d_bk, d_bv, d_bo,
                           d_w1, d_b1, d_w2, d_b2, d_g1, d_be1, d_g2, d_be2,
                           scale=scale, mask=h_mask, n_valid=n_valid)

    # output reconstruction (lane-dense [S, Dp] store; padded cols are zero)
    y = jnp.dot(d.astype(jnp.bfloat16), out_w[...],
                preferred_element_type=jnp.float32) + out_b[...]
    o_ref[0] = y.astype(o_ref.dtype)


# ---------------------------------------------------------------------------
# Host-side padding / packing helpers.
# ---------------------------------------------------------------------------
def _pad_mat(w, rows, cols):
    """Zero-pad a weight matrix to (rows, cols) and store it in bf16."""
    return jnp.pad(w, ((0, rows - w.shape[0]),
                       (0, cols - w.shape[1]))).astype(jnp.bfloat16)


def _pad_row(v, cols):
    """Zero-pad a bias/LayerNorm vector to (1, cols), kept in f32."""
    return jnp.pad(v, (0, cols - v.shape[0])).reshape(1, cols).astype(jnp.float32)


# ---------------------------------------------------------------------------
# Forward pass: one fused pallas_call.
# ---------------------------------------------------------------------------
def transformer_autoencoder_forward(x, params):
    B, S, D = x.shape
    H = params["enc_w"].shape[1]
    F = params["enc_block"]["w1"].shape[1]
    L = params["bottleneck_w"].shape[1]

    Dp, Hp, Fp, Lp = (_round_up(D), _round_up(H), _round_up(F), _round_up(L))

    xp = jnp.pad(x, ((0, 0), (0, 0), (0, Dp - D)))

    def block_args(p):
        return [
            _pad_mat(p["wq"], Hp, Hp), _pad_mat(p["wk"], Hp, Hp),
            _pad_mat(p["wv"], Hp, Hp), _pad_mat(p["wo"], Hp, Hp),
            _pad_row(p["bq"], Hp), _pad_row(p["bk"], Hp),
            _pad_row(p["bv"], Hp), _pad_row(p["bo"], Hp),
            _pad_mat(p["w1"], Hp, Fp), _pad_row(p["b1"], Fp),
            _pad_mat(p["w2"], Fp, Hp), _pad_row(p["b2"], Hp),
            _pad_row(p["g1"], Hp), _pad_row(p["be1"], Hp),
            _pad_row(p["g2"], Hp), _pad_row(p["be2"], Hp),
        ]

    weight_args = (
        [_pad_mat(params["enc_w"], Dp, Hp), _pad_row(params["enc_b"], Hp)]
        + block_args(params["enc_block"])
        + [_pad_mat(params["bottleneck_w"], Hp, Lp),
           _pad_row(params["bottleneck_b"], Lp),
           _pad_mat(params["expand_w"], Lp, Hp),
           _pad_row(params["expand_b"], Hp)]
        + block_args(params["dec_block"])
        + [_pad_mat(params["out_w"], Hp, Dp), _pad_row(params["out_b"], Dp)]
    )

    x_spec = pl.BlockSpec((1, S, Dp), lambda b: (b, 0, 0))
    w_specs = [pl.BlockSpec(w.shape, lambda b: (0, 0)) for w in weight_args]
    out_spec = pl.BlockSpec((1, S, Dp), lambda b: (b, 0, 0))

    # Advisory cost estimate so XLA schedules sensibly around the custom call.
    matmul_flops = 2 * B * S * (
        Dp * Hp                                             # encoder proj
        + 2 * (4 * Hp * Hp + 2 * S * Hp + Hp * Fp + Fp * Hp)  # 2 blocks
        + Hp * Lp + Lp * Hp + Hp * Dp)                      # bottleneck/expand/out
    weight_bytes = sum(int(w.size) * w.dtype.itemsize for w in weight_args)
    cost = pl.CostEstimate(
        flops=int(matmul_flops),
        transcendentals=int(2 * B * S * S + 8 * B * S),
        bytes_accessed=int(weight_bytes + 2 * B * S * Dp * 4))

    yp = pl.pallas_call(
        functools.partial(_fused_ae_kernel, hidden=H),
        out_shape=jax.ShapeDtypeStruct((B, S, Dp), jnp.float32),
        grid=(B,),
        in_specs=[x_spec] + w_specs,
        out_specs=out_spec,
        compiler_params=pltpu.CompilerParams(
            dimension_semantics=("parallel",)),
        cost_estimate=cost,
    )(xp, *weight_args)

    return yp[:, :, :D]


# ---------------------------------------------------------------------------
# Parameter construction (deterministic, in-script, unpadded f32).
# ---------------------------------------------------------------------------
def _init_block(key, H, F):
    ks = jax.random.split(key, 6)
    return {
        "wq": 0.05 * jax.random.normal(ks[0], (H, H), jnp.float32),
        "wk": 0.05 * jax.random.normal(ks[1], (H, H), jnp.float32),
        "wv": 0.05 * jax.random.normal(ks[2], (H, H), jnp.float32),
        "wo": 0.05 * jax.random.normal(ks[3], (H, H), jnp.float32),
        "bq": jnp.zeros((H,), jnp.float32),
        "bk": jnp.zeros((H,), jnp.float32),
        "bv": jnp.zeros((H,), jnp.float32),
        "bo": jnp.zeros((H,), jnp.float32),
        "w1": 0.05 * jax.random.normal(ks[4], (H, F), jnp.float32),
        "b1": jnp.zeros((F,), jnp.float32),
        "w2": 0.05 * jax.random.normal(ks[5], (F, H), jnp.float32),
        "b2": jnp.zeros((H,), jnp.float32),
        "g1": jnp.ones((H,), jnp.float32),
        "be1": jnp.zeros((H,), jnp.float32),
        "g2": jnp.ones((H,), jnp.float32),
        "be2": jnp.zeros((H,), jnp.float32),
    }


def init_params(key, d_in, hidden, ff, latent):
    ks = jax.random.split(key, 8)
    return {
        "enc_w": 0.05 * jax.random.normal(ks[0], (d_in, hidden), jnp.float32),
        "enc_b": jnp.zeros((hidden,), jnp.float32),
        "enc_block": _init_block(ks[1], hidden, ff),
        "bottleneck_w": 0.05 * jax.random.normal(ks[2], (hidden, latent), jnp.float32),
        "bottleneck_b": jnp.zeros((latent,), jnp.float32),
        "expand_w": 0.05 * jax.random.normal(ks[3], (latent, hidden), jnp.float32),
        "expand_b": jnp.zeros((hidden,), jnp.float32),
        "dec_block": _init_block(ks[4], hidden, ff),
        "out_w": 0.05 * jax.random.normal(ks[5], (hidden, d_in), jnp.float32),
        "out_b": jnp.zeros((d_in,), jnp.float32),
    }


if __name__ == "__main__":
    B, S, D_IN, HIDDEN, FF, LATENT = 2, 8, 16, 32, 64, 8

    key = jax.random.PRNGKey(0)
    kx, kp = jax.random.split(key)
    x = jax.random.normal(kx, (B, S, D_IN), jnp.float32)   # layout: [B, S, D]
    params = init_params(kp, D_IN, HIDDEN, FF, LATENT)

    out = transformer_autoencoder_forward(x, params)
    jax.block_until_ready(out)
    assert out.shape == (B, S, D_IN) and out.dtype == jnp.float32
    assert bool(jnp.all(jnp.isfinite(out)))
    print("KERNEL_OK")
</pallas_src>

<mosaic_0001>
module attributes {stable_mosaic.version = 11 : i64} {
  func.func @_fused_ae_kernel(%arg0: i32, %arg1: memref<1x8x128xf32, #tpu.memory_space<vmem>>, %arg2: memref<128x128xbf16, #tpu.memory_space<vmem>>, %arg3: memref<1x128xf32, #tpu.memory_space<vmem>>, %arg4: memref<128x128xbf16, #tpu.memory_space<vmem>>, %arg5: memref<128x128xbf16, #tpu.memory_space<vmem>>, %arg6: memref<128x128xbf16, #tpu.memory_space<vmem>>, %arg7: memref<128x128xbf16, #tpu.memory_space<vmem>>, %arg8: memref<1x128xf32, #tpu.memory_space<vmem>>, %arg9: memref<1x128xf32, #tpu.memory_space<vmem>>, %arg10: memref<1x128xf32, #tpu.memory_space<vmem>>, %arg11: memref<1x128xf32, #tpu.memory_space<vmem>>, %arg12: memref<128x128xbf16, #tpu.memory_space<vmem>>, %arg13: memref<1x128xf32, #tpu.memory_space<vmem>>, %arg14: memref<128x128xbf16, #tpu.memory_space<vmem>>, %arg15: memref<1x128xf32, #tpu.memory_space<vmem>>, %arg16: memref<1x128xf32, #tpu.memory_space<vmem>>, %arg17: memref<1x128xf32, #tpu.memory_space<vmem>>, %arg18: memref<1x128xf32, #tpu.memory_space<vmem>>, %arg19: memref<1x128xf32, #tpu.memory_space<vmem>>, %arg20: memref<128x128xbf16, #tpu.memory_space<vmem>>, %arg21: memref<1x128xf32, #tpu.memory_space<vmem>>, %arg22: memref<128x128xbf16, #tpu.memory_space<vmem>>, %arg23: memref<1x128xf32, #tpu.memory_space<vmem>>, %arg24: memref<128x128xbf16, #tpu.memory_space<vmem>>, %arg25: memref<128x128xbf16, #tpu.memory_space<vmem>>, %arg26: memref<128x128xbf16, #tpu.memory_space<vmem>>, %arg27: memref<128x128xbf16, #tpu.memory_space<vmem>>, %arg28: memref<1x128xf32, #tpu.memory_space<vmem>>, %arg29: memref<1x128xf32, #tpu.memory_space<vmem>>, %arg30: memref<1x128xf32, #tpu.memory_space<vmem>>, %arg31: memref<1x128xf32, #tpu.memory_space<vmem>>, %arg32: memref<128x128xbf16, #tpu.memory_space<vmem>>, %arg33: memref<1x128xf32, #tpu.memory_space<vmem>>, %arg34: memref<128x128xbf16, #tpu.memory_space<vmem>>, %arg35: memref<1x128xf32, #tpu.memory_space<vmem>>, %arg36: memref<1x128xf32, #tpu.memory_space<vmem>>, %arg37: memref<1x128xf32, #tpu.memory_space<vmem>>, %arg38: memref<1x128xf32, #tpu.memory_space<vmem>>, %arg39: memref<1x128xf32, #tpu.memory_space<vmem>>, %arg40: memref<128x128xbf16, #tpu.memory_space<vmem>>, %arg41: memref<1x128xf32, #tpu.memory_space<vmem>>, %arg42: memref<1x8x128xf32, #tpu.memory_space<vmem>>) attributes {dimension_semantics = [#tpu.dimension_semantics<parallel>], iteration_bounds = array<i64: 2>, scalar_prefetch = 0 : i64, scratch_operands = 0 : i64, tpu.core_type = #tpu.core_type<tc>, window_params = [{transform_indices = @transform_0, window_bounds = array<i64: 1, 8, 128>}, {pipeline_mode = #tpu.pipeline_mode<synchronous>, transform_indices = @transform_1, window_bounds = array<i64: 128, 128>}, {pipeline_mode = #tpu.pipeline_mode<synchronous>, transform_indices = @transform_2, window_bounds = array<i64: 1, 128>}, {pipeline_mode = #tpu.pipeline_mode<synchronous>, transform_indices = @transform_3, window_bounds = array<i64: 128, 128>}, {pipeline_mode = #tpu.pipeline_mode<synchronous>, transform_indices = @transform_4, window_bounds = array<i64: 128, 128>}, {pipeline_mode = #tpu.pipeline_mode<synchronous>, transform_indices = @transform_5, window_bounds = array<i64: 128, 128>}, {pipeline_mode = #tpu.pipeline_mode<synchronous>, transform_indices = @transform_6, window_bounds = array<i64: 128, 128>}, {pipeline_mode = #tpu.pipeline_mode<synchronous>, transform_indices = @transform_7, window_bounds = array<i64: 1, 128>}, {pipeline_mode = #tpu.pipeline_mode<synchronous>, transform_indices = @transform_8, window_bounds = array<i64: 1, 128>}, {pipeline_mode = #tpu.pipeline_mode<synchronous>, transform_indices = @transform_9, window_bounds = array<i64: 1, 128>}, {pipeline_mode = #tpu.pipeline_mode<synchronous>, transform_indices = @transform_10, window_bounds = array<i64: 1, 128>}, {pipeline_mode = #tpu.pipeline_mode<synchronous>, transform_indices = @transform_11, window_bounds = array<i64: 128, 128>}, {pipeline_mode = #tpu.pipeline_mode<synchronous>, transform_indices = @transform_12, window_bounds = array<i64: 1, 128>}, {pipeline_mode = #tpu.pipeline_mode<synchronous>, transform_indices = @transform_13, window_bounds = array<i64: 128, 128>}, {pipeline_mode = #tpu.pipeline_mode<synchronous>, transform_indices = @transform_14, window_bounds = array<i64: 1, 128>}, {pipeline_mode = #tpu.pipeline_mode<synchronous>, transform_indices = @transform_15, window_bounds = array<i64: 1, 128>}, {pipeline_mode = #tpu.pipeline_mode<synchronous>, transform_indices = @transform_16, window_bounds = array<i64: 1, 128>}, {pipeline_mode = #tpu.pipeline_mode<synchronous>, transform_indices = @transform_17, window_bounds = array<i64: 1, 128>}, {pipeline_mode = #tpu.pipeline_mode<synchronous>, transform_indices = @transform_18, window_bounds = array<i64: 1, 128>}, {pipeline_mode = #tpu.pipeline_mode<synchronous>, transform_indices = @transform_19, window_bounds = array<i64: 128, 128>}, {pipeline_mode = #tpu.pipeline_mode<synchronous>, transform_indices = @transform_20, window_bounds = array<i64: 1, 128>}, {pipeline_mode = #tpu.pipeline_mode<synchronous>, transform_indices = @transform_21, window_bounds = array<i64: 128, 128>}, {pipeline_mode = #tpu.pipeline_mode<synchronous>, transform_indices = @transform_22, window_bounds = array<i64: 1, 128>}, {pipeline_mode = #tpu.pipeline_mode<synchronous>, transform_indices = @transform_23, window_bounds = array<i64: 128, 128>}, {pipeline_mode = #tpu.pipeline_mode<synchronous>, transform_indices = @transform_24, window_bounds = array<i64: 128, 128>}, {pipeline_mode = #tpu.pipeline_mode<synchronous>, transform_indices = @transform_25, window_bounds = array<i64: 128, 128>}, {pipeline_mode = #tpu.pipeline_mode<synchronous>, transform_indices = @transform_26, window_bounds = array<i64: 128, 128>}, {pipeline_mode = #tpu.pipeline_mode<synchronous>, transform_indices = @transform_27, window_bounds = array<i64: 1, 128>}, {pipeline_mode = #tpu.pipeline_mode<synchronous>, transform_indices = @transform_28, window_bounds = array<i64: 1, 128>}, {pipeline_mode = #tpu.pipeline_mode<synchronous>, transform_indices = @transform_29, window_bounds = array<i64: 1, 128>}, {pipeline_mode = #tpu.pipeline_mode<synchronous>, transform_indices = @transform_30, window_bounds = array<i64: 1, 128>}, {pipeline_mode = #tpu.pipeline_mode<synchronous>, transform_indices = @transform_31, window_bounds = array<i64: 128, 128>}, {pipeline_mode = #tpu.pipeline_mode<synchronous>, transform_indices = @transform_32, window_bounds = array<i64: 1, 128>}, {pipeline_mode = #tpu.pipeline_mode<synchronous>, transform_indices = @transform_33, window_bounds = array<i64: 128, 128>}, {pipeline_mode = #tpu.pipeline_mode<synchronous>, transform_indices = @transform_34, window_bounds = array<i64: 1, 128>}, {pipeline_mode = #tpu.pipeline_mode<synchronous>, transform_indices = @transform_35, window_bounds = array<i64: 1, 128>}, {pipeline_mode = #tpu.pipeline_mode<synchronous>, transform_indices = @transform_36, window_bounds = array<i64: 1, 128>}, {pipeline_mode = #tpu.pipeline_mode<synchronous>, transform_indices = @transform_37, window_bounds = array<i64: 1, 128>}, {pipeline_mode = #tpu.pipeline_mode<synchronous>, transform_indices = @transform_38, window_bounds = array<i64: 1, 128>}, {pipeline_mode = #tpu.pipeline_mode<synchronous>, transform_indices = @transform_39, window_bounds = array<i64: 128, 128>}, {pipeline_mode = #tpu.pipeline_mode<synchronous>, transform_indices = @transform_40, window_bounds = array<i64: 1, 128>}, {transform_indices = @transform_41, window_bounds = array<i64: 1, 8, 128>}]} {
    %0 = tpu.iota {dimensions = array<i32: 1>} : vector<1x128xi32>
    %c32_i32 = arith.constant 32 : i32
    %1 = vector.broadcast %c32_i32 : i32 to vector<1x128xi32>
    %2 = arith.cmpi slt, %0, %1 : vector<1x128xi32>
    %3 = arith.extui %2 : vector<1x128xi1> to vector<1x128xi32>
    %4 = arith.sitofp %3 : vector<1x128xi32> to vector<1x128xf32>
    %c0 = arith.constant 0 : index
    %c0_0 = arith.constant 0 : index
    %c0_1 = arith.constant 0 : index
    %5 = vector.load %arg1[%c0, %c0_0, %c0_1] : memref<1x8x128xf32, #tpu.memory_space<vmem>>, vector<1x8x128xf32>
    %6 = vector.shape_cast %5 : vector<1x8x128xf32> to vector<8x128xf32>
    %7 = arith.truncf %6 : vector<8x128xf32> to vector<8x128xbf16>
    %c0_2 = arith.constant 0 : index
    %c0_3 = arith.constant 0 : index
    %8 = vector.load %arg2[%c0_2, %c0_3] : memref<128x128xbf16, #tpu.memory_space<vmem>>, vector<128x128xbf16>
    %cst = arith.constant dense<0.000000e+00> : vector<8x128xf32>
    %9 = tpu.matmul %7, %8, %cst {dimension_numbers = #tpu.dot_dimension_numbers<[1], [0], [0], [1], [0, 0, 1, 1], [], []>} : vector<8x128xbf16>, vector<128x128xbf16>, vector<8x128xf32> -> vector<8x128xf32>
    %c0_4 = arith.constant 0 : index
    %c0_5 = arith.constant 0 : index
    %10 = vector.load %arg3[%c0_4, %c0_5] : memref<1x128xf32, #tpu.memory_space<vmem>>, vector<1x128xf32>
    %11 = vector.broadcast %10 : vector<1x128xf32> to vector<8x128xf32>
    %12 = arith.addf %9, %11 : vector<8x128xf32>
    %cst_6 = arith.constant 0.000000e+00 : f32
    %13 = vector.broadcast %cst_6 : f32 to vector<8x128xf32>
    %14 = arith.maximumf %12, %13 : vector<8x128xf32>
    %15 = arith.truncf %14 : vector<8x128xf32> to vector<8x128xbf16>
    %c0_7 = arith.constant 0 : index
    %c0_8 = arith.constant 0 : index
    %16 = vector.load %arg4[%c0_7, %c0_8] : memref<128x128xbf16, #tpu.memory_space<vmem>>, vector<128x128xbf16>
    %cst_9 = arith.constant dense<0.000000e+00> : vector<8x128xf32>
    %17 = tpu.matmul %15, %16, %cst_9 {dimension_numbers = #tpu.dot_dimension_numbers<[1], [0], [0], [1], [0, 0, 1, 1], [], []>} : vector<8x128xbf16>, vector<128x128xbf16>, vector<8x128xf32> -> vector<8x128xf32>
    %c0_10 = arith.constant 0 : index
    %c0_11 = arith.constant 0 : index
    %18 = vector.load %arg8[%c0_10, %c0_11] : memref<1x128xf32, #tpu.memory_space<vmem>>, vector<1x128xf32>
    %19 = vector.broadcast %18 : vector<1x128xf32> to vector<8x128xf32>
    %20 = arith.addf %17, %19 : vector<8x128xf32>
    %c0_12 = arith.constant 0 : index
    %c0_13 = arith.constant 0 : index
    %21 = vector.load %arg5[%c0_12, %c0_13] : memref<128x128xbf16, #tpu.memory_space<vmem>>, vector<128x128xbf16>
    %cst_14 = arith.constant dense<0.000000e+00> : vector<8x128xf32>
    %22 = tpu.matmul %15, %21, %cst_14 {dimension_numbers = #tpu.dot_dimension_numbers<[1], [0], [0], [1], [0, 0, 1, 1], [], []>} : vector<8x128xbf16>, vector<128x128xbf16>, vector<8x128xf32> -> vector<8x128xf32>
    %c0_15 = arith.constant 0 : index
    %c0_16 = arith.constant 0 : index
    %23 = vector.load %arg9[%c0_15, %c0_16] : memref<1x128xf32, #tpu.memory_space<vmem>>, vector<1x128xf32>
    %24 = vector.broadcast %23 : vector<1x128xf32> to vector<8x128xf32>
    %25 = arith.addf %22, %24 : vector<8x128xf32>
    %c0_17 = arith.constant 0 : index
    %c0_18 = arith.constant 0 : index
    %26 = vector.load %arg6[%c0_17, %c0_18] : memref<128x128xbf16, #tpu.memory_space<vmem>>, vector<128x128xbf16>
    %cst_19 = arith.constant dense<0.000000e+00> : vector<8x128xf32>
    %27 = tpu.matmul %15, %26, %cst_19 {dimension_numbers = #tpu.dot_dimension_numbers<[1], [0], [0], [1], [0, 0, 1, 1], [], []>} : vector<8x128xbf16>, vector<128x128xbf16>, vector<8x128xf32> -> vector<8x128xf32>
    %c0_20 = arith.constant 0 : index
    %c0_21 = arith.constant 0 : index
    %28 = vector.load %arg10[%c0_20, %c0_21] : memref<1x128xf32, #tpu.memory_space<vmem>>, vector<1x128xf32>
    %29 = vector.broadcast %28 : vector<1x128xf32> to vector<8x128xf32>
    %30 = arith.addf %27, %29 : vector<8x128xf32>
    %cst_22 = arith.constant 0.176776692 : f32
    %31 = vector.broadcast %cst_22 : f32 to vector<8x128xf32>
    %32 = arith.mulf %20, %31 : vector<8x128xf32>
    %33 = arith.truncf %32 : vector<8x128xf32> to vector<8x128xbf16>
    %34 = arith.truncf %25 : vector<8x128xf32> to vector<8x128xbf16>
    %cst_23 = arith.constant dense<0.000000e+00> : vector<8x8xf32>
    %35 = tpu.matmul %33, %34, %cst_23 {dimension_numbers = #tpu.dot_dimension_numbers<[1], [1], [0], [0], [0, 0, 1, 0], [], []>} : vector<8x128xbf16>, vector<8x128xbf16>, vector<8x8xf32> -> vector<8x8xf32>
    %cst_24 = arith.constant dense<0xFF800000> : vector<8xf32>
    %36 = vector.multi_reduction <maximumf>, %35, %cst_24 [1] : vector<8x8xf32> to vector<8xf32>
    %37 = vector.shape_cast %36 : vector<8xf32> to vector<8x1xf32>
    %38 = vector.broadcast %37 : vector<8x1xf32> to vector<8x8xf32>
    %39 = arith.subf %35, %38 : vector<8x8xf32>
    %40 = math.exp %39 : vector<8x8xf32>
    %cst_25 = arith.constant dense<0.000000e+00> : vector<8xf32>
    %41 = vector.multi_reduction <add>, %40, %cst_25 [1] : vector<8x8xf32> to vector<8xf32>
    %42 = vector.shape_cast %41 : vector<8xf32> to vector<8x1xf32>
    %43 = tpu.reciprocal %42 {approx = true} : vector<8x1xf32> -> vector<8x1xf32>
    %44 = vector.broadcast %43 : vector<8x1xf32> to vector<8x8xf32>
    %45 = arith.mulf %40, %44 : vector<8x8xf32>
    %46 = arith.truncf %45 : vector<8x8xf32> to vector<8x8xbf16>
    %47 = arith.truncf %30 : vector<8x128xf32> to vector<8x128xbf16>
    %cst_26 = arith.constant dense<0.000000e+00> : vector<8x128xf32>
    %48 = tpu.matmul %46, %47, %cst_26 {dimension_numbers = #tpu.dot_dimension_numbers<[1], [0], [0], [1], [0, 0, 1, 1], [], []>} : vector<8x8xbf16>, vector<8x128xbf16>, vector<8x128xf32> -> vector<8x128xf32>
    %49 = arith.truncf %48 : vector<8x128xf32> to vector<8x128xbf16>
    %c0_27 = arith.constant 0 : index
    %c0_28 = arith.constant 0 : index
    %50 = vector.load %arg7[%c0_27, %c0_28] : memref<128x128xbf16, #tpu.memory_space<vmem>>, vector<128x128xbf16>
    %cst_29 = arith.constant dense<0.000000e+00> : vector<8x128xf32>
    %51 = tpu.matmul %49, %50, %cst_29 {dimension_numbers = #tpu.dot_dimension_numbers<[1], [0], [0], [1], [0, 0, 1, 1], [], []>} : vector<8x128xbf16>, vector<128x128xbf16>, vector<8x128xf32> -> vector<8x128xf32>
    %c0_30 = arith.constant 0 : index
    %c0_31 = arith.constant 0 : index
    %52 = vector.load %arg11[%c0_30, %c0_31] : memref<1x128xf32, #tpu.memory_space<vmem>>, vector<1x128xf32>
    %53 = vector.broadcast %52 : vector<1x128xf32> to vector<8x128xf32>
    %54 = arith.addf %51, %53 : vector<8x128xf32>
    %55 = arith.addf %14, %54 : vector<8x128xf32>
    %c0_32 = arith.constant 0 : index
    %c0_33 = arith.constant 0 : index
    %56 = vector.load %arg16[%c0_32, %c0_33] : memref<1x128xf32, #tpu.memory_space<vmem>>, vector<1x128xf32>
    %c0_34 = arith.constant 0 : index
    %c0_35 = arith.constant 0 : index
    %57 = vector.load %arg17[%c0_34, %c0_35] : memref<1x128xf32, #tpu.memory_space<vmem>>, vector<1x128xf32>
    %cst_36 = arith.constant dense<0.000000e+00> : vector<8xf32>
    %58 = vector.multi_reduction <add>, %55, %cst_36 [1] : vector<8x128xf32> to vector<8xf32>
    %59 = vector.shape_cast %58 : vector<8xf32> to vector<8x1xf32>
    %cst_37 = arith.constant 3.125000e-02 : f32
    %60 = vector.broadcast %cst_37 : f32 to vector<8x1xf32>
    %61 = arith.mulf %59, %60 : vector<8x1xf32>
    %62 = vector.broadcast %61 : vector<8x1xf32> to vector<8x128xf32>
    %63 = arith.subf %55, %62 : vector<8x128xf32>
    %64 = arith.mulf %63, %63 : vector<8x128xf32>
    %65 = vector.broadcast %4 : vector<1x128xf32> to vector<8x128xf32>
    %66 = arith.mulf %64, %65 : vector<8x128xf32>
    %cst_38 = arith.constant dense<0.000000e+00> : vector<8xf32>
    %67 = vector.multi_reduction <add>, %66, %cst_38 [1] : vector<8x128xf32> to vector<8xf32>
    %68 = vector.shape_cast %67 : vector<8xf32> to vector<8x1xf32>
    %cst_39 = arith.constant 3.125000e-02 : f32
    %69 = vector.broadcast %cst_39 : f32 to vector<8x1xf32>
    %70 = arith.mulf %68, %69 : vector<8x1xf32>
    %cst_40 = arith.constant 9.99999974E-6 : f32
    %71 = vector.broadcast %cst_40 : f32 to vector<8x1xf32>
    %72 = arith.addf %70, %71 : vector<8x1xf32>
    %73 = math.rsqrt %72 : vector<8x1xf32>
    %74 = vector.broadcast %73 : vector<8x1xf32> to vector<8x128xf32>
    %75 = arith.mulf %63, %74 : vector<8x128xf32>
    %76 = vector.broadcast %56 : vector<1x128xf32> to vector<8x128xf32>
    %77 = arith.mulf %75, %76 : vector<8x128xf32>
    %78 = vector.broadcast %57 : vector<1x128xf32> to vector<8x128xf32>
    %79 = arith.addf %77, %78 : vector<8x128xf32>
    %80 = arith.truncf %79 : vector<8x128xf32> to vector<8x128xbf16>
    %c0_41 = arith.constant 0 : index
    %c0_42 = arith.constant 0 : index
    %81 = vector.load %arg12[%c0_41, %c0_42] : memref<128x128xbf16, #tpu.memory_space<vmem>>, vector<128x128xbf16>
    %cst_43 = arith.constant dense<0.000000e+00> : vector<8x128xf32>
    %82 = tpu.matmul %80, %81, %cst_43 {dimension_numbers = #tpu.dot_dimension_numbers<[1], [0], [0], [1], [0, 0, 1, 1], [], []>} : vector<8x128xbf16>, vector<128x128xbf16>, vector<8x128xf32> -> vector<8x128xf32>
    %c0_44 = arith.constant 0 : index
    %c0_45 = arith.constant 0 : index
    %83 = vector.load %arg13[%c0_44, %c0_45] : memref<1x128xf32, #tpu.memory_space<vmem>>, vector<1x128xf32>
    %84 = vector.broadcast %83 : vector<1x128xf32> to vector<8x128xf32>
    %85 = arith.addf %82, %84 : vector<8x128xf32>
    %cst_46 = arith.constant 0.000000e+00 : f32
    %86 = vector.broadcast %cst_46 : f32 to vector<8x128xf32>
    %87 = arith.maximumf %85, %86 : vector<8x128xf32>
    %88 = arith.truncf %87 : vector<8x128xf32> to vector<8x128xbf16>
    %c0_47 = arith.constant 0 : index
    %c0_48 = arith.constant 0 : index
    %89 = vector.load %arg14[%c0_47, %c0_48] : memref<128x128xbf16, #tpu.memory_space<vmem>>, vector<128x128xbf16>
    %cst_49 = arith.constant dense<0.000000e+00> : vector<8x128xf32>
    %90 = tpu.matmul %88, %89, %cst_49 {dimension_numbers = #tpu.dot_dimension_numbers<[1], [0], [0], [1], [0, 0, 1, 1], [], []>} : vector<8x128xbf16>, vector<128x128xbf16>, vector<8x128xf32> -> vector<8x128xf32>
    %c0_50 = arith.constant 0 : index
    %c0_51 = arith.constant 0 : index
    %91 = vector.load %arg15[%c0_50, %c0_51] : memref<1x128xf32, #tpu.memory_space<vmem>>, vector<1x128xf32>
    %92 = vector.broadcast %91 : vector<1x128xf32> to vector<8x128xf32>
    %93 = arith.addf %90, %92 : vector<8x128xf32>
    %94 = arith.addf %79, %93 : vector<8x128xf32>
    %c0_52 = arith.constant 0 : index
    %c0_53 = arith.constant 0 : index
    %95 = vector.load %arg18[%c0_52, %c0_53] : memref<1x128xf32, #tpu.memory_space<vmem>>, vector<1x128xf32>
    %c0_54 = arith.constant 0 : index
    %c0_55 = arith.constant 0 : index
    %96 = vector.load %arg19[%c0_54, %c0_55] : memref<1x128xf32, #tpu.memory_space<vmem>>, vector<1x128xf32>
    %cst_56 = arith.constant dense<0.000000e+00> : vector<8xf32>
    %97 = vector.multi_reduction <add>, %94, %cst_56 [1] : vector<8x128xf32> to vector<8xf32>
    %98 = vector.shape_cast %97 : vector<8xf32> to vector<8x1xf32>
    %cst_57 = arith.constant 3.125000e-02 : f32
    %99 = vector.broadcast %cst_57 : f32 to vector<8x1xf32>
    %100 = arith.mulf %98, %99 : vector<8x1xf32>
    %101 = vector.broadcast %100 : vector<8x1xf32> to vector<8x128xf32>
    %102 = arith.subf %94, %101 : vector<8x128xf32>
    %103 = arith.mulf %102, %102 : vector<8x128xf32>
    %104 = vector.broadcast %4 : vector<1x128xf32> to vector<8x128xf32>
    %105 = arith.mulf %103, %104 : vector<8x128xf32>
    %cst_58 = arith.constant dense<0.000000e+00> : vector<8xf32>
    %106 = vector.multi_reduction <add>, %105, %cst_58 [1] : vector<8x128xf32> to vector<8xf32>
    %107 = vector.shape_cast %106 : vector<8xf32> to vector<8x1xf32>
    %cst_59 = arith.constant 3.125000e-02 : f32
    %108 = vector.broadcast %cst_59 : f32 to vector<8x1xf32>
    %109 = arith.mulf %107, %108 : vector<8x1xf32>
    %cst_60 = arith.constant 9.99999974E-6 : f32
    %110 = vector.broadcast %cst_60 : f32 to vector<8x1xf32>
    %111 = arith.addf %109, %110 : vector<8x1xf32>
    %112 = math.rsqrt %111 : vector<8x1xf32>
    %113 = vector.broadcast %112 : vector<8x1xf32> to vector<8x128xf32>
    %114 = arith.mulf %102, %113 : vector<8x128xf32>
    %115 = vector.broadcast %95 : vector<1x128xf32> to vector<8x128xf32>
    %116 = arith.mulf %114, %115 : vector<8x128xf32>
    %117 = vector.broadcast %96 : vector<1x128xf32> to vector<8x128xf32>
    %118 = arith.addf %116, %117 : vector<8x128xf32>
    %119 = arith.truncf %118 : vector<8x128xf32> to vector<8x128xbf16>
    %c0_61 = arith.constant 0 : index
    %c0_62 = arith.constant 0 : index
    %120 = vector.load %arg20[%c0_61, %c0_62] : memref<128x128xbf16, #tpu.memory_space<vmem>>, vector<128x128xbf16>
    %cst_63 = arith.constant dense<0.000000e+00> : vector<8x128xf32>
    %121 = tpu.matmul %119, %120, %cst_63 {dimension_numbers = #tpu.dot_dimension_numbers<[1], [0], [0], [1], [0, 0, 1, 1], [], []>} : vector<8x128xbf16>, vector<128x128xbf16>, vector<8x128xf32> -> vector<8x128xf32>
    %c0_64 = arith.constant 0 : index
    %c0_65 = arith.constant 0 : index
    %122 = vector.load %arg21[%c0_64, %c0_65] : memref<1x128xf32, #tpu.memory_space<vmem>>, vector<1x128xf32>
    %123 = vector.broadcast %122 : vector<1x128xf32> to vector<8x128xf32>
    %124 = arith.addf %121, %123 : vector<8x128xf32>
    %125 = arith.truncf %124 : vector<8x128xf32> to vector<8x128xbf16>
    %c0_66 = arith.constant 0 : index
    %c0_67 = arith.constant 0 : index
    %126 = vector.load %arg22[%c0_66, %c0_67] : memref<128x128xbf16, #tpu.memory_space<vmem>>, vector<128x128xbf16>
    %cst_68 = arith.constant dense<0.000000e+00> : vector<8x128xf32>
    %127 = tpu.matmul %125, %126, %cst_68 {dimension_numbers = #tpu.dot_dimension_numbers<[1], [0], [0], [1], [0, 0, 1, 1], [], []>} : vector<8x128xbf16>, vector<128x128xbf16>, vector<8x128xf32> -> vector<8x128xf32>
    %c0_69 = arith.constant 0 : index
    %c0_70 = arith.constant 0 : index
    %128 = vector.load %arg23[%c0_69, %c0_70] : memref<1x128xf32, #tpu.memory_space<vmem>>, vector<1x128xf32>
    %129 = vector.broadcast %128 : vector<1x128xf32> to vector<8x128xf32>
    %130 = arith.addf %127, %129 : vector<8x128xf32>
    %cst_71 = arith.constant 0.000000e+00 : f32
    %131 = vector.broadcast %cst_71 : f32 to vector<8x128xf32>
    %132 = arith.maximumf %130, %131 : vector<8x128xf32>
    %133 = arith.truncf %132 : vector<8x128xf32> to vector<8x128xbf16>
    %c0_72 = arith.constant 0 : index
    %c0_73 = arith.constant 0 : index
    %134 = vector.load %arg24[%c0_72, %c0_73] : memref<128x128xbf16, #tpu.memory_space<vmem>>, vector<128x128xbf16>
    %cst_74 = arith.constant dense<0.000000e+00> : vector<8x128xf32>
    %135 = tpu.matmul %133, %134, %cst_74 {dimension_numbers = #tpu.dot_dimension_numbers<[1], [0], [0], [1], [0, 0, 1, 1], [], []>} : vector<8x128xbf16>, vector<128x128xbf16>, vector<8x128xf32> -> vector<8x128xf32>
    %c0_75 = arith.constant 0 : index
    %c0_76 = arith.constant 0 : index
    %136 = vector.load %arg28[%c0_75, %c0_76] : memref<1x128xf32, #tpu.memory_space<vmem>>, vector<1x128xf32>
    %137 = vector.broadcast %136 : vector<1x128xf32> to vector<8x128xf32>
    %138 = arith.addf %135, %137 : vector<8x128xf32>
    %c0_77 = arith.constant 0 : index
    %c0_78 = arith.constant 0 : index
    %139 = vector.load %arg25[%c0_77, %c0_78] : memref<128x128xbf16, #tpu.memory_space<vmem>>, vector<128x128xbf16>
    %cst_79 = arith.constant dense<0.000000e+00> : vector<8x128xf32>
    %140 = tpu.matmul %133, %139, %cst_79 {dimension_numbers = #tpu.dot_dimension_numbers<[1], [0], [0], [1], [0, 0, 1, 1], [], []>} : vector<8x128xbf16>, vector<128x128xbf16>, vector<8x128xf32> -> vector<8x128xf32>
    %c0_80 = arith.constant 0 : index
    %c0_81 = arith.constant 0 : index
    %141 = vector.load %arg29[%c0_80, %c0_81] : memref<1x128xf32, #tpu.memory_space<vmem>>, vector<1x128xf32>
    %142 = vector.broadcast %141 : vector<1x128xf32> to vector<8x128xf32>
    %143 = arith.addf %140, %142 : vector<8x128xf32>
    %c0_82 = arith.constant 0 : index
    %c0_83 = arith.constant 0 : index
    %144 = vector.load %arg26[%c0_82, %c0_83] : memref<128x128xbf16, #tpu.memory_space<vmem>>, vector<128x128xbf16>
    %cst_84 = arith.constant dense<0.000000e+00> : vector<8x128xf32>
    %145 = tpu.matmul %133, %144, %cst_84 {dimension_numbers = #tpu.dot_dimension_numbers<[1], [0], [0], [1], [0, 0, 1, 1], [], []>} : vector<8x128xbf16>, vector<128x128xbf16>, vector<8x128xf32> -> vector<8x128xf32>
    %c0_85 = arith.constant 0 : index
    %c0_86 = arith.constant 0 : index
    %146 = vector.load %arg30[%c0_85, %c0_86] : memref<1x128xf32, #tpu.memory_space<vmem>>, vector<1x128xf32>
    %147 = vector.broadcast %146 : vector<1x128xf32> to vector<8x128xf32>
    %148 = arith.addf %145, %147 : vector<8x128xf32>
    %cst_87 = arith.constant 0.176776692 : f32
    %149 = vector.broadcast %cst_87 : f32 to vector<8x128xf32>
    %150 = arith.mulf %138, %149 : vector<8x128xf32>
    %151 = arith.truncf %150 : vector<8x128xf32> to vector<8x128xbf16>
    %152 = arith.truncf %143 : vector<8x128xf32> to vector<8x128xbf16>
    %cst_88 = arith.constant dense<0.000000e+00> : vector<8x8xf32>
    %153 = tpu.matmul %151, %152, %cst_88 {dimension_numbers = #tpu.dot_dimension_numbers<[1], [1], [0], [0], [0, 0, 1, 0], [], []>} : vector<8x128xbf16>, vector<8x128xbf16>, vector<8x8xf32> -> vector<8x8xf32>
    %cst_89 = arith.constant dense<0xFF800000> : vector<8xf32>
    %154 = vector.multi_reduction <maximumf>, %153, %cst_89 [1] : vector<8x8xf32> to vector<8xf32>
    %155 = vector.shape_cast %154 : vector<8xf32> to vector<8x1xf32>
    %156 = vector.broadcast %155 : vector<8x1xf32> to vector<8x8xf32>
    %157 = arith.subf %153, %156 : vector<8x8xf32>
    %158 = math.exp %157 : vector<8x8xf32>
    %cst_90 = arith.constant dense<0.000000e+00> : vector<8xf32>
    %159 = vector.multi_reduction <add>, %158, %cst_90 [1] : vector<8x8xf32> to vector<8xf32>
    %160 = vector.shape_cast %159 : vector<8xf32> to vector<8x1xf32>
    %161 = tpu.reciprocal %160 {approx = true} : vector<8x1xf32> -> vector<8x1xf32>
    %162 = vector.broadcast %161 : vector<8x1xf32> to vector<8x8xf32>
    %163 = arith.mulf %158, %162 : vector<8x8xf32>
    %164 = arith.truncf %163 : vector<8x8xf32> to vector<8x8xbf16>
    %165 = arith.truncf %148 : vector<8x128xf32> to vector<8x128xbf16>
    %cst_91 = arith.constant dense<0.000000e+00> : vector<8x128xf32>
    %166 = tpu.matmul %164, %165, %cst_91 {dimension_numbers = #tpu.dot_dimension_numbers<[1], [0], [0], [1], [0, 0, 1, 1], [], []>} : vector<8x8xbf16>, vector<8x128xbf16>, vector<8x128xf32> -> vector<8x128xf32>
    %167 = arith.truncf %166 : vector<8x128xf32> to vector<8x128xbf16>
    %c0_92 = arith.constant 0 : index
    %c0_93 = arith.constant 0 : index
    %168 = vector.load %arg27[%c0_92, %c0_93] : memref<128x128xbf16, #tpu.memory_space<vmem>>, vector<128x128xbf16>
    %cst_94 = arith.constant dense<0.000000e+00> : vector<8x128xf32>
    %169 = tpu.matmul %167, %168, %cst_94 {dimension_numbers = #tpu.dot_dimension_numbers<[1], [0], [0], [1], [0, 0, 1, 1], [], []>} : vector<8x128xbf16>, vector<128x128xbf16>, vector<8x128xf32> -> vector<8x128xf32>
    %c0_95 = arith.constant 0 : index
    %c0_96 = arith.constant 0 : index
    %170 = vector.load %arg31[%c0_95, %c0_96] : memref<1x128xf32, #tpu.memory_space<vmem>>, vector<1x128xf32>
    %171 = vector.broadcast %170 : vector<1x128xf32> to vector<8x128xf32>
    %172 = arith.addf %169, %171 : vector<8x128xf32>
    %173 = arith.addf %132, %172 : vector<8x128xf32>
    %c0_97 = arith.constant 0 : index
    %c0_98 = arith.constant 0 : index
    %174 = vector.load %arg36[%c0_97, %c0_98] : memref<1x128xf32, #tpu.memory_space<vmem>>, vector<1x128xf32>
    %c0_99 = arith.constant 0 : index
    %c0_100 = arith.constant 0 : index
    %175 = vector.load %arg37[%c0_99, %c0_100] : memref<1x128xf32, #tpu.memory_space<vmem>>, vector<1x128xf32>
    %cst_101 = arith.constant dense<0.000000e+00> : vector<8xf32>
    %176 = vector.multi_reduction <add>, %173, %cst_101 [1] : vector<8x128xf32> to vector<8xf32>
    %177 = vector.shape_cast %176 : vector<8xf32> to vector<8x1xf32>
    %cst_102 = arith.constant 3.125000e-02 : f32
    %178 = vector.broadcast %cst_102 : f32 to vector<8x1xf32>
    %179 = arith.mulf %177, %178 : vector<8x1xf32>
    %180 = vector.broadcast %179 : vector<8x1xf32> to vector<8x128xf32>
    %181 = arith.subf %173, %180 : vector<8x128xf32>
    %182 = arith.mulf %181, %181 : vector<8x128xf32>
    %183 = vector.broadcast %4 : vector<1x128xf32> to vector<8x128xf32>
    %184 = arith.mulf %182, %183 : vector<8x128xf32>
    %cst_103 = arith.constant dense<0.000000e+00> : vector<8xf32>
    %185 = vector.multi_reduction <add>, %184, %cst_103 [1] : vector<8x128xf32> to vector<8xf32>
    %186 = vector.shape_cast %185 : vector<8xf32> to vector<8x1xf32>
    %cst_104 = arith.constant 3.125000e-02 : f32
    %187 = vector.broadcast %cst_104 : f32 to vector<8x1xf32>
    %188 = arith.mulf %186, %187 : vector<8x1xf32>
    %cst_105 = arith.constant 9.99999974E-6 : f32
    %189 = vector.broadcast %cst_105 : f32 to vector<8x1xf32>
    %190 = arith.addf %188, %189 : vector<8x1xf32>
    %191 = math.rsqrt %190 : vector<8x1xf32>
    %192 = vector.broadcast %191 : vector<8x1xf32> to vector<8x128xf32>
    %193 = arith.mulf %181, %192 : vector<8x128xf32>
    %194 = vector.broadcast %174 : vector<1x128xf32> to vector<8x128xf32>
    %195 = arith.mulf %193, %194 : vector<8x128xf32>
    %196 = vector.broadcast %175 : vector<1x128xf32> to vector<8x128xf32>
    %197 = arith.addf %195, %196 : vector<8x128xf32>
    %198 = arith.truncf %197 : vector<8x128xf32> to vector<8x128xbf16>
    %c0_106 = arith.constant 0 : index
    %c0_107 = arith.constant 0 : index
    %199 = vector.load %arg32[%c0_106, %c0_107] : memref<128x128xbf16, #tpu.memory_space<vmem>>, vector<128x128xbf16>
    %cst_108 = arith.constant dense<0.000000e+00> : vector<8x128xf32>
    %200 = tpu.matmul %198, %199, %cst_108 {dimension_numbers = #tpu.dot_dimension_numbers<[1], [0], [0], [1], [0, 0, 1, 1], [], []>} : vector<8x128xbf16>, vector<128x128xbf16>, vector<8x128xf32> -> vector<8x128xf32>
    %c0_109 = arith.constant 0 : index
    %c0_110 = arith.constant 0 : index
    %201 = vector.load %arg33[%c0_109, %c0_110] : memref<1x128xf32, #tpu.memory_space<vmem>>, vector<1x128xf32>
    %202 = vector.broadcast %201 : vector<1x128xf32> to vector<8x128xf32>
    %203 = arith.addf %200, %202 : vector<8x128xf32>
    %cst_111 = arith.constant 0.000000e+00 : f32
    %204 = vector.broadcast %cst_111 : f32 to vector<8x128xf32>
    %205 = arith.maximumf %203, %204 : vector<8x128xf32>
    %206 = arith.truncf %205 : vector<8x128xf32> to vector<8x128xbf16>
    %c0_112 = arith.constant 0 : index
    %c0_113 = arith.constant 0 : index
    %207 = vector.load %arg34[%c0_112, %c0_113] : memref<128x128xbf16, #tpu.memory_space<vmem>>, vector<128x128xbf16>
    %cst_114 = arith.constant dense<0.000000e+00> : vector<8x128xf32>
    %208 = tpu.matmul %206, %207, %cst_114 {dimension_numbers = #tpu.dot_dimension_numbers<[1], [0], [0], [1], [0, 0, 1, 1], [], []>} : vector<8x128xbf16>, vector<128x128xbf16>, vector<8x128xf32> -> vector<8x128xf32>
    %c0_115 = arith.constant 0 : index
    %c0_116 = arith.constant 0 : index
    %209 = vector.load %arg35[%c0_115, %c0_116] : memref<1x128xf32, #tpu.memory_space<vmem>>, vector<1x128xf32>
    %210 = vector.broadcast %209 : vector<1x128xf32> to vector<8x128xf32>
    %211 = arith.addf %208, %210 : vector<8x128xf32>
    %212 = arith.addf %197, %211 : vector<8x128xf32>
    %c0_117 = arith.constant 0 : index
    %c0_118 = arith.constant 0 : index
    %213 = vector.load %arg38[%c0_117, %c0_118] : memref<1x128xf32, #tpu.memory_space<vmem>>, vector<1x128xf32>
    %c0_119 = arith.constant 0 : index
    %c0_120 = arith.constant 0 : index
    %214 = vector.load %arg39[%c0_119, %c0_120] : memref<1x128xf32, #tpu.memory_space<vmem>>, vector<1x128xf32>
    %cst_121 = arith.constant dense<0.000000e+00> : vector<8xf32>
    %215 = vector.multi_reduction <add>, %212, %cst_121 [1] : vector<8x128xf32> to vector<8xf32>
    %216 = vector.shape_cast %215 : vector<8xf32> to vector<8x1xf32>
    %cst_122 = arith.constant 3.125000e-02 : f32
    %217 = vector.broadcast %cst_122 : f32 to vector<8x1xf32>
    %218 = arith.mulf %216, %217 : vector<8x1xf32>
    %219 = vector.broadcast %218 : vector<8x1xf32> to vector<8x128xf32>
    %220 = arith.subf %212, %219 : vector<8x128xf32>
    %221 = arith.mulf %220, %220 : vector<8x128xf32>
    %222 = vector.broadcast %4 : vector<1x128xf32> to vector<8x128xf32>
    %223 = arith.mulf %221, %222 : vector<8x128xf32>
    %cst_123 = arith.constant dense<0.000000e+00> : vector<8xf32>
    %224 = vector.multi_reduction <add>, %223, %cst_123 [1] : vector<8x128xf32> to vector<8xf32>
    %225 = vector.shape_cast %224 : vector<8xf32> to vector<8x1xf32>
    %cst_124 = arith.constant 3.125000e-02 : f32
    %226 = vector.broadcast %cst_124 : f32 to vector<8x1xf32>
    %227 = arith.mulf %225, %226 : vector<8x1xf32>
    %cst_125 = arith.constant 9.99999974E-6 : f32
    %228 = vector.broadcast %cst_125 : f32 to vector<8x1xf32>
    %229 = arith.addf %227, %228 : vector<8x1xf32>
    %230 = math.rsqrt %229 : vector<8x1xf32>
    %231 = vector.broadcast %230 : vector<8x1xf32> to vector<8x128xf32>
    %232 = arith.mulf %220, %231 : vector<8x128xf32>
    %233 = vector.broadcast %213 : vector<1x128xf32> to vector<8x128xf32>
    %234 = arith.mulf %232, %233 : vector<8x128xf32>
    %235 = vector.broadcast %214 : vector<1x128xf32> to vector<8x128xf32>
    %236 = arith.addf %234, %235 : vector<8x128xf32>
    %237 = arith.truncf %236 : vector<8x128xf32> to vector<8x128xbf16>
    %c0_126 = arith.constant 0 : index
    %c0_127 = arith.constant 0 : index
    %238 = vector.load %arg40[%c0_126, %c0_127] : memref<128x128xbf16, #tpu.memory_space<vmem>>, vector<128x128xbf16>
    %cst_128 = arith.constant dense<0.000000e+00> : vector<8x128xf32>
    %239 = tpu.matmul %237, %238, %cst_128 {dimension_numbers = #tpu.dot_dimension_numbers<[1], [0], [0], [1], [0, 0, 1, 1], [], []>} : vector<8x128xbf16>, vector<128x128xbf16>, vector<8x128xf32> -> vector<8x128xf32>
    %c0_129 = arith.constant 0 : index
    %c0_130 = arith.constant 0 : index
    %240 = vector.load %arg41[%c0_129, %c0_130] : memref<1x128xf32, #tpu.memory_space<vmem>>, vector<1x128xf32>
    %241 = vector.broadcast %240 : vector<1x128xf32> to vector<8x128xf32>
    %242 = arith.addf %239, %241 : vector<8x128xf32>
    %c0_131 = arith.constant 0 : index
    %c0_132 = arith.constant 0 : index
    %c0_133 = arith.constant 0 : index
    %243 = vector.load %arg42[%c0_131, %c0_132, %c0_133] : memref<1x8x128xf32, #tpu.memory_space<vmem>>, vector<1x8x128xf32>
    %244 = vector.shape_cast %243 : vector<1x8x128xf32> to vector<8x128xf32>
    %245 = vector.shape_cast %242 : vector<8x128xf32> to vector<1x8x128xf32>
    tpu.vector_store %arg42[%c0_131, %c0_132, %c0_133], %245 {strides = array<i32>} : memref<1x8x128xf32, #tpu.memory_space<vmem>>, vector<1x8x128xf32>,
    return
  }
  func.func @transform_0(%arg0: i32) -> (i32, i32, i32) {
    %c0_i32 = arith.constant 0 : i32
    %c0_i32_0 = arith.constant 0 : i32
    %c0_i32_1 = arith.constant 0 : i32
    return %arg0, %c0_i32, %c0_i32_0 : i32, i32, i32
  }
  func.func @transform_1(%arg0: i32) -> (i32, i32) {
    %c0_i32 = arith.constant 0 : i32
    %c0_i32_0 = arith.constant 0 : i32
    %c0_i32_1 = arith.constant 0 : i32
    return %c0_i32, %c0_i32_0 : i32, i32
  }
  func.func @transform_2(%arg0: i32) -> (i32, i32) {
    %c0_i32 = arith.constant 0 : i32
    %c0_i32_0 = arith.constant 0 : i32
    %c0_i32_1 = arith.constant 0 : i32
    return %c0_i32, %c0_i32_0 : i32, i32
  }
  func.func @transform_3(%arg0: i32) -> (i32, i32) {
    %c0_i32 = arith.constant 0 : i32
    %c0_i32_0 = arith.constant 0 : i32
    %c0_i32_1 = arith.constant 0 : i32
    return %c0_i32, %c0_i32_0 : i32, i32
  }
  func.func @transform_4(%arg0: i32) -> (i32, i32) {
    %c0_i32 = arith.constant 0 : i32
    %c0_i32_0 = arith.constant 0 : i32
    %c0_i32_1 = arith.constant 0 : i32
    return %c0_i32, %c0_i32_0 : i32, i32
  }
  func.func @transform_5(%arg0: i32) -> (i32, i32) {
    %c0_i32 = arith.constant 0 : i32
    %c0_i32_0 = arith.constant 0 : i32
    %c0_i32_1 = arith.constant 0 : i32
    return %c0_i32, %c0_i32_0 : i32, i32
  }
  func.func @transform_6(%arg0: i32) -> (i32, i32) {
    %c0_i32 = arith.constant 0 : i32
    %c0_i32_0 = arith.constant 0 : i32
    %c0_i32_1 = arith.constant 0 : i32
    return %c0_i32, %c0_i32_0 : i32, i32
  }
  func.func @transform_7(%arg0: i32) -> (i32, i32) {
    %c0_i32 = arith.constant 0 : i32
    %c0_i32_0 = arith.constant 0 : i32
    %c0_i32_1 = arith.constant 0 : i32
    return %c0_i32, %c0_i32_0 : i32, i32
  }
  func.func @transform_8(%arg0: i32) -> (i32, i32) {
    %c0_i32 = arith.constant 0 : i32
    %c0_i32_0 = arith.constant 0 : i32
    %c0_i32_1 = arith.constant 0 : i32
    return %c0_i32, %c0_i32_0 : i32, i32
  }
  func.func @transform_9(%arg0: i32) -> (i32, i32) {
    %c0_i32 = arith.constant 0 : i32
    %c0_i32_0 = arith.constant 0 : i32
    %c0_i32_1 = arith.constant 0 : i32
    return %c0_i32, %c0_i32_0 : i32, i32
  }
  func.func @transform_10(%arg0: i32) -> (i32, i32) {
    %c0_i32 = arith.constant 0 : i32
    %c0_i32_0 = arith.constant 0 : i32
    %c0_i32_1 = arith.constant 0 : i32
    return %c0_i32, %c0_i32_0 : i32, i32
  }
  func.func @transform_11(%arg0: i32) -> (i32, i32) {
    %c0_i32 = arith.constant 0 : i32
    %c0_i32_0 = arith.constant 0 : i32
    %c0_i32_1 = arith.constant 0 : i32
    return %c0_i32, %c0_i32_0 : i32, i32
  }
  func.func @transform_12(%arg0: i32) -> (i32, i32) {
    %c0_i32 = arith.constant 0 : i32
    %c0_i32_0 = arith.constant 0 : i32
    %c0_i32_1 = arith.constant 0 : i32
    return %c0_i32, %c0_i32_0 : i32, i32
  }
  func.func @transform_13(%arg0: i32) -> (i32, i32) {
    %c0_i32 = arith.constant 0 : i32
    %c0_i32_0 = arith.constant 0 : i32
    %c0_i32_1 = arith.constant 0 : i32
    return %c0_i32, %c0_i32_0 : i32, i32
  }
  func.func @transform_14(%arg0: i32) -> (i32, i32) {
    %c0_i32 = arith.constant 0 : i32
    %c0_i32_0 = arith.constant 0 : i32
    %c0_i32_1 = arith.constant 0 : i32
    return %c0_i32, %c0_i32_0 : i32, i32
  }
  func.func @transform_15(%arg0: i32) -> (i32, i32) {
    %c0_i32 = arith.constant 0 : i32
    %c0_i32_0 = arith.constant 0 : i32
    %c0_i32_1 = arith.constant 0 : i32
    return %c0_i32, %c0_i32_0 : i32, i32
  }
  func.func @transform_16(%arg0: i32) -> (i32, i32) {
    %c0_i32 = arith.constant 0 : i32
    %c0_i32_0 = arith.constant 0 : i32
    %c0_i32_1 = arith.constant 0 : i32
    return %c0_i32, %c0_i32_0 : i32, i32
  }
  func.func @transform_17(%arg0: i32) -> (i32, i32) {
    %c0_i32 = arith.constant 0 : i32
    %c0_i32_0 = arith.constant 0 : i32
    %c0_i32_1 = arith.constant 0 : i32
    return %c0_i32, %c0_i32_0 : i32, i32
  }
  func.func @transform_18(%arg0: i32) -> (i32, i32) {
    %c0_i32 = arith.constant 0 : i32
    %c0_i32_0 = arith.constant 0 : i32
    %c0_i32_1 = arith.constant 0 : i32
    return %c0_i32, %c0_i32_0 : i32, i32
  }
  func.func @transform_19(%arg0: i32) -> (i32, i32) {
    %c0_i32 = arith.constant 0 : i32
    %c0_i32_0 = arith.constant 0 : i32
    %c0_i32_1 = arith.constant 0 : i32
    return %c0_i32, %c0_i32_0 : i32, i32
  }
  func.func @transform_20(%arg0: i32) -> (i32, i32) {
    %c0_i32 = arith.constant 0 : i32
    %c0_i32_0 = arith.constant 0 : i32
    %c0_i32_1 = arith.constant 0 : i32
    return %c0_i32, %c0_i32_0 : i32, i32
  }
  func.func @transform_21(%arg0: i32) -> (i32, i32) {
    %c0_i32 = arith.constant 0 : i32
    %c0_i32_0 = arith.constant 0 : i32
    %c0_i32_1 = arith.constant 0 : i32
    return %c0_i32, %c0_i32_0 : i32, i32
  }
  func.func @transform_22(%arg0: i32) -> (i32, i32) {
    %c0_i32 = arith.constant 0 : i32
    %c0_i32_0 = arith.constant 0 : i32
    %c0_i32_1 = arith.constant 0 : i32
    return %c0_i32, %c0_i32_0 : i32, i32
  }
  func.func @transform_23(%arg0: i32) -> (i32, i32) {
    %c0_i32 = arith.constant 0 : i32
    %c0_i32_0 = arith.constant 0 : i32
    %c0_i32_1 = arith.constant 0 : i32
    return %c0_i32, %c0_i32_0 : i32, i32
  }
  func.func @transform_24(%arg0: i32) -> (i32, i32) {
    %c0_i32 = arith.constant 0 : i32
    %c0_i32_0 = arith.constant 0 : i32
    %c0_i32_1 = arith.constant 0 : i32
    return %c0_i32, %c0_i32_0 : i32, i32
  }
  func.func @transform_25(%arg0: i32) -> (i32, i32) {
    %c0_i32 = arith.constant 0 : i32
    %c0_i32_0 = arith.constant 0 : i32
    %c0_i32_1 = arith.constant 0 : i32
    return %c0_i32, %c0_i32_0 : i32, i32
  }
  func.func @transform_26(%arg0: i32) -> (i32, i32) {
    %c0_i32 = arith.constant 0 : i32
    %c0_i32_0 = arith.constant 0 : i32
    %c0_i32_1 = arith.constant 0 : i32
    return %c0_i32, %c0_i32_0 : i32, i32
  }
  func.func @transform_27(%arg0: i32) -> (i32, i32) {
    %c0_i32 = arith.constant 0 : i32
    %c0_i32_0 = arith.constant 0 : i32
    %c0_i32_1 = arith.constant 0 : i32
    return %c0_i32, %c0_i32_0 : i32, i32
  }
  func.func @transform_28(%arg0: i32) -> (i32, i32) {
    %c0_i32 = arith.constant 0 : i32
    %c0_i32_0 = arith.constant 0 : i32
    %c0_i32_1 = arith.constant 0 : i32
    return %c0_i32, %c0_i32_0 : i32, i32
  }
  func.func @transform_29(%arg0: i32) -> (i32, i32) {
    %c0_i32 = arith.constant 0 : i32
    %c0_i32_0 = arith.constant 0 : i32
    %c0_i32_1 = arith.constant 0 : i32
    return %c0_i32, %c0_i32_0 : i32, i32
  }
  func.func @transform_30(%arg0: i32) -> (i32, i32) {
    %c0_i32 = arith.constant 0 : i32
    %c0_i32_0 = arith.constant 0 : i32
    %c0_i32_1 = arith.constant 0 : i32
    return %c0_i32, %c0_i32_0 : i32, i32
  }
  func.func @transform_31(%arg0: i32) -> (i32, i32) {
    %c0_i32 = arith.constant 0 : i32
    %c0_i32_0 = arith.constant 0 : i32
    %c0_i32_1 = arith.constant 0 : i32
    return %c0_i32, %c0_i32_0 : i32, i32
  }
  func.func @transform_32(%arg0: i32) -> (i32, i32) {
    %c0_i32 = arith.constant 0 : i32
    %c0_i32_0 = arith.constant 0 : i32
    %c0_i32_1 = arith.constant 0 : i32
    return %c0_i32, %c0_i32_0 : i32, i32
  }
  func.func @transform_33(%arg0: i32) -> (i32, i32) {
    %c0_i32 = arith.constant 0 : i32
    %c0_i32_0 = arith.constant 0 : i32
    %c0_i32_1 = arith.constant 0 : i32
    return %c0_i32, %c0_i32_0 : i32, i32
  }
  func.func @transform_34(%arg0: i32) -> (i32, i32) {
    %c0_i32 = arith.constant 0 : i32
    %c0_i32_0 = arith.constant 0 : i32
    %c0_i32_1 = arith.constant 0 : i32
    return %c0_i32, %c0_i32_0 : i32, i32
  }
  func.func @transform_35(%arg0: i32) -> (i32, i32) {
    %c0_i32 = arith.constant 0 : i32
    %c0_i32_0 = arith.constant 0 : i32
    %c0_i32_1 = arith.constant 0 : i32
    return %c0_i32, %c0_i32_0 : i32, i32
  }
  func.func @transform_36(%arg0: i32) -> (i32, i32) {
    %c0_i32 = arith.constant 0 : i32
    %c0_i32_0 = arith.constant 0 : i32
    %c0_i32_1 = arith.constant 0 : i32
    return %c0_i32, %c0_i32_0 : i32, i32
  }
  func.func @transform_37(%arg0: i32) -> (i32, i32) {
    %c0_i32 = arith.constant 0 : i32
    %c0_i32_0 = arith.constant 0 : i32
    %c0_i32_1 = arith.constant 0 : i32
    return %c0_i32, %c0_i32_0 : i32, i32
  }
  func.func @transform_38(%arg0: i32) -> (i32, i32) {
    %c0_i32 = arith.constant 0 : i32
    %c0_i32_0 = arith.constant 0 : i32
    %c0_i32_1 = arith.constant 0 : i32
    return %c0_i32, %c0_i32_0 : i32, i32
  }
  func.func @transform_39(%arg0: i32) -> (i32, i32) {
    %c0_i32 = arith.constant 0 : i32
    %c0_i32_0 = arith.constant 0 : i32
    %c0_i32_1 = arith.constant 0 : i32
    return %c0_i32, %c0_i32_0 : i32, i32
  }
  func.func @transform_40(%arg0: i32) -> (i32, i32) {
    %c0_i32 = arith.constant 0 : i32
    %c0_i32_0 = arith.constant 0 : i32
    %c0_i32_1 = arith.constant 0 : i32
    return %c0_i32, %c0_i32_0 : i32, i32
  }
  func.func @transform_41(%arg0: i32) -> (i32, i32, i32) {
    %c0_i32 = arith.constant 0 : i32
    %c0_i32_0 = arith.constant 0 : i32
    %c0_i32_1 = arith.constant 0 : i32
    return %arg0, %c0_i32, %c0_i32_0 : i32, i32, i32
  }
}

</mosaic_0001>

<llo_original>
// kernel: tpu_custom_call.1
$region0: #{tpu_custom_call.1}
  #allocation0 [shape = 'u32[]', space=smem, size = 0x4, offset = 0x4, fixed_abs, tag = 'smem constant byte address 0x4 - core index']
  #allocation1 [shape = 'u32[72,128]{1,0:T(1,128)}', space=vmem, size = 0x9000, scoped, tag = 'internal scratch']
  %s0 = inlined_call_operand.smem [shape: u32[42], index: -1, kind: input, shape index: {}]
  %s1 = sld [smem:[%s0]]
  %s2 = scalar_lea.smem %s0, 1
  %s3 = sld [smem:[%s2]]
  %s4 = scalar_lea.smem %s0, 2
  %s5 = sld [smem:[%s4]]
  %s6 = scalar_lea.smem %s0, 3
  %s7 = sld [smem:[%s6]]
  %s8 = scalar_lea.smem %s0, 4
  %s9 = sld [smem:[%s8]]
  %s10 = scalar_lea.smem %s0, 5
  %s11 = sld [smem:[%s10]]
  %s12 = scalar_lea.smem %s0, 6
  %s13 = sld [smem:[%s12]]
  %s14 = scalar_lea.smem %s0, 7
  %s15 = sld [smem:[%s14]]
  %s16 = scalar_lea.smem %s0, 8
  %s17 = sld [smem:[%s16]]
  %s18 = scalar_lea.smem %s0, 9
  %s19 = sld [smem:[%s18]]
  %s20 = scalar_lea.smem %s0, 10
  %s21 = sld [smem:[%s20]]
  %s22 = scalar_lea.smem %s0, 11
  %s23 = sld [smem:[%s22]]
  %s24 = scalar_lea.smem %s0, 12
  %s25 = sld [smem:[%s24]]
  %s26 = scalar_lea.smem %s0, 13
  %s27 = sld [smem:[%s26]]
  %s28 = scalar_lea.smem %s0, 14
  %s29 = sld [smem:[%s28]]
  %s30 = scalar_lea.smem %s0, 15
  %s31 = sld [smem:[%s30]]
  %s32 = scalar_lea.smem %s0, 16
  %s33 = sld [smem:[%s32]]
  %s34 = scalar_lea.smem %s0, 17
  %s35 = sld [smem:[%s34]]
  %s36 = scalar_lea.smem %s0, 18
  %s37 = sld [smem:[%s36]]
  %s38 = scalar_lea.smem %s0, 19
  %s39 = sld [smem:[%s38]]
  %s40 = scalar_lea.smem %s0, 20
  %s41 = sld [smem:[%s40]]
  %s42 = scalar_lea.smem %s0, 21
  %s43 = sld [smem:[%s42]]
  %s44 = scalar_lea.smem %s0, 22
  %s45 = sld [smem:[%s44]]
  %s46 = scalar_lea.smem %s0, 23
  %s47 = sld [smem:[%s46]]
  %s48 = scalar_lea.smem %s0, 24
  %s49 = sld [smem:[%s48]]
  %s50 = scalar_lea.smem %s0, 25
  %s51 = sld [smem:[%s50]]
  %s52 = scalar_lea.smem %s0, 26
  %s53 = sld [smem:[%s52]]
  %s54 = scalar_lea.smem %s0, 27
  %s55 = sld [smem:[%s54]]
  %s56 = scalar_lea.smem %s0, 28
  %s57 = sld [smem:[%s56]]
  %s58 = scalar_lea.smem %s0, 29
  %s59 = sld [smem:[%s58]]
  %s60 = scalar_lea.smem %s0, 30
  %s61 = sld [smem:[%s60]]
  %s62 = scalar_lea.smem %s0, 31
  %s63 = sld [smem:[%s62]]
  %s64 = scalar_lea.smem %s0, 32
  %s65 = sld [smem:[%s64]]
  %s66 = scalar_lea.smem %s0, 33
  %s67 = sld [smem:[%s66]]
  %s68 = scalar_lea.smem %s0, 34
  %s69 = sld [smem:[%s68]]
  %s70 = scalar_lea.smem %s0, 35
  %s71 = sld [smem:[%s70]]
  %s72 = scalar_lea.smem %s0, 36
  %s73 = sld [smem:[%s72]]
  %s74 = scalar_lea.smem %s0, 37
  %s75 = sld [smem:[%s74]]
  %s76 = scalar_lea.smem %s0, 38
  %s77 = sld [smem:[%s76]]
  %s78 = scalar_lea.smem %s0, 39
  %s79 = sld [smem:[%s78]]
  %s80 = scalar_lea.smem %s0, 40
  %s81 = sld [smem:[%s80]]
  %s82 = scalar_lea.smem %s0, 41
  %s83 = sld [smem:[%s82]]
  %s84 = sld [smem:[#allocation0]]
  $region265: #{tpu_custom_call.1} parent=0
    _
  %s86 = ssub.s32 1, %s84
  %s87 = scalar_select 0, %s86, %s84
  $region1: #{tpu_custom_call.1} parent=0
    #allocation2 [shape = 'u8[8192]{0}', space=vmem, size = 0x2000, scoped, tag = 'input window, operand 0']
    #allocation3 [shape = 's32[2]{0}', space=sflag, size = 0x8, scoped, tag = 'scoped memory for tpu_custom_call.1']
    #allocation4 [shape = 's32[2]{0}', space=sflag, size = 0x8, scoped, tag = 'scoped memory for tpu_custom_call.1']
    #allocation5 [shape = 'u8[32768]{0}', space=vmem, size = 0x8000, scoped, tag = 'input window, operand 1, single buffered']
    #allocation6 [shape = 's32[1]{0}', space=sflag, size = 0x4, scoped, tag = 'scoped memory for tpu_custom_call.1']
    #allocation7 [shape = 'u8[32768]{0}', space=vmem, size = 0x8000, scoped, tag = 'input window, operand 3, single buffered']
    #allocation8 [shape = 'u8[32768]{0}', space=vmem, size = 0x8000, scoped, tag = 'input window, operand 4, single buffered']
    #allocation9 [shape = 's32[1]{0}', space=sflag, size = 0x4, scoped, tag = 'scoped memory for tpu_custom_call.1']
    #allocation10 [shape = 'u8[32768]{0}', space=vmem, size = 0x8000, scoped, tag = 'input window, operand 5, single buffered']
    #allocation11 [shape = 'u8[32768]{0}', space=vmem, size = 0x8000, scoped, tag = 'input window, operand 6, single buffered']
    #allocation12 [shape = 's32[1]{0}', space=sflag, size = 0x4, scoped, tag = 'scoped memory for tpu_custom_call.1']
    #allocation13 [shape = 'u8[32768]{0}', space=vmem, size = 0x8000, scoped, tag = 'input window, operand 11, single buffered']
    #allocation14 [shape = 'u8[32768]{0}', space=vmem, size = 0x8000, scoped, tag = 'input window, operand 13, single buffered']
    #allocation15 [shape = 's32[1]{0}', space=sflag, size = 0x4, scoped, tag = 'scoped memory for tpu_custom_call.1']
    #allocation16 [shape = 'u8[32768]{0}', space=vmem, size = 0x8000, scoped, tag = 'input window, operand 19, single buffered']
    #allocation17 [shape = 'u8[32768]{0}', space=vmem, size = 0x8000, scoped, tag = 'input window, operand 21, single buffered']
    #allocation18 [shape = 's32[1]{0}', space=sflag, size = 0x4, scoped, tag = 'scoped memory for tpu_custom_call.1']
    #allocation19 [shape = 'u8[32768]{0}', space=vmem, size = 0x8000, scoped, tag = 'input window, operand 23, single buffered']
    #allocation20 [shape = 'u8[32768]{0}', space=vmem, size = 0x8000, scoped, tag = 'input window, operand 24, single buffered']
    #allocation21 [shape = 's32[1]{0}', space=sflag, size = 0x4, scoped, tag = 'scoped memory for tpu_custom_call.1']
    #allocation22 [shape = 'u8[32768]{0}', space=vmem, size = 0x8000, scoped, tag = 'input window, operand 25, single buffered']
    #allocation23 [shape = 'u8[32768]{0}', space=vmem, size = 0x8000, scoped, tag = 'input window, operand 26, single buffered']
    #allocation24 [shape = 's32[1]{0}', space=sflag, size = 0x4, scoped, tag = 'scoped memory for tpu_custom_call.1']
    #allocation25 [shape = 'u8[32768]{0}', space=vmem, size = 0x8000, scoped, tag = 'input window, operand 31, single buffered']
    #allocation26 [shape = 'u8[32768]{0}', space=vmem, size = 0x8000, scoped, tag = 'input window, operand 33, single buffered']
    #allocation27 [shape = 's32[1]{0}', space=sflag, size = 0x4, scoped, tag = 'scoped memory for tpu_custom_call.1']
    #allocation28 [shape = 'u8[32768]{0}', space=vmem, size = 0x8000, scoped, tag = 'input window, operand 39, single buffered']
    #allocation29 [shape = 'u8[8192]{0}', space=vmem, size = 0x2000, scoped, tag = 'output window, operand 0']
    %88 = vsyncpa [#allocation3], 0
    %s89 = scalar_lea.sflag [#allocation3], 1
    %90 = vsyncpa %s89, 0
    %91 = vsyncpa [#allocation6], 0
    %92 = vsyncpa [#allocation9], 0
    %93 = vsyncpa [#allocation12], 0
    %94 = vsyncpa [#allocation15], 0
    %95 = vsyncpa [#allocation18], 0
    %96 = vsyncpa [#allocation21], 0
    %97 = vsyncpa [#allocation24], 0
    %98 = vsyncpa [#allocation27], 0
    %99 = vsyncpa [#allocation4], 0
    %s100 = scalar_lea.sflag [#allocation4], 1
    %101 = vsyncpa %s100, 0
    loop: start=0, step=1, limit=4
    $region2: #{tpu_custom_call.1} parent=1 // loop_pre_header
      _
    $region3: #{tpu_custom_call.1} parent=1 // loop_header
      %s103 = sphi 0, %s107
      %p104 = scmp.ge.s32.totalorder %s103, 4
      %s113 = sphi 0, %s115
      %s116 = sphi 0, %s113
      %s117 = sphi 0, %s116
      %s133 = sphi 0, %s117
      %s137 = sphi 0, %s137
      %s139 = sphi 0, %s137
      %s140 = sphi 0, %s139
      %s154 = sphi 0, %s140
      %s158 = sphi 0, %s158
      %s160 = sphi 0, %s158
      %s161 = sphi 0, %s160
      %s175 = sphi 0, %s161
      %s179 = sphi 0, %s179
      %s181 = sphi 0, %s179
      %s182 = sphi 0, %s181
      %s196 = sphi 0, %s182
      %s200 = sphi 0, %s200
      %s202 = sphi 0, %s200
      %s203 = sphi 0, %s202
      %s217 = sphi 0, %s203
      %s221 = sphi 0, %s221
      %s223 = sphi 0, %s221
      %s224 = sphi 0, %s223
      %s238 = sphi 0, %s224
      %s242 = sphi 0, %s242
      %s244 = sphi 0, %s242
      %s245 = sphi 0, %s244
      %s259 = sphi 0, %s245
      %s263 = sphi 0, %s263
      %s265 = sphi 0, %s263
      %s266 = sphi 0, %s265
      %s280 = sphi 0, %s266
      %s284 = sphi 0, %s284
      %s286 = sphi 0, %s284
      %s287 = sphi 0, %s286
      %s301 = sphi 0, %s287
      %s305 = sphi 0, %s305
      %s307 = sphi 0, %s305
      %s308 = sphi 0, %s307
      %s322 = sphi 0, %s308
      %s326 = sphi 0, %s326
      %s328 = sphi 0, %s326
      %s329 = sphi 0, %s328
      %s343 = sphi 0, %s329
      %s347 = sphi 0, %s347
      %s349 = sphi 0, %s347
      %s350 = sphi 0, %s349
      %s364 = sphi 0, %s350
      %s368 = sphi 0, %s368
      %s370 = sphi 0, %s368
      %s371 = sphi 0, %s370
      %s385 = sphi 0, %s371
      %s389 = sphi 0, %s389
      %s391 = sphi 0, %s389
      %s392 = sphi 0, %s391
      %s406 = sphi 0, %s392
      %s410 = sphi 0, %s410
      %s412 = sphi 0, %s410
      %s413 = sphi 0, %s412
      %s427 = sphi 0, %s413
      %s431 = sphi 0, %s431
      %s433 = sphi 0, %s431
      %s434 = sphi 0, %s433
      %s448 = sphi 0, %s434
      %s452 = sphi 0, %s452
      %s454 = sphi 0, %s452
      %s455 = sphi 0, %s454
      %s469 = sphi 0, %s455
      %s473 = sphi 0, %s473
      %s475 = sphi 0, %s473
      %s476 = sphi 0, %s475
      %s490 = sphi 0, %s476
      %s494 = sphi 0, %s494
      %s496 = sphi 0, %s494
      %s497 = sphi 0, %s496
      %s511 = sphi 0, %s497
      %s515 = sphi 0, %s515
      %s517 = sphi 0, %s515
      %s518 = sphi 0, %s517
      %s532 = sphi 0, %s518
      %s536 = sphi 0, %s536
      %s538 = sphi 0, %s536
      %s539 = sphi 0, %s538
      %s553 = sphi 0, %s539
      %s557 = sphi 0, %s557
      %s559 = sphi 0, %s557
      %s560 = sphi 0, %s559
      %s574 = sphi 0, %s560
      %s578 = sphi 0, %s578
      %s580 = sphi 0, %s578
      %s581 = sphi 0, %s580
      %s595 = sphi 0, %s581
      %s599 = sphi 0, %s599
      %s601 = sphi 0, %s599
      %s602 = sphi 0, %s601
      %s616 = sphi 0, %s602
      %s620 = sphi 0, %s620
      %s622 = sphi 0, %s620
      %s623 = sphi 0, %s622
      %s637 = sphi 0, %s623
      %s641 = sphi 0, %s641
      %s643 = sphi 0, %s641
      %s644 = sphi 0, %s643
      %s658 = sphi 0, %s644
      %s662 = sphi 0, %s662
      %s664 = sphi 0, %s662
      %s665 = sphi 0, %s664
      %s679 = sphi 0, %s665
      %s683 = sphi 0, %s683
      %s685 = sphi 0, %s683
      %s686 = sphi 0, %s685
      %s700 = sphi 0, %s686
      %s704 = sphi 0, %s704
      %s706 = sphi 0, %s704
      %s707 = sphi 0, %s706
      %s721 = sphi 0, %s707
      %s725 = sphi 0, %s725
      %s727 = sphi 0, %s725
      %s728 = sphi 0, %s727
      %s742 = sphi 0, %s728
      %s746 = sphi 0, %s746
      %s748 = sphi 0, %s746
      %s749 = sphi 0, %s748
      %s763 = sphi 0, %s749
      %s767 = sphi 0, %s767
      %s769 = sphi 0, %s767
      %s770 = sphi 0, %s769
      %s784 = sphi 0, %s770
      %s788 = sphi 0, %s788
      %s790 = sphi 0, %s788
      %s791 = sphi 0, %s790
      %s805 = sphi 0, %s791
      %s809 = sphi 0, %s809
      %s811 = sphi 0, %s809
      %s812 = sphi 0, %s811
      %s826 = sphi 0, %s812
      %s830 = sphi 0, %s830
      %s832 = sphi 0, %s830
      %s833 = sphi 0, %s832
      %s847 = sphi 0, %s833
      %s851 = sphi 0, %s851
      %s853 = sphi 0, %s851
      %s854 = sphi 0, %s853
      %s868 = sphi 0, %s854
      %s872 = sphi 0, %s872
      %s874 = sphi 0, %s872
      %s875 = sphi 0, %s874
      %s889 = sphi 0, %s875
      %s893 = sphi 0, %s893
      %s895 = sphi 0, %s893
      %s896 = sphi 0, %s895
      %s910 = sphi 0, %s896
      %s914 = sphi 0, %s914
      %s916 = sphi 0, %s914
      %s917 = sphi 0, %s916
      %s931 = sphi 0, %s917
      %s935 = sphi 0, %s935
      %s937 = sphi 0, %s935
      %s938 = sphi 0, %s937
      %s952 = sphi 0, %s938
      %s956 = sphi 0, %s956
      %s958 = sphi 0, %s956
      %s959 = sphi 0, %s958
      %s973 = sphi 0, %s959
      %s979 = sphi 0, %s981
      %s982 = sphi 0, %s979
      %s983 = sphi 0, %s982
      %s999 = sphi 0, %s983
    $region4: #{tpu_custom_call.1} parent=1 // loop_header_branch
      %106 = sbr.rel (%p104) target = $region8
    $region5: #{tpu_custom_call.1} parent=1 // loop_body
      %s108 = ssub.s32 %s103, 1
      %s109 = ssub.s32 %s103, 2
      %s110 = sadd.s32 %s103, 1
      %s111 = ssub.s32 %s103, %s110
      %p112 = scmp.eq.s32.totalorder %s111, 0
      %s114 = sadd.s32 %s113, 1
      %s115 = scalar_select %p112, %s113, %s114
      %p118 = pneg %p112
      %p119 = scmp.eq.s32.totalorder %s103, 1
      %p120 = por %p118, %p119
      %p121 = scmp.ne.s32.totalorder %s113, %s116
      %p122 = scmp.eq.s32.totalorder %s103, 0
      %p123 = por %p121, %p122
      %p124 = scmp.ne.s32.totalorder %s113, %s116
      %p125 = scmp.eq.s32.totalorder %s108, 1
      %p126 = por %p124, %p125
      %p127 = scmp.ne.s32.totalorder %s116, %s117
      %p128 = scmp.eq.s32.totalorder %s108, 0
      %p129 = por %p127, %p128
      %p130 = scmp.ne.s32.totalorder %s116, %s117
      %p131 = scmp.eq.s32.totalorder %s109, 1
      %p132 = por %p130, %p131
      %p134 = scmp.ne.s32.totalorder %s117, %s133
      %p135 = scmp.eq.s32.totalorder %s109, 0
      %p136 = por %p134, %p135
      %s138 = sadd.s32 %s137, 1
      %p141 = scmp.eq.s32.totalorder %s103, 1
      %p142 = scmp.ne.s32.totalorder %s137, %s139
      %p143 = scmp.eq.s32.totalorder %s103, 0
      %p144 = por %p142, %p143
      %p145 = scmp.ne.s32.totalorder %s137, %s139
      %p146 = scmp.eq.s32.totalorder %s108, 1
      %p147 = por %p145, %p146
      %p148 = scmp.ne.s32.totalorder %s139, %s140
      %p149 = scmp.eq.s32.totalorder %s108, 0
      %p150 = por %p148, %p149
      %p151 = scmp.ne.s32.totalorder %s139, %s140
      %p152 = scmp.eq.s32.totalorder %s109, 1
      %p153 = por %p151, %p152
      %p155 = scmp.ne.s32.totalorder %s140, %s154
      %p156 = scmp.eq.s32.totalorder %s109, 0
      %p157 = por %p155, %p156
      %s159 = sadd.s32 %s158, 1
      %p162 = scmp.eq.s32.totalorder %s103, 1
      %p163 = scmp.ne.s32.totalorder %s158, %s160
      %p164 = scmp.eq.s32.totalorder %s103, 0
      %p165 = por %p163, %p164
      %p166 = scmp.ne.s32.totalorder %s158, %s160
      %p167 = scmp.eq.s32.totalorder %s108, 1
      %p168 = por %p166, %p167
      %p169 = scmp.ne.s32.totalorder %s160, %s161
      %p170 = scmp.eq.s32.totalorder %s108, 0
      %p171 = por %p169, %p170
      %p172 = scmp.ne.s32.totalorder %s160, %s161
      %p173 = scmp.eq.s32.totalorder %s109, 1
      %p174 = por %p172, %p173
      %p176 = scmp.ne.s32.totalorder %s161, %s175
      %p177 = scmp.eq.s32.totalorder %s109, 0
      %p178 = por %p176, %p177
      %s180 = sadd.s32 %s179, 1
      %p183 = scmp.eq.s32.totalorder %s103, 1
      %p184 = scmp.ne.s32.totalorder %s179, %s181
      %p185 = scmp.eq.s32.totalorder %s103, 0
      %p186 = por %p184, %p185
      %p187 = scmp.ne.s32.totalorder %s179, %s181
      %p188 = scmp.eq.s32.totalorder %s108, 1
      %p189 = por %p187, %p188
      %p190 = scmp.ne.s32.totalorder %s181, %s182
      %p191 = scmp.eq.s32.totalorder %s108, 0
      %p192 = por %p190, %p191
      %p193 = scmp.ne.s32.totalorder %s181, %s182
      %p194 = scmp.eq.s32.totalorder %s109, 1
      %p195 = por %p193, %p194
      %p197 = scmp.ne.s32.totalorder %s182, %s196
      %p198 = scmp.eq.s32.totalorder %s109, 0
      %p199 = por %p197, %p198
      %s201 = sadd.s32 %s200, 1
      %p204 = scmp.eq.s32.totalorder %s103, 1
      %p205 = scmp.ne.s32.totalorder %s200, %s202
      %p206 = scmp.eq.s32.totalorder %s103, 0
      %p207 = por %p205, %p206
      %p208 = scmp.ne.s32.totalorder %s200, %s202
      %p209 = scmp.eq.s32.totalorder %s108, 1
      %p210 = por %p208, %p209
      %p211 = scmp.ne.s32.totalorder %s202, %s203
      %p212 = scmp.eq.s32.totalorder %s108, 0
      %p213 = por %p211, %p212
      %p214 = scmp.ne.s32.totalorder %s202, %s203
      %p215 = scmp.eq.s32.totalorder %s109, 1
      %p216 = por %p214, %p215
      %p218 = scmp.ne.s32.totalorder %s203, %s217
      %p219 = scmp.eq.s32.totalorder %s109, 0
      %p220 = por %p218, %p219
      %s222 = sadd.s32 %s221, 1
      %p225 = scmp.eq.s32.totalorder %s103, 1
      %p226 = scmp.ne.s32.totalorder %s221, %s223
      %p227 = scmp.eq.s32.totalorder %s103, 0
      %p228 = por %p226, %p227
      %p229 = scmp.ne.s32.totalorder %s221, %s223
      %p230 = scmp.eq.s32.totalorder %s108, 1
      %p231 = por %p229, %p230
      %p232 = scmp.ne.s32.totalorder %s223, %s224
      %p233 = scmp.eq.s32.totalorder %s108, 0
      %p234 = por %p232, %p233
      %p235 = scmp.ne.s32.totalorder %s223, %s224
      %p236 = scmp.eq.s32.totalorder %s109, 1
      %p237 = por %p235, %p236
      %p239 = scmp.ne.s32.totalorder %s224, %s238
      %p240 = scmp.eq.s32.totalorder %s109, 0
      %p241 = por %p239, %p240
      %s243 = sadd.s32 %s242, 1
      %p246 = scmp.eq.s32.totalorder %s103, 1
      %p247 = scmp.ne.s32.totalorder %s242, %s244
      %p248 = scmp.eq.s32.totalorder %s103, 0
      %p249 = por %p247, %p248
      %p250 = scmp.ne.s32.totalorder %s242, %s244
      %p251 = scmp.eq.s32.totalorder %s108, 1
      %p252 = por %p250, %p251
      %p253 = scmp.ne.s32.totalorder %s244, %s245
      %p254 = scmp.eq.s32.totalorder %s108, 0
      %p255 = por %p253, %p254
      %p256 = scmp.ne.s32.totalorder %s244, %s245
      %p257 = scmp.eq.s32.totalorder %s109, 1
      %p258 = por %p256, %p257
      %p260 = scmp.ne.s32.totalorder %s245, %s259
      %p261 = scmp.eq.s32.totalorder %s109, 0
      %p262 = por %p260, %p261
      %s264 = sadd.s32 %s263, 1
      %p267 = scmp.eq.s32.totalorder %s103, 1
      %p268 = scmp.ne.s32.totalorder %s263, %s265
      %p269 = scmp.eq.s32.totalorder %s103, 0
      %p270 = por %p268, %p269
      %p271 = scmp.ne.s32.totalorder %s263, %s265
      %p272 = scmp.eq.s32.totalorder %s108, 1
      %p273 = por %p271, %p272
      %p274 = scmp.ne.s32.totalorder %s265, %s266
      %p275 = scmp.eq.s32.totalorder %s108, 0
      %p276 = por %p274, %p275
      %p277 = scmp.ne.s32.totalorder %s265, %s266
      %p278 = scmp.eq.s32.totalorder %s109, 1
      %p279 = por %p277, %p278
      %p281 = scmp.ne.s32.totalorder %s266, %s280
      %p282 = scmp.eq.s32.totalorder %s109, 0
      %p283 = por %p281, %p282
      %s285 = sadd.s32 %s284, 1
      %p288 = scmp.eq.s32.totalorder %s103, 1
      %p289 = scmp.ne.s32.totalorder %s284, %s286
      %p290 = scmp.eq.s32.totalorder %s103, 0
      %p291 = por %p289, %p290
      %p292 = scmp.ne.s32.totalorder %s284, %s286
      %p293 = scmp.eq.s32.totalorder %s108, 1
      %p294 = por %p292, %p293
      %p295 = scmp.ne.s32.totalorder %s286, %s287
      %p296 = scmp.eq.s32.totalorder %s108, 0
      %p297 = por %p295, %p296
      %p298 = scmp.ne.s32.totalorder %s286, %s287
      %p299 = scmp.eq.s32.totalorder %s109, 1
      %p300 = por %p298, %p299
      %p302 = scmp.ne.s32.totalorder %s287, %s301
      %p303 = scmp.eq.s32.totalorder %s109, 0
      %p304 = por %p302, %p303
      %s306 = sadd.s32 %s305, 1
      %p309 = scmp.eq.s32.totalorder %s103, 1
      %p310 = scmp.ne.s32.totalorder %s305, %s307
      %p311 = scmp.eq.s32.totalorder %s103, 0
      %p312 = por %p310, %p311
      %p313 = scmp.ne.s32.totalorder %s305, %s307
      %p314 = scmp.eq.s32.totalorder %s108, 1
      %p315 = por %p313, %p314
      %p316 = scmp.ne.s32.totalorder %s307, %s308
      %p317 = scmp.eq.s32.totalorder %s108, 0
      %p318 = por %p316, %p317
      %p319 = scmp.ne.s32.totalorder %s307, %s308
      %p320 = scmp.eq.s32.totalorder %s109, 1
      %p321 = por %p319, %p320
      %p323 = scmp.ne.s32.totalorder %s308, %s322
      %p324 = scmp.eq.s32.totalorder %s109, 0
      %p325 = por %p323, %p324
      %s327 = sadd.s32 %s326, 1
      %p330 = scmp.eq.s32.totalorder %s103, 1
      %p331 = scmp.ne.s32.totalorder %s326, %s328
      %p332 = scmp.eq.s32.totalorder %s103, 0
      %p333 = por %p331, %p332
      %p334 = scmp.ne.s32.totalorder %s326, %s328
      %p335 = scmp.eq.s32.totalorder %s108, 1
      %p336 = por %p334, %p335
      %p337 = scmp.ne.s32.totalorder %s328, %s329
      %p338 = scmp.eq.s32.totalorder %s108, 0
      %p339 = por %p337, %p338
      %p340 = scmp.ne.s32.totalorder %s328, %s329
      %p341 = scmp.eq.s32.totalorder %s109, 1
      %p342 = por %p340, %p341
      %p344 = scmp.ne.s32.totalorder %s329, %s343
      %p345 = scmp.eq.s32.totalorder %s109, 0
      %p346 = por %p344, %p345
      %s348 = sadd.s32 %s347, 1
      %p351 = scmp.eq.s32.totalorder %s103, 1
      %p352 = scmp.ne.s32.totalorder %s347, %s349
      %p353 = scmp.eq.s32.totalorder %s103, 0
      %p354 = por %p352, %p353
      %p355 = scmp.ne.s32.totalorder %s347, %s349
      %p356 = scmp.eq.s32.totalorder %s108, 1
      %p357 = por %p355, %p356
      %p358 = scmp.ne.s32.totalorder %s349, %s350
      %p359 = scmp.eq.s32.totalorder %s108, 0
      %p360 = por %p358, %p359
      %p361 = scmp.ne.s32.totalorder %s349, %s350
      %p362 = scmp.eq.s32.totalorder %s109, 1
      %p363 = por %p361, %p362
      %p365 = scmp.ne.s32.totalorder %s350, %s364
      %p366 = scmp.eq.s32.totalorder %s109, 0
      %p367 = por %p365, %p366
      %s369 = sadd.s32 %s368, 1
      %p372 = scmp.eq.s32.totalorder %s103, 1
      %p373 = scmp.ne.s32.totalorder %s368, %s370
      %p374 = scmp.eq.s32.totalorder %s103, 0
      %p375 = por %p373, %p374
      %p376 = scmp.ne.s32.totalorder %s368, %s370
      %p377 = scmp.eq.s32.totalorder %s108, 1
      %p378 = por %p376, %p377
      %p379 = scmp.ne.s32.totalorder %s370, %s371
      %p380 = scmp.eq.s32.totalorder %s108, 0
      %p381 = por %p379, %p380
      %p382 = scmp.ne.s32.totalorder %s370, %s371
      %p383 = scmp.eq.s32.totalorder %s109, 1
      %p384 = por %p382, %p383
      %p386 = scmp.ne.s32.totalorder %s371, %s385
      %p387 = scmp.eq.s32.totalorder %s109, 0
      %p388 = por %p386, %p387
      %s390 = sadd.s32 %s389, 1
      %p393 = scmp.eq.s32.totalorder %s103, 1
      %p394 = scmp.ne.s32.totalorder %s389, %s391
      %p395 = scmp.eq.s32.totalorder %s103, 0
      %p396 = por %p394, %p395
      %p397 = scmp.ne.s32.totalorder %s389, %s391
      %p398 = scmp.eq.s32.totalorder %s108, 1
      %p399 = por %p397, %p398
      %p400 = scmp.ne.s32.totalorder %s391, %s392
      %p401 = scmp.eq.s32.totalorder %s108, 0
      %p402 = por %p400, %p401
      %p403 = scmp.ne.s32.totalorder %s391, %s392
      %p404 = scmp.eq.s32.totalorder %s109, 1
      %p405 = por %p403, %p404
      %p407 = scmp.ne.s32.totalorder %s392, %s406
      %p408 = scmp.eq.s32.totalorder %s109, 0
      %p409 = por %p407, %p408
      %s411 = sadd.s32 %s410, 1
      %p414 = scmp.eq.s32.totalorder %s103, 1
      %p415 = scmp.ne.s32.totalorder %s410, %s412
      %p416 = scmp.eq.s32.totalorder %s103, 0
      %p417 = por %p415, %p416
      %p418 = scmp.ne.s32.totalorder %s410, %s412
      %p419 = scmp.eq.s32.totalorder %s108, 1
      %p420 = por %p418, %p419
      %p421 = scmp.ne.s32.totalorder %s412, %s413
      %p422 = scmp.eq.s32.totalorder %s108, 0
      %p423 = por %p421, %p422
      %p424 = scmp.ne.s32.totalorder %s412, %s413
      %p425 = scmp.eq.s32.totalorder %s109, 1
      %p426 = por %p424, %p425
      %p428 = scmp.ne.s32.totalorder %s413, %s427
      %p429 = scmp.eq.s32.totalorder %s109, 0
      %p430 = por %p428, %p429
      %s432 = sadd.s32 %s431, 1
      %p435 = scmp.eq.s32.totalorder %s103, 1
      %p436 = scmp.ne.s32.totalorder %s431, %s433
      %p437 = scmp.eq.s32.totalorder %s103, 0
      %p438 = por %p436, %p437
      %p439 = scmp.ne.s32.totalorder %s431, %s433
      %p440 = scmp.eq.s32.totalorder %s108, 1
      %p441 = por %p439, %p440
      %p442 = scmp.ne.s32.totalorder %s433, %s434
      %p443 = scmp.eq.s32.totalorder %s108, 0
      %p444 = por %p442, %p443
      %p445 = scmp.ne.s32.totalorder %s433, %s434
      %p446 = scmp.eq.s32.totalorder %s109, 1
      %p447 = por %p445, %p446
      %p449 = scmp.ne.s32.totalorder %s434, %s448
      %p450 = scmp.eq.s32.totalorder %s109, 0
      %p451 = por %p449, %p450
      %s453 = sadd.s32 %s452, 1
      %p456 = scmp.eq.s32.totalorder %s103, 1
      %p457 = scmp.ne.s32.totalorder %s452, %s454
      %p458 = scmp.eq.s32.totalorder %s103, 0
      %p459 = por %p457, %p458
      %p460 = scmp.ne.s32.totalorder %s452, %s454
      %p461 = scmp.eq.s32.totalorder %s108, 1
      %p462 = por %p460, %p461
      %p463 = scmp.ne.s32.totalorder %s454, %s455
      %p464 = scmp.eq.s32.totalorder %s108, 0
      %p465 = por %p463, %p464
      %p466 = scmp.ne.s32.totalorder %s454, %s455
      %p467 = scmp.eq.s32.totalorder %s109, 1
      %p468 = por %p466, %p467
      %p470 = scmp.ne.s32.totalorder %s455, %s469
      %p471 = scmp.eq.s32.totalorder %s109, 0
      %p472 = por %p470, %p471
      %s474 = sadd.s32 %s473, 1
      %p477 = scmp.eq.s32.totalorder %s103, 1
      %p478 = scmp.ne.s32.totalorder %s473, %s475
      %p479 = scmp.eq.s32.totalorder %s103, 0
      %p480 = por %p478, %p479
      %p481 = scmp.ne.s32.totalorder %s473, %s475
      %p482 = scmp.eq.s32.totalorder %s108, 1
      %p483 = por %p481, %p482
      %p484 = scmp.ne.s32.totalorder %s475, %s476
      %p485 = scmp.eq.s32.totalorder %s108, 0
      %p486 = por %p484, %p485
      %p487 = scmp.ne.s32.totalorder %s475, %s476
      %p488 = scmp.eq.s32.totalorder %s109, 1
      %p489 = por %p487, %p488
      %p491 = scmp.ne.s32.totalorder %s476, %s490
      %p492 = scmp.eq.s32.totalorder %s109, 0
      %p493 = por %p491, %p492
      %s495 = sadd.s32 %s494, 1
      %p498 = scmp.eq.s32.totalorder %s103, 1
      %p499 = scmp.ne.s32.totalorder %s494, %s496
      %p500 = scmp.eq.s32.totalorder %s103, 0
      %p501 = por %p499, %p500
      %p502 = scmp.ne.s32.totalorder %s494, %s496
      %p503 = scmp.eq.s32.totalorder %s108, 1
      %p504 = por %p502, %p503
      %p505 = scmp.ne.s32.totalorder %s496, %s497
      %p506 = scmp.eq.s32.totalorder %s108, 0
      %p507 = por %p505, %p506
      %p508 = scmp.ne.s32.totalorder %s496, %s497
      %p509 = scmp.eq.s32.totalorder %s109, 1
      %p510 = por %p508, %p509
      %p512 = scmp.ne.s32.totalorder %s497, %s511
      %p513 = scmp.eq.s32.totalorder %s109, 0
      %p514 = por %p512, %p513
      %s516 = sadd.s32 %s515, 1
      %p519 = scmp.eq.s32.totalorder %s103, 1
      %p520 = scmp.ne.s32.totalorder %s515, %s517
      %p521 = scmp.eq.s32.totalorder %s103, 0
      %p522 = por %p520, %p521
      %p523 = scmp.ne.s32.totalorder %s515, %s517
      %p524 = scmp.eq.s32.totalorder %s108, 1
      %p525 = por %p523, %p524
      %p526 = scmp.ne.s32.totalorder %s517, %s518
      %p527 = scmp.eq.s32.totalorder %s108, 0
      %p528 = por %p526, %p527
      %p529 = scmp.ne.s32.totalorder %s517, %s518
      %p530 = scmp.eq.s32.totalorder %s109, 1
      %p531 = por %p529, %p530
      %p533 = scmp.ne.s32.totalorder %s518, %s532
      %p534 = scmp.eq.s32.totalorder %s109, 0
      %p535 = por %p533, %p534
      %s537 = sadd.s32 %s536, 1
      %p540 = scmp.eq.s32.totalorder %s103, 1
      %p541 = scmp.ne.s32.totalorder %s536, %s538
      %p542 = scmp.eq.s32.totalorder %s103, 0
      %p543 = por %p541, %p542
      %p544 = scmp.ne.s32.totalorder %s536, %s538
      %p545 = scmp.eq.s32.totalorder %s108, 1
      %p546 = por %p544, %p545
      %p547 = scmp.ne.s32.totalorder %s538, %s539
      %p548 = scmp.eq.s32.totalorder %s108, 0
      %p549 = por %p547, %p548
      %p550 = scmp.ne.s32.totalorder %s538, %s539
      %p551 = scmp.eq.s32.totalorder %s109, 1
      %p552 = por %p550, %p551
      %p554 = scmp.ne.s32.totalorder %s539, %s553
      %p555 = scmp.eq.s32.totalorder %s109, 0
      %p556 = por %p554, %p555
      %s558 = sadd.s32 %s557, 1
      %p561 = scmp.eq.s32.totalorder %s103, 1
      %p562 = scmp.ne.s32.totalorder %s557, %s559
      %p563 = scmp.eq.s32.totalorder %s103, 0
      %p564 = por %p562, %p563
      %p565 = scmp.ne.s32.totalorder %s557, %s559
      %p566 = scmp.eq.s32.totalorder %s108, 1
      %p567 = por %p565, %p566
      %p568 = scmp.ne.s32.totalorder %s559, %s560
      %p569 = scmp.eq.s32.totalorder %s108, 0
      %p570 = por %p568, %p569
      %p571 = scmp.ne.s32.totalorder %s559, %s560
      %p572 = scmp.eq.s32.totalorder %s109, 1
      %p573 = por %p571, %p572
      %p575 = scmp.ne.s32.totalorder %s560, %s574
      %p576 = scmp.eq.s32.totalorder %s109, 0
      %p577 = por %p575, %p576
      %s579 = sadd.s32 %s578, 1
      %p582 = scmp.eq.s32.totalorder %s103, 1
      %p583 = scmp.ne.s32.totalorder %s578, %s580
      %p584 = scmp.eq.s32.totalorder %s103, 0
      %p585 = por %p583, %p584
      %p586 = scmp.ne.s32.totalorder %s578, %s580
      %p587 = scmp.eq.s32.totalorder %s108, 1
      %p588 = por %p586, %p587
      %p589 = scmp.ne.s32.totalorder %s580, %s581
      %p590 = scmp.eq.s32.totalorder %s108, 0
      %p591 = por %p589, %p590
      %p592 = scmp.ne.s32.totalorder %s580, %s581
      %p593 = scmp.eq.s32.totalorder %s109, 1
      %p594 = por %p592, %p593
      %p596 = scmp.ne.s32.totalorder %s581, %s595
      %p597 = scmp.eq.s32.totalorder %s109, 0
      %p598 = por %p596, %p597
      %s600 = sadd.s32 %s599, 1
      %p603 = scmp.eq.s32.totalorder %s103, 1
      %p604 = scmp.ne.s32.totalorder %s599, %s601
      %p605 = scmp.eq.s32.totalorder %s103, 0
      %p606 = por %p604, %p605
      %p607 = scmp.ne.s32.totalorder %s599, %s601
      %p608 = scmp.eq.s32.totalorder %s108, 1
      %p609 = por %p607, %p608
      %p610 = scmp.ne.s32.totalorder %s601, %s602
      %p611 = scmp.eq.s32.totalorder %s108, 0
      %p612 = por %p610, %p611
      %p613 = scmp.ne.s32.totalorder %s601, %s602
      %p614 = scmp.eq.s32.totalorder %s109, 1
      %p615 = por %p613, %p614
      %p617 = scmp.ne.s32.totalorder %s602, %s616
      %p618 = scmp.eq.s32.totalorder %s109, 0
      %p619 = por %p617, %p618
      %s621 = sadd.s32 %s620, 1
      %p624 = scmp.eq.s32.totalorder %s103, 1
      %p625 = scmp.ne.s32.totalorder %s620, %s622
      %p626 = scmp.eq.s32.totalorder %s103, 0
      %p627 = por %p625, %p626
      %p628 = scmp.ne.s32.totalorder %s620, %s622
      %p629 = scmp.eq.s32.totalorder %s108, 1
      %p630 = por %p628, %p629
      %p631 = scmp.ne.s32.totalorder %s622, %s623
      %p632 = scmp.eq.s32.totalorder %s108, 0
      %p633 = por %p631, %p632
      %p634 = scmp.ne.s32.totalorder %s622, %s623
      %p635 = scmp.eq.s32.totalorder %s109, 1
      %p636 = por %p634, %p635
      %p638 = scmp.ne.s32.totalorder %s623, %s637
      %p639 = scmp.eq.s32.totalorder %s109, 0
      %p640 = por %p638, %p639
      %s642 = sadd.s32 %s641, 1
      %p645 = scmp.eq.s32.totalorder %s103, 1
      %p646 = scmp.ne.s32.totalorder %s641, %s643
      %p647 = scmp.eq.s32.totalorder %s103, 0
      %p648 = por %p646, %p647
      %p649 = scmp.ne.s32.totalorder %s641, %s643
      %p650 = scmp.eq.s32.totalorder %s108, 1
      %p651 = por %p649, %p650
      %p652 = scmp.ne.s32.totalorder %s643, %s644
      %p653 = scmp.eq.s32.totalorder %s108, 0
      %p654 = por %p652, %p653
      %p655 = scmp.ne.s32.totalorder %s643, %s644
      %p656 = scmp.eq.s32.totalorder %s109, 1
      %p657 = por %p655, %p656
      %p659 = scmp.ne.s32.totalorder %s644, %s658
      %p660 = scmp.eq.s32.totalorder %s109, 0
      %p661 = por %p659, %p660
      %s663 = sadd.s32 %s662, 1
      %p666 = scmp.eq.s32.totalorder %s103, 1
      %p667 = scmp.ne.s32.totalorder %s662, %s664
      %p668 = scmp.eq.s32.totalorder %s103, 0
      %p669 = por %p667, %p668
      %p670 = scmp.ne.s32.totalorder %s662, %s664
      %p671 = scmp.eq.s32.totalorder %s108, 1
      %p672 = por %p670, %p671
      %p673 = scmp.ne.s32.totalorder %s664, %s665
      %p674 = scmp.eq.s32.totalorder %s108, 0
      %p675 = por %p673, %p674
      %p676 = scmp.ne.s32.totalorder %s664, %s665
      %p677 = scmp.eq.s32.totalorder %s109, 1
      %p678 = por %p676, %p677
      %p680 = scmp.ne.s32.totalorder %s665, %s679
      %p681 = scmp.eq.s32.totalorder %s109, 0
      %p682 = por %p680, %p681
      %s684 = sadd.s32 %s683, 1
      %p687 = scmp.eq.s32.totalorder %s103, 1
      %p688 = scmp.ne.s32.totalorder %s683, %s685
      %p689 = scmp.eq.s32.totalorder %s103, 0
      %p690 = por %p688, %p689
      %p691 = scmp.ne.s32.totalorder %s683, %s685
      %p692 = scmp.eq.s32.totalorder %s108, 1
      %p693 = por %p691, %p692
      %p694 = scmp.ne.s32.totalorder %s685, %s686
      %p695 = scmp.eq.s32.totalorder %s108, 0
      %p696 = por %p694, %p695
      %p697 = scmp.ne.s32.totalorder %s685, %s686
      %p698 = scmp.eq.s32.totalorder %s109, 1
      %p699 = por %p697, %p698
      %p701 = scmp.ne.s32.totalorder %s686, %s700
      %p702 = scmp.eq.s32.totalorder %s109, 0
      %p703 = por %p701, %p702
      %s705 = sadd.s32 %s704, 1
      %p708 = scmp.eq.s32.totalorder %s103, 1
      %p709 = scmp.ne.s32.totalorder %s704, %s706
      %p710 = scmp.eq.s32.totalorder %s103, 0
      %p711 = por %p709, %p710
      %p712 = scmp.ne.s32.totalorder %s704, %s706
      %p713 = scmp.eq.s32.totalorder %s108, 1
      %p714 = por %p712, %p713
      %p715 = scmp.ne.s32.totalorder %s706, %s707
      %p716 = scmp.eq.s32.totalorder %s108, 0
      %p717 = por %p715, %p716
      %p718 = scmp.ne.s32.totalorder %s706, %s707
      %p719 = scmp.eq.s32.totalorder %s109, 1
      %p720 = por %p718, %p719
      %p722 = scmp.ne.s32.totalorder %s707, %s721
      %p723 = scmp.eq.s32.totalorder %s109, 0
      %p724 = por %p722, %p723
      %s726 = sadd.s32 %s725, 1
      %p729 = scmp.eq.s32.totalorder %s103, 1
      %p730 = scmp.ne.s32.totalorder %s725, %s727
      %p731 = scmp.eq.s32.totalorder %s103, 0
      %p732 = por %p730, %p731
      %p733 = scmp.ne.s32.totalorder %s725, %s727
      %p734 = scmp.eq.s32.totalorder %s108, 1
      %p735 = por %p733, %p734
      %p736 = scmp.ne.s32.totalorder %s727, %s728
      %p737 = scmp.eq.s32.totalorder %s108, 0
      %p738 = por %p736, %p737
      %p739 = scmp.ne.s32.totalorder %s727, %s728
      %p740 = scmp.eq.s32.totalorder %s109, 1
      %p741 = por %p739, %p740
      %p743 = scmp.ne.s32.totalorder %s728, %s742
      %p744 = scmp.eq.s32.totalorder %s109, 0
      %p745 = por %p743, %p744
      %s747 = sadd.s32 %s746, 1
      %p750 = scmp.eq.s32.totalorder %s103, 1
      %p751 = scmp.ne.s32.totalorder %s746, %s748
      %p752 = scmp.eq.s32.totalorder %s103, 0
      %p753 = por %p751, %p752
      %p754 = scmp.ne.s32.totalorder %s746, %s748
      %p755 = scmp.eq.s32.totalorder %s108, 1
      %p756 = por %p754, %p755
      %p757 = scmp.ne.s32.totalorder %s748, %s749
      %p758 = scmp.eq.s32.totalorder %s108, 0
      %p759 = por %p757, %p758
      %p760 = scmp.ne.s32.totalorder %s748, %s749
      %p761 = scmp.eq.s32.totalorder %s109, 1
      %p762 = por %p760, %p761
      %p764 = scmp.ne.s32.totalorder %s749, %s763
      %p765 = scmp.eq.s32.totalorder %s109, 0
      %p766 = por %p764, %p765
      %s768 = sadd.s32 %s767, 1
      %p771 = scmp.eq.s32.totalorder %s103, 1
      %p772 = scmp.ne.s32.totalorder %s767, %s769
      %p773 = scmp.eq.s32.totalorder %s103, 0
      %p774 = por %p772, %p773
      %p775 = scmp.ne.s32.totalorder %s767, %s769
      %p776 = scmp.eq.s32.totalorder %s108, 1
      %p777 = por %p775, %p776
      %p778 = scmp.ne.s32.totalorder %s769, %s770
      %p779 = scmp.eq.s32.totalorder %s108, 0
      %p780 = por %p778, %p779
      %p781 = scmp.ne.s32.totalorder %s769, %s770
      %p782 = scmp.eq.s32.totalorder %s109, 1
      %p783 = por %p781, %p782
      %p785 = scmp.ne.s32.totalorder %s770, %s784
      %p786 = scmp.eq.s32.totalorder %s109, 0
      %p787 = por %p785, %p786
      %s789 = sadd.s32 %s788, 1
      %p792 = scmp.eq.s32.totalorder %s103, 1
      %p793 = scmp.ne.s32.totalorder %s788, %s790
      %p794 = scmp.eq.s32.totalorder %s103, 0
      %p795 = por %p793, %p794
      %p796 = scmp.ne.s32.totalorder %s788, %s790
      %p797 = scmp.eq.s32.totalorder %s108, 1
      %p798 = por %p796, %p797
      %p799 = scmp.ne.s32.totalorder %s790, %s791
      %p800 = scmp.eq.s32.totalorder %s108, 0
      %p801 = por %p799, %p800
      %p802 = scmp.ne.s32.totalorder %s790, %s791
      %p803 = scmp.eq.s32.totalorder %s109, 1
      %p804 = por %p802, %p803
      %p806 = scmp.ne.s32.totalorder %s791, %s805
      %p807 = scmp.eq.s32.totalorder %s109, 0
      %p808 = por %p806, %p807
      %s810 = sadd.s32 %s809, 1
      %p813 = scmp.eq.s32.totalorder %s103, 1
      %p814 = scmp.ne.s32.totalorder %s809, %s811
      %p815 = scmp.eq.s32.totalorder %s103, 0
      %p816 = por %p814, %p815
      %p817 = scmp.ne.s32.totalorder %s809, %s811
      %p818 = scmp.eq.s32.totalorder %s108, 1
      %p819 = por %p817, %p818
      %p820 = scmp.ne.s32.totalorder %s811, %s812
      %p821 = scmp.eq.s32.totalorder %s108, 0
      %p822 = por %p820, %p821
      %p823 = scmp.ne.s32.totalorder %s811, %s812
      %p824 = scmp.eq.s32.totalorder %s109, 1
      %p825 = por %p823, %p824
      %p827 = scmp.ne.s32.totalorder %s812, %s826
      %p828 = scmp.eq.s32.totalorder %s109, 0
      %p829 = por %p827, %p828
      %s831 = sadd.s32 %s830, 1
      %p834 = scmp.eq.s32.totalorder %s103, 1
      %p835 = scmp.ne.s32.totalorder %s830, %s832
      %p836 = scmp.eq.s32.totalorder %s103, 0
      %p837 = por %p835, %p836
      %p838 = scmp.ne.s32.totalorder %s830, %s832
      %p839 = scmp.eq.s32.totalorder %s108, 1
      %p840 = por %p838, %p839
      %p841 = scmp.ne.s32.totalorder %s832, %s833
      %p842 = scmp.eq.s32.totalorder %s108, 0
      %p843 = por %p841, %p842
      %p844 = scmp.ne.s32.totalorder %s832, %s833
      %p845 = scmp.eq.s32.totalorder %s109, 1
      %p846 = por %p844, %p845
      %p848 = scmp.ne.s32.totalorder %s833, %s847
      %p849 = scmp.eq.s32.totalorder %s109, 0
      %p850 = por %p848, %p849
      %s852 = sadd.s32 %s851, 1
      %p855 = scmp.eq.s32.totalorder %s103, 1
      %p856 = scmp.ne.s32.totalorder %s851, %s853
      %p857 = scmp.eq.s32.totalorder %s103, 0
      %p858 = por %p856, %p857
      %p859 = scmp.ne.s32.totalorder %s851, %s853
      %p860 = scmp.eq.s32.totalorder %s108, 1
      %p861 = por %p859, %p860
      %p862 = scmp.ne.s32.totalorder %s853, %s854
      %p863 = scmp.eq.s32.totalorder %s108, 0
      %p864 = por %p862, %p863
      %p865 = scmp.ne.s32.totalorder %s853, %s854
      %p866 = scmp.eq.s32.totalorder %s109, 1
      %p867 = por %p865, %p866
      %p869 = scmp.ne.s32.totalorder %s854, %s868
      %p870 = scmp.eq.s32.totalorder %s109, 0
      %p871 = por %p869, %p870
      %s873 = sadd.s32 %s872, 1
      %p876 = scmp.eq.s32.totalorder %s103, 1
      %p877 = scmp.ne.s32.totalorder %s872, %s874
      %p878 = scmp.eq.s32.totalorder %s103, 0
      %p879 = por %p877, %p878
      %p880 = scmp.ne.s32.totalorder %s872, %s874
      %p881 = scmp.eq.s32.totalorder %s108, 1
      %p882 = por %p880, %p881
      %p883 = scmp.ne.s32.totalorder %s874, %s875
      %p884 = scmp.eq.s32.totalorder %s108, 0
      %p885 = por %p883, %p884
      %p886 = scmp.ne.s32.totalorder %s874, %s875
      %p887 = scmp.eq.s32.totalorder %s109, 1
      %p888 = por %p886, %p887
      %p890 = scmp.ne.s32.totalorder %s875, %s889
      %p891 = scmp.eq.s32.totalorder %s109, 0
      %p892 = por %p890, %p891
      %s894 = sadd.s32 %s893, 1
      %p897 = scmp.eq.s32.totalorder %s103, 1
      %p898 = scmp.ne.s32.totalorder %s893, %s895
      %p899 = scmp.eq.s32.totalorder %s103, 0
      %p900 = por %p898, %p899
      %p901 = scmp.ne.s32.totalorder %s893, %s895
      %p902 = scmp.eq.s32.totalorder %s108, 1
      %p903 = por %p901, %p902
      %p904 = scmp.ne.s32.totalorder %s895, %s896
      %p905 = scmp.eq.s32.totalorder %s108, 0
      %p906 = por %p904, %p905
      %p907 = scmp.ne.s32.totalorder %s895, %s896
      %p908 = scmp.eq.s32.totalorder %s109, 1
      %p909 = por %p907, %p908
      %p911 = scmp.ne.s32.totalorder %s896, %s910
      %p912 = scmp.eq.s32.totalorder %s109, 0
      %p913 = por %p911, %p912
      %s915 = sadd.s32 %s914, 1
      %p918 = scmp.eq.s32.totalorder %s103, 1
      %p919 = scmp.ne.s32.totalorder %s914, %s916
      %p920 = scmp.eq.s32.totalorder %s103, 0
      %p921 = por %p919, %p920
      %p922 = scmp.ne.s32.totalorder %s914, %s916
      %p923 = scmp.eq.s32.totalorder %s108, 1
      %p924 = por %p922, %p923
      %p925 = scmp.ne.s32.totalorder %s916, %s917
      %p926 = scmp.eq.s32.totalorder %s108, 0
      %p927 = por %p925, %p926
      %p928 = scmp.ne.s32.totalorder %s916, %s917
      %p929 = scmp.eq.s32.totalorder %s109, 1
      %p930 = por %p928, %p929
      %p932 = scmp.ne.s32.totalorder %s917, %s931
      %p933 = scmp.eq.s32.totalorder %s109, 0
      %p934 = por %p932, %p933
      %s936 = sadd.s32 %s935, 1
      %p939 = scmp.eq.s32.totalorder %s103, 1
      %p940 = scmp.ne.s32.totalorder %s935, %s937
      %p941 = scmp.eq.s32.totalorder %s103, 0
      %p942 = por %p940, %p941
      %p943 = scmp.ne.s32.totalorder %s935, %s937
      %p944 = scmp.eq.s32.totalorder %s108, 1
      %p945 = por %p943, %p944
      %p946 = scmp.ne.s32.totalorder %s937, %s938
      %p947 = scmp.eq.s32.totalorder %s108, 0
      %p948 = por %p946, %p947
      %p949 = scmp.ne.s32.totalorder %s937, %s938
      %p950 = scmp.eq.s32.totalorder %s109, 1
      %p951 = por %p949, %p950
      %p953 = scmp.ne.s32.totalorder %s938, %s952
      %p954 = scmp.eq.s32.totalorder %s109, 0
      %p955 = por %p953, %p954
      %s957 = sadd.s32 %s956, 1
      %p960 = scmp.eq.s32.totalorder %s103, 1
      %p961 = scmp.ne.s32.totalorder %s956, %s958
      %p962 = scmp.eq.s32.totalorder %s103, 0
      %p963 = por %p961, %p962
      %p964 = scmp.ne.s32.totalorder %s956, %s958
      %p965 = scmp.eq.s32.totalorder %s108, 1
      %p966 = por %p964, %p965
      %p967 = scmp.ne.s32.totalorder %s958, %s959
      %p968 = scmp.eq.s32.totalorder %s108, 0
      %p969 = por %p967, %p968
      %p970 = scmp.ne.s32.totalorder %s958, %s959
      %p971 = scmp.eq.s32.totalorder %s109, 1
      %p972 = por %p970, %p971
      %p974 = scmp.ne.s32.totalorder %s959, %s973
      %p975 = scmp.eq.s32.totalorder %s109, 0
      %p976 = por %p974, %p975
      %s977 = ssub.s32 %s103, %s110
      %p978 = scmp.eq.s32.totalorder %s977, 0
      %s980 = sadd.s32 %s979, 1
      %s981 = scalar_select %p978, %s979, %s980
      %p984 = pneg %p978
      %p985 = scmp.eq.s32.totalorder %s103, 1
      %p986 = por %p984, %p985
      %p987 = scmp.ne.s32.totalorder %s979, %s982
      %p988 = scmp.eq.s32.totalorder %s103, 0
      %p989 = por %p987, %p988
      %p990 = scmp.ne.s32.totalorder %s979, %s982
      %p991 = scmp.eq.s32.totalorder %s108, 1
      %p992 = por %p990, %p991
      %p993 = scmp.ne.s32.totalorder %s982, %s983
      %p994 = scmp.eq.s32.totalorder %s108, 0
      %p995 = por %p993, %p994
      %p996 = scmp.ne.s32.totalorder %s982, %s983
      %p997 = scmp.eq.s32.totalorder %s109, 1
      %p998 = por %p996, %p997
      %p1000 = scmp.ne.s32.totalorder %s983, %s999
      %p1001 = scmp.eq.s32.totalorder %s109, 0
      %p1002 = por %p1000, %p1001
      %p1003 = scmp.le.s32.totalorder 1, %s103
      %p1004 = scmp.lt.s32.totalorder %s103, 3
      %p1005 = pnand %p1003, %p1004
      %p1006 = pneg %p1005
      // Predicated region
      $region9: #{tpu_custom_call.1} parent=5 // pred_check
        _
      $region10: #{tpu_custom_call.1} parent=5 // pred_check_branch
        %1008 = sbr.rel (%p1005) target = $region12
      $region11: #{tpu_custom_call.1} parent=5 // pred_region
        %s1009 = ssub.s32 %s103, 1
        // Predicated region
        $region13: #{tpu_custom_call.1} parent=11 // pred_check
          %p1010 = pneg %p150
        $region14: #{tpu_custom_call.1} parent=11 // pred_check_branch
          %1012 = sbr.rel (%p1010) target = $region16
        $region15: #{tpu_custom_call.1} parent=11 // pred_region
          %1014 = vsyncadd [#allocation6], 0
          %s1015 = sshll.u32 %s3, 4
          %s1016 = int_to_ptr.hbm [resolvable:$true] %s1015
          %s1017 = sshll.u32 [#allocation5], 4
          %s1018 = int_to_ptr.vmem [resolvable:$true] %s1017
          %1023 = dma.hbm_to_vmem [thread:$0]  %s1016, 1024, %s1018, [#allocation6], 64, 64, 4
        $region16: #{tpu_custom_call.1} parent=11 // pred_fallthru
          _
        // Predicated region
        $region17: #{tpu_custom_call.1} parent=11 // pred_check
          %p1024 = pneg %p171
        $region18: #{tpu_custom_call.1} parent=11 // pred_check_branch
          %1026 = sbr.rel (%p1024) target = $region20
        $region19: #{tpu_custom_call.1} parent=11 // pred_region
          _
        $region20: #{tpu_custom_call.1} parent=11 // pred_fallthru
          _
        // Predicated region
        $region21: #{tpu_custom_call.1} parent=11 // pred_check
          %p1027 = pneg %p192
        $region22: #{tpu_custom_call.1} parent=11 // pred_check_branch
          %1029 = sbr.rel (%p1027) target = $region24
        $region23: #{tpu_custom_call.1} parent=11 // pred_region
          %1031 = vsyncadd [#allocation6], 0
          %s1032 = sshll.u32 %s7, 4
          %s1033 = int_to_ptr.hbm [resolvable:$true] %s1032
          %s1034 = sshll.u32 [#allocation7], 4
          %s1035 = int_to_ptr.vmem [resolvable:$true] %s1034
          %1040 = dma.hbm_to_vmem [thread:$0]  %s1033, 1024, %s1035, [#allocation6], 64, 64, 4
        $region24: #{tpu_custom_call.1} parent=11 // pred_fallthru
          _
        // Predicated region
        $region25: #{tpu_custom_call.1} parent=11 // pred_check
          %p1041 = pneg %p213
        $region26: #{tpu_custom_call.1} parent=11 // pred_check_branch
          %1043 = sbr.rel (%p1041) target = $region28
        $region27: #{tpu_custom_call.1} parent=11 // pred_region
          %1045 = vsyncadd [#allocation9], 0
          %s1046 = sshll.u32 %s9, 4
          %s1047 = int_to_ptr.hbm [resolvable:$true] %s1046
          %s1048 = sshll.u32 [#allocation8], 4
          %s1049 = int_to_ptr.vmem [resolvable:$true] %s1048
          %1054 = dma.hbm_to_vmem [thread:$0]  %s1047, 1024, %s1049, [#allocation9], 64, 64, 4
        $region28: #{tpu_custom_call.1} parent=11 // pred_fallthru
          _
        // Predicated region
        $region29: #{tpu_custom_call.1} parent=11 // pred_check
          %p1055 = pneg %p234
        $region30: #{tpu_custom_call.1} parent=11 // pred_check_branch
          %1057 = sbr.rel (%p1055) target = $region32
        $region31: #{tpu_custom_call.1} parent=11 // pred_region
          %1059 = vsyncadd [#allocation9], 0
          %s1060 = sshll.u32 %s11, 4
          %s1061 = int_to_ptr.hbm [resolvable:$true] %s1060
          %s1062 = sshll.u32 [#allocation10], 4
          %s1063 = int_to_ptr.vmem [resolvable:$true] %s1062
          %1068 = dma.hbm_to_vmem [thread:$0]  %s1061, 1024, %s1063, [#allocation9], 64, 64, 4
        $region32: #{tpu_custom_call.1} parent=11 // pred_fallthru
          _
        // Predicated region
        $region33: #{tpu_custom_call.1} parent=11 // pred_check
          %p1069 = pneg %p255
        $region34: #{tpu_custom_call.1} parent=11 // pred_check_branch
          %1071 = sbr.rel (%p1069) target = $region36
        $region35: #{tpu_custom_call.1} parent=11 // pred_region
          %1073 = vsyncadd [#allocation12], 0
          %s1074 = sshll.u32 %s13, 4
          %s1075 = int_to_ptr.hbm [resolvable:$true] %s1074
          %s1076 = sshll.u32 [#allocation11], 4
          %s1077 = int_to_ptr.vmem [resolvable:$true] %s1076
          %1082 = dma.hbm_to_vmem [thread:$0]  %s1075, 1024, %s1077, [#allocation12], 64, 64, 4
        $region36: #{tpu_custom_call.1} parent=11 // pred_fallthru
          _
        // Predicated region
        $region37: #{tpu_custom_call.1} parent=11 // pred_check
          %p1083 = pneg %p276
        $region38: #{tpu_custom_call.1} parent=11 // pred_check_branch
          %1085 = sbr.rel (%p1083) target = $region40
        $region39: #{tpu_custom_call.1} parent=11 // pred_region
          _
        $region40: #{tpu_custom_call.1} parent=11 // pred_fallthru
          _
        // Predicated region
        $region41: #{tpu_custom_call.1} parent=11 // pred_check
          %p1086 = pneg %p297
        $region42: #{tpu_custom_call.1} parent=11 // pred_check_branch
          %1088 = sbr.rel (%p1086) target = $region44
        $region43: #{tpu_custom_call.1} parent=11 // pred_region
          _
        $region44: #{tpu_custom_call.1} parent=11 // pred_fallthru
          _
        // Predicated region
        $region45: #{tpu_custom_call.1} parent=11 // pred_check
          %p1089 = pneg %p318
        $region46: #{tpu_custom_call.1} parent=11 // pred_check_branch
          %1091 = sbr.rel (%p1089) target = $region48
        $region47: #{tpu_custom_call.1} parent=11 // pred_region
          _
        $region48: #{tpu_custom_call.1} parent=11 // pred_fallthru
          _
        // Predicated region
        $region49: #{tpu_custom_call.1} parent=11 // pred_check
          %p1092 = pneg %p339
        $region50: #{tpu_custom_call.1} parent=11 // pred_check_branch
          %1094 = sbr.rel (%p1092) target = $region52
        $region51: #{tpu_custom_call.1} parent=11 // pred_region
          _
        $region52: #{tpu_custom_call.1} parent=11 // pred_fallthru
          _
        // Predicated region
        $region53: #{tpu_custom_call.1} parent=11 // pred_check
          %p1095 = pneg %p360
        $region54: #{tpu_custom_call.1} parent=11 // pred_check_branch
          %1097 = sbr.rel (%p1095) target = $region56
        $region55: #{tpu_custom_call.1} parent=11 // pred_region
          %1099 = vsyncadd [#allocation12], 0
          %s1100 = sshll.u32 %s23, 4
          %s1101 = int_to_ptr.hbm [resolvable:$true] %s1100
          %s1102 = sshll.u32 [#allocation13], 4
          %s1103 = int_to_ptr.vmem [resolvable:$true] %s1102
          %1108 = dma.hbm_to_vmem [thread:$0]  %s1101, 1024, %s1103, [#allocation12], 64, 64, 4
        $region56: #{tpu_custom_call.1} parent=11 // pred_fallthru
          _
        // Predicated region
        $region57: #{tpu_custom_call.1} parent=11 // pred_check
          %p1109 = pneg %p381
        $region58: #{tpu_custom_call.1} parent=11 // pred_check_branch
          %1111 = sbr.rel (%p1109) target = $region60
        $region59: #{tpu_custom_call.1} parent=11 // pred_region
          _
        $region60: #{tpu_custom_call.1} parent=11 // pred_fallthru
          _
        // Predicated region
        $region61: #{tpu_custom_call.1} parent=11 // pred_check
          %p1112 = pneg %p402
        $region62: #{tpu_custom_call.1} parent=11 // pred_check_branch
          %1114 = sbr.rel (%p1112) target = $region64
        $region63: #{tpu_custom_call.1} parent=11 // pred_region
          %1116 = vsyncadd [#allocation15], 0
          %s1117 = sshll.u32 %s27, 4
          %s1118 = int_to_ptr.hbm [resolvable:$true] %s1117
          %s1119 = sshll.u32 [#allocation14], 4
          %s1120 = int_to_ptr.vmem [resolvable:$true] %s1119
          %1125 = dma.hbm_to_vmem [thread:$0]  %s1118, 1024, %s1120, [#allocation15], 64, 64, 4
        $region64: #{tpu_custom_call.1} parent=11 // pred_fallthru
          _
        // Predicated region
        $region65: #{tpu_custom_call.1} parent=11 // pred_check
          %p1126 = pneg %p423
        $region66: #{tpu_custom_call.1} parent=11 // pred_check_branch
          %1128 = sbr.rel (%p1126) target = $region68
        $region67: #{tpu_custom_call.1} parent=11 // pred_region
          _
        $region68: #{tpu_custom_call.1} parent=11 // pred_fallthru
          _
        // Predicated region
        $region69: #{tpu_custom_call.1} parent=11 // pred_check
          %p1129 = pneg %p444
        $region70: #{tpu_custom_call.1} parent=11 // pred_check_branch
          %1131 = sbr.rel (%p1129) target = $region72
        $region71: #{tpu_custom_call.1} parent=11 // pred_region
          _
        $region72: #{tpu_custom_call.1} parent=11 // pred_fallthru
          _
        // Predicated region
        $region73: #{tpu_custom_call.1} parent=11 // pred_check
          %p1132 = pneg %p465
        $region74: #{tpu_custom_call.1} parent=11 // pred_check_branch
          %1134 = sbr.rel (%p1132) target = $region76
        $region75: #{tpu_custom_call.1} parent=11 // pred_region
          _
        $region76: #{tpu_custom_call.1} parent=11 // pred_fallthru
          _
        // Predicated region
        $region77: #{tpu_custom_call.1} parent=11 // pred_check
          %p1135 = pneg %p486
        $region78: #{tpu_custom_call.1} parent=11 // pred_check_branch
          %1137 = sbr.rel (%p1135) target = $region80
        $region79: #{tpu_custom_call.1} parent=11 // pred_region
          _
        $region80: #{tpu_custom_call.1} parent=11 // pred_fallthru
          _
        // Predicated region
        $region81: #{tpu_custom_call.1} parent=11 // pred_check
          %p1138 = pneg %p507
        $region82: #{tpu_custom_call.1} parent=11 // pred_check_branch
          %1140 = sbr.rel (%p1138) target = $region84
        $region83: #{tpu_custom_call.1} parent=11 // pred_region
          _
        $region84: #{tpu_custom_call.1} parent=11 // pred_fallthru
          _
        // Predicated region
        $region85: #{tpu_custom_call.1} parent=11 // pred_check
          %p1141 = pneg %p528
        $region86: #{tpu_custom_call.1} parent=11 // pred_check_branch
          %1143 = sbr.rel (%p1141) target = $region88
        $region87: #{tpu_custom_call.1} parent=11 // pred_region
          %1145 = vsyncadd [#allocation15], 0
          %s1146 = sshll.u32 %s39, 4
          %s1147 = int_to_ptr.hbm [resolvable:$true] %s1146
          %s1148 = sshll.u32 [#allocation16], 4
          %s1149 = int_to_ptr.vmem [resolvable:$true] %s1148
          %1154 = dma.hbm_to_vmem [thread:$0]  %s1147, 1024, %s1149, [#allocation15], 64, 64, 4
        $region88: #{tpu_custom_call.1} parent=11 // pred_fallthru
          _
        // Predicated region
        $region89: #{tpu_custom_call.1} parent=11 // pred_check
          %p1155 = pneg %p549
        $region90: #{tpu_custom_call.1} parent=11 // pred_check_branch
          %1157 = sbr.rel (%p1155) target = $region92
        $region91: #{tpu_custom_call.1} parent=11 // pred_region
          _
        $region92: #{tpu_custom_call.1} parent=11 // pred_fallthru
          _
        // Predicated region
        $region93: #{tpu_custom_call.1} parent=11 // pred_check
          %p1158 = pneg %p570
        $region94: #{tpu_custom_call.1} parent=11 // pred_check_branch
          %1160 = sbr.rel (%p1158) target = $region96
        $region95: #{tpu_custom_call.1} parent=11 // pred_region
          %1162 = vsyncadd [#allocation18], 0
          %s1163 = sshll.u32 %s43, 4
          %s1164 = int_to_ptr.hbm [resolvable:$true] %s1163
          %s1165 = sshll.u32 [#allocation17], 4
          %s1166 = int_to_ptr.vmem [resolvable:$true] %s1165
          %1171 = dma.hbm_to_vmem [thread:$0]  %s1164, 1024, %s1166, [#allocation18], 64, 64, 4
        $region96: #{tpu_custom_call.1} parent=11 // pred_fallthru
          _
        // Predicated region
        $region97: #{tpu_custom_call.1} parent=11 // pred_check
          %p1172 = pneg %p591
        $region98: #{tpu_custom_call.1} parent=11 // pred_check_branch
          %1174 = sbr.rel (%p1172) target = $region100
        $region99: #{tpu_custom_call.1} parent=11 // pred_region
          _
        $region100: #{tpu_custom_call.1} parent=11 // pred_fallthru
          _
        // Predicated region
        $region101: #{tpu_custom_call.1} parent=11 // pred_check
          %p1175 = pneg %p612
        $region102: #{tpu_custom_call.1} parent=11 // pred_check_branch
          %1177 = sbr.rel (%p1175) target = $region104
        $region103: #{tpu_custom_call.1} parent=11 // pred_region
          %1179 = vsyncadd [#allocation18], 0
          %s1180 = sshll.u32 %s47, 4
          %s1181 = int_to_ptr.hbm [resolvable:$true] %s1180
          %s1182 = sshll.u32 [#allocation19], 4
          %s1183 = int_to_ptr.vmem [resolvable:$true] %s1182
          %1188 = dma.hbm_to_vmem [thread:$0]  %s1181, 1024, %s1183, [#allocation18], 64, 64, 4
        $region104: #{tpu_custom_call.1} parent=11 // pred_fallthru
          _
        // Predicated region
        $region105: #{tpu_custom_call.1} parent=11 // pred_check
          %p1189 = pneg %p633
        $region106: #{tpu_custom_call.1} parent=11 // pred_check_branch
          %1191 = sbr.rel (%p1189) target = $region108
        $region107: #{tpu_custom_call.1} parent=11 // pred_region
          %1193 = vsyncadd [#allocation21], 0
          %s1194 = sshll.u32 %s49, 4
          %s1195 = int_to_ptr.hbm [resolvable:$true] %s1194
          %s1196 = sshll.u32 [#allocation20], 4
          %s1197 = int_to_ptr.vmem [resolvable:$true] %s1196
          %1202 = dma.hbm_to_vmem [thread:$0]  %s1195, 1024, %s1197, [#allocation21], 64, 64, 4
        $region108: #{tpu_custom_call.1} parent=11 // pred_fallthru
          _
        // Predicated region
        $region109: #{tpu_custom_call.1} parent=11 // pred_check
          %p1203 = pneg %p654
        $region110: #{tpu_custom_call.1} parent=11 // pred_check_branch
          %1205 = sbr.rel (%p1203) target = $region112
        $region111: #{tpu_custom_call.1} parent=11 // pred_region
          %1207 = vsyncadd [#allocation21], 0
          %s1208 = sshll.u32 %s51, 4
          %s1209 = int_to_ptr.hbm [resolvable:$true] %s1208
          %s1210 = sshll.u32 [#allocation22], 4
          %s1211 = int_to_ptr.vmem [resolvable:$true] %s1210
          %1216 = dma.hbm_to_vmem [thread:$0]  %s1209, 1024, %s1211, [#allocation21], 64, 64, 4
        $region112: #{tpu_custom_call.1} parent=11 // pred_fallthru
          _
        // Predicated region
        $region113: #{tpu_custom_call.1} parent=11 // pred_check
          %p1217 = pneg %p675
        $region114: #{tpu_custom_call.1} parent=11 // pred_check_branch
          %1219 = sbr.rel (%p1217) target = $region116
        $region115: #{tpu_custom_call.1} parent=11 // pred_region
          %1221 = vsyncadd [#allocation24], 0
          %s1222 = sshll.u32 %s53, 4
          %s1223 = int_to_ptr.hbm [resolvable:$true] %s1222
          %s1224 = sshll.u32 [#allocation23], 4
          %s1225 = int_to_ptr.vmem [resolvable:$true] %s1224
          %1230 = dma.hbm_to_vmem [thread:$0]  %s1223, 1024, %s1225, [#allocation24], 64, 64, 4
        $region116: #{tpu_custom_call.1} parent=11 // pred_fallthru
          _
        // Predicated region
        $region117: #{tpu_custom_call.1} parent=11 // pred_check
          %p1231 = pneg %p696
        $region118: #{tpu_custom_call.1} parent=11 // pred_check_branch
          %1233 = sbr.rel (%p1231) target = $region120
        $region119: #{tpu_custom_call.1} parent=11 // pred_region
          _
        $region120: #{tpu_custom_call.1} parent=11 // pred_fallthru
          _
        // Predicated region
        $region121: #{tpu_custom_call.1} parent=11 // pred_check
          %p1234 = pneg %p717
        $region122: #{tpu_custom_call.1} parent=11 // pred_check_branch
          %1236 = sbr.rel (%p1234) target = $region124
        $region123: #{tpu_custom_call.1} parent=11 // pred_region
          _
        $region124: #{tpu_custom_call.1} parent=11 // pred_fallthru
          _
        // Predicated region
        $region125: #{tpu_custom_call.1} parent=11 // pred_check
          %p1237 = pneg %p738
        $region126: #{tpu_custom_call.1} parent=11 // pred_check_branch
          %1239 = sbr.rel (%p1237) target = $region128
        $region127: #{tpu_custom_call.1} parent=11 // pred_region
          _
        $region128: #{tpu_custom_call.1} parent=11 // pred_fallthru
          _
        // Predicated region
        $region129: #{tpu_custom_call.1} parent=11 // pred_check
          %p1240 = pneg %p759
        $region130: #{tpu_custom_call.1} parent=11 // pred_check_branch
          %1242 = sbr.rel (%p1240) target = $region132
        $region131: #{tpu_custom_call.1} parent=11 // pred_region
          _
        $region132: #{tpu_custom_call.1} parent=11 // pred_fallthru
          _
        // Predicated region
        $region133: #{tpu_custom_call.1} parent=11 // pred_check
          %p1243 = pneg %p780
        $region134: #{tpu_custom_call.1} parent=11 // pred_check_branch
          %1245 = sbr.rel (%p1243) target = $region136
        $region135: #{tpu_custom_call.1} parent=11 // pred_region
          %1247 = vsyncadd [#allocation24], 0
          %s1248 = sshll.u32 %s63, 4
          %s1249 = int_to_ptr.hbm [resolvable:$true] %s1248
          %s1250 = sshll.u32 [#allocation25], 4
          %s1251 = int_to_ptr.vmem [resolvable:$true] %s1250
          %1256 = dma.hbm_to_vmem [thread:$0]  %s1249, 1024, %s1251, [#allocation24], 64, 64, 4
        $region136: #{tpu_custom_call.1} parent=11 // pred_fallthru
          _
        // Predicated region
        $region137: #{tpu_custom_call.1} parent=11 // pred_check
          %p1257 = pneg %p801
        $region138: #{tpu_custom_call.1} parent=11 // pred_check_branch
          %1259 = sbr.rel (%p1257) target = $region140
        $region139: #{tpu_custom_call.1} parent=11 // pred_region
          _
        $region140: #{tpu_custom_call.1} parent=11 // pred_fallthru
          _
        // Predicated region
        $region141: #{tpu_custom_call.1} parent=11 // pred_check
          %p1260 = pneg %p822
        $region142: #{tpu_custom_call.1} parent=11 // pred_check_branch
          %1262 = sbr.rel (%p1260) target = $region144
        $region143: #{tpu_custom_call.1} parent=11 // pred_region
          %1264 = vsyncadd [#allocation27], 0
          %s1265 = sshll.u32 %s67, 4
          %s1266 = int_to_ptr.hbm [resolvable:$true] %s1265
          %s1267 = sshll.u32 [#allocation26], 4
          %s1268 = int_to_ptr.vmem [resolvable:$true] %s1267
          %1273 = dma.hbm_to_vmem [thread:$0]  %s1266, 1024, %s1268, [#allocation27], 64, 64, 4
        $region144: #{tpu_custom_call.1} parent=11 // pred_fallthru
          _
        // Predicated region
        $region145: #{tpu_custom_call.1} parent=11 // pred_check
          %p1274 = pneg %p843
        $region146: #{tpu_custom_call.1} parent=11 // pred_check_branch
          %1276 = sbr.rel (%p1274) target = $region148
        $region147: #{tpu_custom_call.1} parent=11 // pred_region
          _
        $region148: #{tpu_custom_call.1} parent=11 // pred_fallthru
          _
        // Predicated region
        $region149: #{tpu_custom_call.1} parent=11 // pred_check
          %p1277 = pneg %p864
        $region150: #{tpu_custom_call.1} parent=11 // pred_check_branch
          %1279 = sbr.rel (%p1277) target = $region152
        $region151: #{tpu_custom_call.1} parent=11 // pred_region
          _
        $region152: #{tpu_custom_call.1} parent=11 // pred_fallthru
          _
        // Predicated region
        $region153: #{tpu_custom_call.1} parent=11 // pred_check
          %p1280 = pneg %p885
        $region154: #{tpu_custom_call.1} parent=11 // pred_check_branch
          %1282 = sbr.rel (%p1280) target = $region156
        $region155: #{tpu_custom_call.1} parent=11 // pred_region
          _
        $region156: #{tpu_custom_call.1} parent=11 // pred_fallthru
          _
        // Predicated region
        $region157: #{tpu_custom_call.1} parent=11 // pred_check
          %p1283 = pneg %p906
        $region158: #{tpu_custom_call.1} parent=11 // pred_check_branch
          %1285 = sbr.rel (%p1283) target = $region160
        $region159: #{tpu_custom_call.1} parent=11 // pred_region
          _
        $region160: #{tpu_custom_call.1} parent=11 // pred_fallthru
          _
        // Predicated region
        $region161: #{tpu_custom_call.1} parent=11 // pred_check
          %p1286 = pneg %p927
        $region162: #{tpu_custom_call.1} parent=11 // pred_check_branch
          %1288 = sbr.rel (%p1286) target = $region164
        $region163: #{tpu_custom_call.1} parent=11 // pred_region
          _
        $region164: #{tpu_custom_call.1} parent=11 // pred_fallthru
          _
        // Predicated region
        $region165: #{tpu_custom_call.1} parent=11 // pred_check
          %p1289 = pneg %p948
        $region166: #{tpu_custom_call.1} parent=11 // pred_check_branch
          %1291 = sbr.rel (%p1289) target = $region168
        $region167: #{tpu_custom_call.1} parent=11 // pred_region
          %1293 = vsyncadd [#allocation27], 0
          %s1294 = sshll.u32 %s79, 4
          %s1295 = int_to_ptr.hbm [resolvable:$true] %s1294
          %s1296 = sshll.u32 [#allocation28], 4
          %s1297 = int_to_ptr.vmem [resolvable:$true] %s1296
          %1302 = dma.hbm_to_vmem [thread:$0]  %s1295, 1024, %s1297, [#allocation27], 64, 64, 4
        $region168: #{tpu_custom_call.1} parent=11 // pred_fallthru
          _
        // Predicated region
        $region169: #{tpu_custom_call.1} parent=11 // pred_check
          %p1303 = pneg %p969
        $region170: #{tpu_custom_call.1} parent=11 // pred_check_branch
          %1305 = sbr.rel (%p1303) target = $region172
        $region171: #{tpu_custom_call.1} parent=11 // pred_region
          _
        $region172: #{tpu_custom_call.1} parent=11 // pred_fallthru
          _
      $region12: #{tpu_custom_call.1} parent=5 // pred_fallthru
        _
      %p1306 = scmp.lt.s32.totalorder %s103, 2
      // Predicated region
      $region173: #{tpu_custom_call.1} parent=5 // pred_check
        %p1307 = pneg %p1306
      $region174: #{tpu_custom_call.1} parent=5 // pred_check_branch
        %1309 = sbr.rel (%p1307) target = $region176
      $region175: #{tpu_custom_call.1} parent=5 // pred_region
        // Predicated region
        $region177: #{tpu_custom_call.1} parent=175 // pred_check
          %p1310 = pneg %p123
        $region178: #{tpu_custom_call.1} parent=175 // pred_check_branch
          %1312 = sbr.rel (%p1310) target = $region180
        $region179: #{tpu_custom_call.1} parent=175 // pred_region
          %s1313 = sand.u32 %s113, 1
          %s1314 = scalar_lea.sflag [#allocation3], %s1313
          %s1315 = sand.u32 %s113, 1
          %s1316 = smul.addr %s1315, 8
          %s1317 = scalar_lea.vmem [#allocation2], %s1316
          %1319 = vsyncadd %s1314, 0
          %s1320 = smul.addr %s103, 8
          %s1321 = scalar_lea.hbm %s1, %s1320
          %s1323 = sshll.u32 %s1321, 4
          %s1324 = int_to_ptr.hbm [resolvable:$true] %s1323
          %s1325 = sshll.u32 %s1317, 4
          %s1326 = int_to_ptr.vmem [resolvable:$true] %s1325
          %1328 = dma.hbm_to_vmem [thread:$0]  %s1324, 128, %s1326, %s1314
        $region180: #{tpu_custom_call.1} parent=175 // pred_fallthru
          _
      $region176: #{tpu_custom_call.1} parent=5 // pred_fallthru
        _
      %p1329 = scmp.le.s32.totalorder 1, %s103
      %p1330 = scmp.lt.s32.totalorder %s103, 3
      %p1331 = pnand %p1329, %p1330
      %p1332 = pneg %p1331
      // Predicated region
      $region181: #{tpu_custom_call.1} parent=5 // pred_check
        _
      $region182: #{tpu_custom_call.1} parent=5 // pred_check_branch
        %1334 = sbr.rel (%p1331) target = $region184
      $region183: #{tpu_custom_call.1} parent=5 // pred_region
        %s1335 = ssub.s32 %s103, 1
        %s1336 = sand.u32 %s116, 1
        %s1337 = scalar_lea.sflag [#allocation3], %s1336
        %s1338 = sand.u32 %s116, 1
        %s1339 = smul.addr %s1338, 8
        %s1340 = scalar_lea.vmem [#allocation2], %s1339
        // Predicated region
        $region185: #{tpu_custom_call.1} parent=183 // pred_check
          %p1341 = pneg %p129
        $region186: #{tpu_custom_call.1} parent=183 // pred_check_branch
          %1343 = sbr.rel (%p1341) target = $region188
        $region187: #{tpu_custom_call.1} parent=183 // pred_region
          %1345 = dma.done %s1337, 128
        $region188: #{tpu_custom_call.1} parent=183 // pred_fallthru
          _
        // Predicated region
        $region189: #{tpu_custom_call.1} parent=183 // pred_check
          %p1346 = pneg %p150
        $region190: #{tpu_custom_call.1} parent=183 // pred_check_branch
          %1348 = sbr.rel (%p1346) target = $region192
        $region191: #{tpu_custom_call.1} parent=183 // pred_region
          %1350 = dma.done [#allocation6], 1024
        $region192: #{tpu_custom_call.1} parent=183 // pred_fallthru
          _
        // Predicated region
        $region193: #{tpu_custom_call.1} parent=183 // pred_check
          %p1351 = pneg %p192
        $region194: #{tpu_custom_call.1} parent=183 // pred_check_branch
          %1353 = sbr.rel (%p1351) target = $region196
        $region195: #{tpu_custom_call.1} parent=183 // pred_region
          %1355 = dma.done [#allocation6], 1024
        $region196: #{tpu_custom_call.1} parent=183 // pred_fallthru
          _
        // Predicated region
        $region197: #{tpu_custom_call.1} parent=183 // pred_check
          %p1356 = pneg %p213
        $region198: #{tpu_custom_call.1} parent=183 // pred_check_branch
          %1358 = sbr.rel (%p1356) target = $region200
        $region199: #{tpu_custom_call.1} parent=183 // pred_region
          %1360 = dma.done [#allocation9], 1024
        $region200: #{tpu_custom_call.1} parent=183 // pred_fallthru
          _
        // Predicated region
        $region201: #{tpu_custom_call.1} parent=183 // pred_check
          %p1361 = pneg %p234
        $region202: #{tpu_custom_call.1} parent=183 // pred_check_branch
          %1363 = sbr.rel (%p1361) target = $region204
        $region203: #{tpu_custom_call.1} parent=183 // pred_region
          %1365 = dma.done [#allocation9], 1024
        $region204: #{tpu_custom_call.1} parent=183 // pred_fallthru
          _
        // Predicated region
        $region205: #{tpu_custom_call.1} parent=183 // pred_check
          %p1366 = pneg %p255
        $region206: #{tpu_custom_call.1} parent=183 // pred_check_branch
          %1368 = sbr.rel (%p1366) target = $region208
        $region207: #{tpu_custom_call.1} parent=183 // pred_region
          %1370 = dma.done [#allocation12], 1024
        $region208: #{tpu_custom_call.1} parent=183 // pred_fallthru
          _
        // Predicated region
        $region209: #{tpu_custom_call.1} parent=183 // pred_check
          %p1371 = pneg %p360
        $region210: #{tpu_custom_call.1} parent=183 // pred_check_branch
          %1373 = sbr.rel (%p1371) target = $region212
        $region211: #{tpu_custom_call.1} parent=183 // pred_region
          %1375 = dma.done [#allocation12], 1024
        $region212: #{tpu_custom_call.1} parent=183 // pred_fallthru
          _
        // Predicated region
        $region213: #{tpu_custom_call.1} parent=183 // pred_check
          %p1376 = pneg %p402
        $region214: #{tpu_custom_call.1} parent=183 // pred_check_branch
          %1378 = sbr.rel (%p1376) target = $region216
        $region215: #{tpu_custom_call.1} parent=183 // pred_region
          %1380 = dma.done [#allocation15], 1024
        $region216: #{tpu_custom_call.1} parent=183 // pred_fallthru
          _
        // Predicated region
        $region217: #{tpu_custom_call.1} parent=183 // pred_check
          %p1381 = pneg %p528
        $region218: #{tpu_custom_call.1} parent=183 // pred_check_branch
          %1383 = sbr.rel (%p1381) target = $region220
        $region219: #{tpu_custom_call.1} parent=183 // pred_region
          %1385 = dma.done [#allocation15], 1024
        $region220: #{tpu_custom_call.1} parent=183 // pred_fallthru
          _
        // Predicated region
        $region221: #{tpu_custom_call.1} parent=183 // pred_check
          %p1386 = pneg %p570
        $region222: #{tpu_custom_call.1} parent=183 // pred_check_branch
          %1388 = sbr.rel (%p1386) target = $region224
        $region223: #{tpu_custom_call.1} parent=183 // pred_region
          %1390 = dma.done [#allocation18], 1024
        $region224: #{tpu_custom_call.1} parent=183 // pred_fallthru
          _
        // Predicated region
        $region225: #{tpu_custom_call.1} parent=183 // pred_check
          %p1391 = pneg %p612
        $region226: #{tpu_custom_call.1} parent=183 // pred_check_branch
          %1393 = sbr.rel (%p1391) target = $region228
        $region227: #{tpu_custom_call.1} parent=183 // pred_region
          %1395 = dma.done [#allocation18], 1024
        $region228: #{tpu_custom_call.1} parent=183 // pred_fallthru
          _
        // Predicated region
        $region229: #{tpu_custom_call.1} parent=183 // pred_check
          %p1396 = pneg %p633
        $region230: #{tpu_custom_call.1} parent=183 // pred_check_branch
          %1398 = sbr.rel (%p1396) target = $region232
        $region231: #{tpu_custom_call.1} parent=183 // pred_region
          %1400 = dma.done [#allocation21], 1024
        $region232: #{tpu_custom_call.1} parent=183 // pred_fallthru
          _
        // Predicated region
        $region233: #{tpu_custom_call.1} parent=183 // pred_check
          %p1401 = pneg %p654
        $region234: #{tpu_custom_call.1} parent=183 // pred_check_branch
          %1403 = sbr.rel (%p1401) target = $region236
        $region235: #{tpu_custom_call.1} parent=183 // pred_region
          %1405 = dma.done [#allocation21], 1024
        $region236: #{tpu_custom_call.1} parent=183 // pred_fallthru
          _
        // Predicated region
        $region237: #{tpu_custom_call.1} parent=183 // pred_check
          %p1406 = pneg %p675
        $region238: #{tpu_custom_call.1} parent=183 // pred_check_branch
          %1408 = sbr.rel (%p1406) target = $region240
        $region239: #{tpu_custom_call.1} parent=183 // pred_region
          %1410 = dma.done [#allocation24], 1024
        $region240: #{tpu_custom_call.1} parent=183 // pred_fallthru
          _
        // Predicated region
        $region241: #{tpu_custom_call.1} parent=183 // pred_check
          %p1411 = pneg %p780
        $region242: #{tpu_custom_call.1} parent=183 // pred_check_branch
          %1413 = sbr.rel (%p1411) target = $region244
        $region243: #{tpu_custom_call.1} parent=183 // pred_region
          %1415 = dma.done [#allocation24], 1024
        $region244: #{tpu_custom_call.1} parent=183 // pred_fallthru
          _
        // Predicated region
        $region245: #{tpu_custom_call.1} parent=183 // pred_check
          %p1416 = pneg %p822
        $region246: #{tpu_custom_call.1} parent=183 // pred_check_branch
          %1418 = sbr.rel (%p1416) target = $region248
        $region247: #{tpu_custom_call.1} parent=183 // pred_region
          %1420 = dma.done [#allocation27], 1024
        $region248: #{tpu_custom_call.1} parent=183 // pred_fallthru
          _
        // Predicated region
        $region249: #{tpu_custom_call.1} parent=183 // pred_check
          %p1421 = pneg %p948
        $region250: #{tpu_custom_call.1} parent=183 // pred_check_branch
          %1423 = sbr.rel (%p1421) target = $region252
        $region251: #{tpu_custom_call.1} parent=183 // pred_region
          %1425 = dma.done [#allocation27], 1024
        $region252: #{tpu_custom_call.1} parent=183 // pred_fallthru
          _
        %s1426 = sand.u32 %s116, 1
        %s1427 = scalar_lea.sflag [#allocation3], %s1426
        %s1428 = sand.u32 %s116, 1
        %s1429 = smul.addr %s1428, 8
        %s1430 = scalar_lea.vmem [#allocation2], %s1429
        %p1431 = pneg %p129
        %p1432 = pneg %p126
        %p1433 = pneg %p150
        %p1434 = pneg %p147
        %p1435 = pneg %p171
        %p1436 = pneg %p168
        %p1437 = pneg %p192
        %p1438 = pneg %p189
        %p1439 = pneg %p213
        %p1440 = pneg %p210
        %p1441 = pneg %p234
        %p1442 = pneg %p231
        %p1443 = pneg %p255
        %p1444 = pneg %p252
        %p1445 = pneg %p276
        %p1446 = pneg %p273
        %p1447 = pneg %p297
        %p1448 = pneg %p294
        %p1449 = pneg %p318
        %p1450 = pneg %p315
        %p1451 = pneg %p339
        %p1452 = pneg %p336
        %p1453 = pneg %p360
        %p1454 = pneg %p357
        %p1455 = pneg %p381
        %p1456 = pneg %p378
        %p1457 = pneg %p402
        %p1458 = pneg %p399
        %p1459 = pneg %p423
        %p1460 = pneg %p420
        %p1461 = pneg %p444
        %p1462 = pneg %p441
        %p1463 = pneg %p465
        %p1464 = pneg %p462
        %p1465 = pneg %p486
        %p1466 = pneg %p483
        %p1467 = pneg %p507
        %p1468 = pneg %p504
        %p1469 = pneg %p528
        %p1470 = pneg %p525
        %p1471 = pneg %p549
        %p1472 = pneg %p546
        %p1473 = pneg %p570
        %p1474 = pneg %p567
        %p1475 = pneg %p591
        %p1476 = pneg %p588
        %p1477 = pneg %p612
        %p1478 = pneg %p609
        %p1479 = pneg %p633
        %p1480 = pneg %p630
        %p1481 = pneg %p654
        %p1482 = pneg %p651
        %p1483 = pneg %p675
        %p1484 = pneg %p672
        %p1485 = pneg %p696
        %p1486 = pneg %p693
        %p1487 = pneg %p717
        %p1488 = pneg %p714
        %p1489 = pneg %p738
        %p1490 = pneg %p735
        %p1491 = pneg %p759
        %p1492 = pneg %p756
        %p1493 = pneg %p780
        %p1494 = pneg %p777
        %p1495 = pneg %p801
        %p1496 = pneg %p798
        %p1497 = pneg %p822
        %p1498 = pneg %p819
        %p1499 = pneg %p843
        %p1500 = pneg %p840
        %p1501 = pneg %p864
        %p1502 = pneg %p861
        %p1503 = pneg %p885
        %p1504 = pneg %p882
        %p1505 = pneg %p906
        %p1506 = pneg %p903
        %p1507 = pneg %p927
        %p1508 = pneg %p924
        %p1509 = pneg %p948
        %p1510 = pneg %p945
        %p1511 = pneg %p969
        %p1512 = pneg %p966
        %p1513 = pneg %p995
        %p1514 = pneg %p992
        %s1515 = sand.u32 %s982, 1
        %s1516 = scalar_lea.sflag [#allocation4], %s1515
        %s1517 = sand.u32 %s982, 1
        %s1518 = smul.addr %s1517, 8
        %s1519 = scalar_lea.vmem [#allocation29], %s1518
        %v1521 = vlaneseq
        %v1522 = vand.u32 %v1521, 127
        %vm1523 = vcmp.lt.s32.totalorder %v1522, 32
        %v1524 = vsel %vm1523, 1, 0
        %v1525 = vcvt.s32.f32 %v1524
        %v1526 = vld [vmem:[%s1340] sm:$0xff]
        %v1527 = vpack.c.bf16 %v1526, %v1526
        %v1528 = vld [vmem:[#allocation5] sm:$0xf]
        %v1529 = vld [vmem:[#allocation5 + $0x4] sm:$0xf]
        %v1530 = vld [vmem:[#allocation5 + $0x8] sm:$0xf]
        %v1531 = vld [vmem:[#allocation5 + $0xc] sm:$0xf]
        %v1532 = vld [vmem:[#allocation5 + $0x10] sm:$0xf]
        %v1533 = vld [vmem:[#allocation5 + $0x14] sm:$0xf]
        %v1534 = vld [vmem:[#allocation5 + $0x18] sm:$0xf]
        %v1535 = vld [vmem:[#allocation5 + $0x1c] sm:$0xf]
        %v1536 = vld [vmem:[#allocation5 + $0x20] sm:$0xf]
        %v1537 = vld [vmem:[#allocation5 + $0x24] sm:$0xf]
        %v1538 = vld [vmem:[#allocation5 + $0x28] sm:$0xf]
        %v1539 = vld [vmem:[#allocation5 + $0x2c] sm:$0xf]
        %v1540 = vld [vmem:[#allocation5 + $0x30] sm:$0xf]
        %v1541 = vld [vmem:[#allocation5 + $0x34] sm:$0xf]
        %v1542 = vld [vmem:[#allocation5 + $0x38] sm:$0xf]
        %v1543 = vld [vmem:[#allocation5 + $0x3c] sm:$0xf]
        %v1544 = vld [vmem:[%s5] sm:$0x1]
        %v1546 = vperm.slane %v1544, 0
        %v1564 = vunpack.c.l.b16 %v1528
        %v1565 = vunpack.c.l.b16 %v1529
        %v1566 = vunpack.c.l.b16 %v1530
        %v1567 = vunpack.c.l.b16 %v1531
        %v1568 = vunpack.c.l.b16 %v1532
        %v1569 = vunpack.c.l.b16 %v1533
        %v1570 = vunpack.c.l.b16 %v1534
        %v1571 = vunpack.c.l.b16 %v1535
        %v1572 = vunpack.c.l.b16 %v1536
        %v1573 = vunpack.c.l.b16 %v1537
        %v1574 = vunpack.c.l.b16 %v1538
        %v1575 = vunpack.c.l.b16 %v1539
        %v1576 = vunpack.c.l.b16 %v1540
        %v1577 = vunpack.c.l.b16 %v1541
        %v1578 = vunpack.c.l.b16 %v1542
        %v1579 = vunpack.c.l.b16 %v1543
        %v1580 = vpack.c.b16 %v1565, %v1564
        %v1581 = vpack.c.b16 %v1567, %v1566
        %v1582 = vpack.c.b16 %v1569, %v1568
        %v1583 = vpack.c.b16 %v1571, %v1570
        %v1584 = vpack.c.b16 %v1573, %v1572
        %v1585 = vpack.c.b16 %v1575, %v1574
        %v1586 = vpack.c.b16 %v1577, %v1576
        %v1587 = vpack.c.b16 %v1579, %v1578
        %1596 = vmatpush.bf16.msra.mxu0 %v1587
        %1597 = vmatpush.bf16.msra.mxu0 %v1586
        %1598 = vmatpush.bf16.msra.mxu0 %v1585
        %1599 = vmatpush.bf16.msra.mxu0 %v1584
        %1600 = vmatpush.bf16.msra.mxu0 %v1583
        %1601 = vmatpush.bf16.msra.mxu0 %v1582
        %1602 = vmatpush.bf16.msra.mxu0 %v1581
        %1603 = vmatpush.bf16.msra.mxu0 %v1580
        %1604 = vmatmul.bf16.gmra.mxu0 %v1527
        %v1605 = vpop.f32.mrf.mxu0
        %v1606 = vadd.f32 %v1546, %v1605
        %v1607 = vpop.f32.mrf.mxu0
        %1608 = vdwg.mxu0
        %v1609 = vmax.f32 %v1606, 0.0
        %v1610 = vpack.c.bf16 %v1609, %v1609
        %v1611 = vld [vmem:[#allocation7] sm:$0xf]
        %v1612 = vld [vmem:[#allocation7 + $0x4] sm:$0xf]
        %v1613 = vld [vmem:[#allocation7 + $0x8] sm:$0xf]
        %v1614 = vld [vmem:[#allocation7 + $0xc] sm:$0xf]
        %v1615 = vld [vmem:[#allocation7 + $0x10] sm:$0xf]
        %v1616 = vld [vmem:[#allocation7 + $0x14] sm:$0xf]
        %v1617 = vld [vmem:[#allocation7 + $0x18] sm:$0xf]
        %v1618 = vld [vmem:[#allocation7 + $0x1c] sm:$0xf]
        %v1619 = vld [vmem:[#allocation7 + $0x20] sm:$0xf]
        %v1620 = vld [vmem:[#allocation7 + $0x24] sm:$0xf]
        %v1621 = vld [vmem:[#allocation7 + $0x28] sm:$0xf]
        %v1622 = vld [vmem:[#allocation7 + $0x2c] sm:$0xf]
        %v1623 = vld [vmem:[#allocation7 + $0x30] sm:$0xf]
        %v1624 = vld [vmem:[#allocation7 + $0x34] sm:$0xf]
        %v1625 = vld [vmem:[#allocation7 + $0x38] sm:$0xf]
        %v1626 = vld [vmem:[#allocation7 + $0x3c] sm:$0xf]
        %v1627 = vld [vmem:[%s15] sm:$0x1]
        %v1629 = vperm.slane %v1627, 0
        %v1647 = vunpack.c.l.b16 %v1611
        %v1648 = vunpack.c.l.b16 %v1612
        %v1649 = vunpack.c.l.b16 %v1613
        %v1650 = vunpack.c.l.b16 %v1614
        %v1651 = vunpack.c.l.b16 %v1615
        %v1652 = vunpack.c.l.b16 %v1616
        %v1653 = vunpack.c.l.b16 %v1617
        %v1654 = vunpack.c.l.b16 %v1618
        %v1655 = vunpack.c.l.b16 %v1619
        %v1656 = vunpack.c.l.b16 %v1620
        %v1657 = vunpack.c.l.b16 %v1621
        %v1658 = vunpack.c.l.b16 %v1622
        %v1659 = vunpack.c.l.b16 %v1623
        %v1660 = vunpack.c.l.b16 %v1624
        %v1661 = vunpack.c.l.b16 %v1625
        %v1662 = vunpack.c.l.b16 %v1626
        %v1663 = vpack.c.b16 %v1648, %v1647
        %v1664 = vpack.c.b16 %v1650, %v1649
        %v1665 = vpack.c.b16 %v1652, %v1651
        %v1666 = vpack.c.b16 %v1654, %v1653
        %v1667 = vpack.c.b16 %v1656, %v1655
        %v1668 = vpack.c.b16 %v1658, %v1657
        %v1669 = vpack.c.b16 %v1660, %v1659
        %v1670 = vpack.c.b16 %v1662, %v1661
        %1679 = vmatpush.bf16.msra.mxu0 %v1670
        %1680 = vmatpush.bf16.msra.mxu0 %v1669
        %1681 = vmatpush.bf16.msra.mxu0 %v1668
        %1682 = vmatpush.bf16.msra.mxu0 %v1667
        %1683 = vmatpush.bf16.msra.mxu0 %v1666
        %1684 = vmatpush.bf16.msra.mxu0 %v1665
        %1685 = vmatpush.bf16.msra.mxu0 %v1664
        %1686 = vmatpush.bf16.msra.mxu0 %v1663
        %1687 = vmatmul.bf16.gmra.mxu0 %v1610
        %v1688 = vpop.f32.mrf.mxu0
        %v1689 = vadd.f32 %v1629, %v1688
        %v1690 = vpop.f32.mrf.mxu0
        %1691 = vdwg.mxu0
        %v1692 = vld [vmem:[#allocation8] sm:$0xf]
        %v1693 = vld [vmem:[#allocation8 + $0x4] sm:$0xf]
        %v1694 = vld [vmem:[#allocation8 + $0x8] sm:$0xf]
        %v1695 = vld [vmem:[#allocation8 + $0xc] sm:$0xf]
        %v1696 = vld [vmem:[#allocation8 + $0x10] sm:$0xf]
        %v1697 = vld [vmem:[#allocation8 + $0x14] sm:$0xf]
        %v1698 = vld [vmem:[#allocation8 + $0x18] sm:$0xf]
        %v1699 = vld [vmem:[#allocation8 + $0x1c] sm:$0xf]
        %v1700 = vld [vmem:[#allocation8 + $0x20] sm:$0xf]
        %v1701 = vld [vmem:[#allocation8 + $0x24] sm:$0xf]
        %v1702 = vld [vmem:[#allocation8 + $0x28] sm:$0xf]
        %v1703 = vld [vmem:[#allocation8 + $0x2c] sm:$0xf]
        %v1704 = vld [vmem:[#allocation8 + $0x30] sm:$0xf]
        %v1705 = vld [vmem:[#allocation8 + $0x34] sm:$0xf]
        %v1706 = vld [vmem:[#allocation8 + $0x38] sm:$0xf]
        %v1707 = vld [vmem:[#allocation8 + $0x3c] sm:$0xf]
        %v1708 = vld [vmem:[%s17] sm:$0x1]
        %v1710 = vperm.slane %v1708, 0
        %v1728 = vunpack.c.l.b16 %v1692
        %v1729 = vunpack.c.l.b16 %v1693
        %v1730 = vunpack.c.l.b16 %v1694
        %v1731 = vunpack.c.l.b16 %v1695
        %v1732 = vunpack.c.l.b16 %v1696
        %v1733 = vunpack.c.l.b16 %v1697
        %v1734 = vunpack.c.l.b16 %v1698
        %v1735 = vunpack.c.l.b16 %v1699
        %v1736 = vunpack.c.l.b16 %v1700
        %v1737 = vunpack.c.l.b16 %v1701
        %v1738 = vunpack.c.l.b16 %v1702
        %v1739 = vunpack.c.l.b16 %v1703
        %v1740 = vunpack.c.l.b16 %v1704
        %v1741 = vunpack.c.l.b16 %v1705
        %v1742 = vunpack.c.l.b16 %v1706
        %v1743 = vunpack.c.l.b16 %v1707
        %v1744 = vpack.c.b16 %v1729, %v1728
        %v1745 = vpack.c.b16 %v1731, %v1730
        %v1746 = vpack.c.b16 %v1733, %v1732
        %v1747 = vpack.c.b16 %v1735, %v1734
        %v1748 = vpack.c.b16 %v1737, %v1736
        %v1749 = vpack.c.b16 %v1739, %v1738
        %v1750 = vpack.c.b16 %v1741, %v1740
        %v1751 = vpack.c.b16 %v1743, %v1742
        %1760 = vmatpush.bf16.msra.mxu0 %v1751
        %1761 = vmatpush.bf16.msra.mxu0 %v1750
        %1762 = vmatpush.bf16.msra.mxu0 %v1749
        %1763 = vmatpush.bf16.msra.mxu0 %v1748
        %1764 = vmatpush.bf16.msra.mxu0 %v1747
        %1765 = vmatpush.bf16.msra.mxu0 %v1746
        %1766 = vmatpush.bf16.msra.mxu0 %v1745
        %1767 = vmatpush.bf16.msra.mxu0 %v1744
        %1768 = vmatmul.bf16.gmra.mxu0 %v1610
        %v1769 = vpop.f32.mrf.mxu0
        %v1770 = vadd.f32 %v1710, %v1769
        %v1771 = vpop.f32.mrf.mxu0
        %1772 = vdwg.mxu0
        %v1773 = vld [vmem:[#allocation10] sm:$0xf]
        %v1774 = vld [vmem:[#allocation10 + $0x4] sm:$0xf]
        %v1775 = vld [vmem:[#allocation10 + $0x8] sm:$0xf]
        %v1776 = vld [vmem:[#allocation10 + $0xc] sm:$0xf]
        %v1777 = vld [vmem:[#allocation10 + $0x10] sm:$0xf]
        %v1778 = vld [vmem:[#allocation10 + $0x14] sm:$0xf]
        %v1779 = vld [vmem:[#allocation10 + $0x18] sm:$0xf]
        %v1780 = vld [vmem:[#allocation10 + $0x1c] sm:$0xf]
        %v1781 = vld [vmem:[#allocation10 + $0x20] sm:$0xf]
        %v1782 = vld [vmem:[#allocation10 + $0x24] sm:$0xf]
        %v1783 = vld [vmem:[#allocation10 + $0x28] sm:$0xf]
        %v1784 = vld [vmem:[#allocation10 + $0x2c] sm:$0xf]
        %v1785 = vld [vmem:[#allocation10 + $0x30] sm:$0xf]
        %v1786 = vld [vmem:[#allocation10 + $0x34] sm:$0xf]
        %v1787 = vld [vmem:[#allocation10 + $0x38] sm:$0xf]
        %v1788 = vld [vmem:[#allocation10 + $0x3c] sm:$0xf]
        %v1789 = vld [vmem:[%s19] sm:$0x1]
        %v1791 = vperm.slane %v1789, 0
        %v1809 = vunpack.c.l.b16 %v1773
        %v1810 = vunpack.c.l.b16 %v1774
        %v1811 = vunpack.c.l.b16 %v1775
        %v1812 = vunpack.c.l.b16 %v1776
        %v1813 = vunpack.c.l.b16 %v1777
        %v1814 = vunpack.c.l.b16 %v1778
        %v1815 = vunpack.c.l.b16 %v1779
        %v1816 = vunpack.c.l.b16 %v1780
        %v1817 = vunpack.c.l.b16 %v1781
        %v1818 = vunpack.c.l.b16 %v1782
        %v1819 = vunpack.c.l.b16 %v1783
        %v1820 = vunpack.c.l.b16 %v1784
        %v1821 = vunpack.c.l.b16 %v1785
        %v1822 = vunpack.c.l.b16 %v1786
        %v1823 = vunpack.c.l.b16 %v1787
        %v1824 = vunpack.c.l.b16 %v1788
        %v1825 = vpack.c.b16 %v1810, %v1809
        %v1826 = vpack.c.b16 %v1812, %v1811
        %v1827 = vpack.c.b16 %v1814, %v1813
        %v1828 = vpack.c.b16 %v1816, %v1815
        %v1829 = vpack.c.b16 %v1818, %v1817
        %v1830 = vpack.c.b16 %v1820, %v1819
        %v1831 = vpack.c.b16 %v1822, %v1821
        %v1832 = vpack.c.b16 %v1824, %v1823
        %1841 = vmatpush.bf16.msra.mxu0 %v1832
        %1842 = vmatpush.bf16.msra.mxu0 %v1831
        %1843 = vmatpush.bf16.msra.mxu0 %v1830
        %1844 = vmatpush.bf16.msra.mxu0 %v1829
        %1845 = vmatpush.bf16.msra.mxu0 %v1828
        %1846 = vmatpush.bf16.msra.mxu0 %v1827
        %1847 = vmatpush.bf16.msra.mxu0 %v1826
        %1848 = vmatpush.bf16.msra.mxu0 %v1825
        %1849 = vmatmul.bf16.gmra.mxu0 %v1610
        %v1850 = vpop.f32.mrf.mxu0
        %v1851 = vadd.f32 %v1791, %v1850
        %v1852 = vpop.f32.mrf.mxu0
        %1853 = vdwg.mxu0
        %v1854 = vmul.f32 %v1689, 0.17677669
        %v1855 = vpack.c.bf16 %v1854, %v1854
        %v1856 = vpack.c.bf16 %v1770, %v1770
        %1857 = vmatpush.bf16.xpose.msra.mxu0 0
        %1858 = vmatpush.bf16.xpose.msra.mxu0 0
        %1859 = vmatpush.bf16.xpose.msra.mxu0 0
        %1860 = vmatpush.bf16.xpose.msra.mxu0 0
        %1861 = vmatpush.bf16.xpose.msra.mxu0 0
        %1862 = vmatpush.bf16.xpose.msra.mxu0 0
        %1863 = vmatpush.bf16.xpose.msra.mxu0 0
        %1864 = vmatpush.bf16.xpose.msra.mxu0 %v1856
        %1865 = vmatmul.bf16.gmra.mxu0 %v1855
        %v1866 = vpop.f32.mrf.mxu0
        %v1867 = vadd.f32 0.0, %v1866
        %v1868 = vpop.f32.mrf.mxu0
        %1869 = vdwg.mxu0
        %vm1870 = vcmask 64512
        %v1871 = vsel %vm1870, %v1867, -inf
        %1872 = vmax.xlane.f32.xlu0 %v1871
        %v1873 = vpop.xlane.xlu0 %1872
        %v1874 = vsub.f32 %v1867, %v1873
        %v1875 = vmul.f32 %v1874, 1.442695
        %v1876 = vpow.pop %v1875
        %v1877 = vsel %vm1870, %v1876, 0.0
        %1878 = vadd.xlane.f32.xlu0 %v1877
        %v1879 = vpop.xlane.xlu0 %1878
        %v1880 = vrcp.pop %v1879
        %v1881 = vmul.f32 %v1876, %v1880
        %v1882 = vpack.c.bf16 %v1881, %v1881
        %v1883 = vpack.c.bf16 %v1851, %v1851
        %v1885 = vsel %vm1870, %v1882, 0
        %vm1887 = vcmask 1043456
        %v1889 = vsel %vm1887, %v1883, 0
        %1891 = vmatpush.bf16.msra.mxu0 0
        %1892 = vmatpush.bf16.msra.mxu0 0
        %1893 = vmatpush.bf16.msra.mxu0 0
        %1894 = vmatpush.bf16.msra.mxu0 0
        %1895 = vmatpush.bf16.msra.mxu0 0
        %1896 = vmatpush.bf16.msra.mxu0 0
        %1897 = vmatpush.bf16.msra.mxu0 0
        %1898 = vmatpush.bf16.msra.mxu0 %v1889
        %1899 = vmatmul.bf16.gmra.mxu0 %v1885
        %v1900 = vpop.f32.mrf.mxu0
        %v1901 = vadd.f32 0.0, %v1900
        %v1902 = vpop.f32.mrf.mxu0
        %1903 = vdwg.mxu0
        %v1904 = vpack.c.bf16 %v1901, %v1901
        %v1905 = vld [vmem:[#allocation11] sm:$0xf]
        %v1906 = vld [vmem:[#allocation11 + $0x4] sm:$0xf]
        %v1907 = vld [vmem:[#allocation11 + $0x8] sm:$0xf]
        %v1908 = vld [vmem:[#allocation11 + $0xc] sm:$0xf]
        %v1909 = vld [vmem:[#allocation11 + $0x10] sm:$0xf]
        %v1910 = vld [vmem:[#allocation11 + $0x14] sm:$0xf]
        %v1911 = vld [vmem:[#allocation11 + $0x18] sm:$0xf]
        %v1912 = vld [vmem:[#allocation11 + $0x1c] sm:$0xf]
        %v1913 = vld [vmem:[#allocation11 + $0x20] sm:$0xf]
        %v1914 = vld [vmem:[#allocation11 + $0x24] sm:$0xf]
        %v1915 = vld [vmem:[#allocation11 + $0x28] sm:$0xf]
        %v1916 = vld [vmem:[#allocation11 + $0x2c] sm:$0xf]
        %v1917 = vld [vmem:[#allocation11 + $0x30] sm:$0xf]
        %v1918 = vld [vmem:[#allocation11 + $0x34] sm:$0xf]
        %v1919 = vld [vmem:[#allocation11 + $0x38] sm:$0xf]
        %v1920 = vld [vmem:[#allocation11 + $0x3c] sm:$0xf]
        %v1921 = vld [vmem:[%s21] sm:$0x1]
        %v1923 = vperm.slane %v1921, 0
        %v1941 = vunpack.c.l.b16 %v1905
        %v1942 = vunpack.c.l.b16 %v1906
        %v1943 = vunpack.c.l.b16 %v1907
        %v1944 = vunpack.c.l.b16 %v1908
        %v1945 = vunpack.c.l.b16 %v1909
        %v1946 = vunpack.c.l.b16 %v1910
        %v1947 = vunpack.c.l.b16 %v1911
        %v1948 = vunpack.c.l.b16 %v1912
        %v1949 = vunpack.c.l.b16 %v1913
        %v1950 = vunpack.c.l.b16 %v1914
        %v1951 = vunpack.c.l.b16 %v1915
        %v1952 = vunpack.c.l.b16 %v1916
        %v1953 = vunpack.c.l.b16 %v1917
        %v1954 = vunpack.c.l.b16 %v1918
        %v1955 = vunpack.c.l.b16 %v1919
        %v1956 = vunpack.c.l.b16 %v1920
        %v1957 = vpack.c.b16 %v1942, %v1941
        %v1958 = vpack.c.b16 %v1944, %v1943
        %v1959 = vpack.c.b16 %v1946, %v1945
        %v1960 = vpack.c.b16 %v1948, %v1947
        %v1961 = vpack.c.b16 %v1950, %v1949
        %v1962 = vpack.c.b16 %v1952, %v1951
        %v1963 = vpack.c.b16 %v1954, %v1953
        %v1964 = vpack.c.b16 %v1956, %v1955
        %1973 = vmatpush.bf16.msra.mxu0 %v1964
        %1974 = vmatpush.bf16.msra.mxu0 %v1963
        %1975 = vmatpush.bf16.msra.mxu0 %v1962
        %1976 = vmatpush.bf16.msra.mxu0 %v1961
        %1977 = vmatpush.bf16.msra.mxu0 %v1960
        %1978 = vmatpush.bf16.msra.mxu0 %v1959
        %1979 = vmatpush.bf16.msra.mxu0 %v1958
        %1980 = vmatpush.bf16.msra.mxu0 %v1957
        %1981 = vmatmul.bf16.gmra.mxu0 %v1904
        %v1982 = vpop.f32.mrf.mxu0
        %v1983 = vadd.f32 %v1923, %v1982
        %v1984 = vpop.f32.mrf.mxu0
        %1985 = vdwg.mxu0
        %v1986 = vadd.f32 %v1609, %v1983
        %v1987 = vld [vmem:[%s31] sm:$0x1]
        %v1988 = vld [vmem:[%s33] sm:$0x1]
        %1989 = vadd.xlane.f32.xlu0 %v1986
        %v1990 = vpop.xlane.xlu0 %1989
        %v1991 = vmul.f32 %v1990, 0.03125
        %v1992 = vsub.f32 %v1986, %v1991
        %v1993 = vmul.f32 %v1992, %v1992
        %v1994 = vmul.f32 %v1993, %v1525
        %1995 = vadd.xlane.f32.xlu0 %v1994
        %v1996 = vpop.xlane.xlu0 %1995
        %v1997 = vmul.f32 %v1996, 0.03125
        %v1998 = vadd.f32 %v1997, 1e-05
        %v1999 = vrsqrt.pop %v1998
        %v2000 = vmul.f32 %v1999, %v1998
        %v2001 = vmul.f32 %v2000, %v1999
        %v2002 = vmul.f32 0.5, %v2001
        %v2003 = vsub.f32 1.5, %v2002
        %v2004 = vmul.f32 %v1999, %v2003
        %vm2005 = vweird.f32 %v1998
        %vm2006 = vweird.f32 %v1999
        %vm2007 = vmor %vm2005, %vm2006
        %v2008 = vsel %vm2007, %v1999, %v2004
        %v2009 = vmul.f32 %v1992, %v2008
        %v2011 = vperm.slane %v1987, 0
        %v2013 = vmul.f32 %v2009, %v2011
        %v2015 = vperm.slane %v1988, 0
        %v2017 = vadd.f32 %v2013, %v2015
        %v2018 = vpack.c.bf16 %v2017, %v2017
        %v2019 = vld [vmem:[#allocation13] sm:$0xf]
        %v2020 = vld [vmem:[#allocation13 + $0x4] sm:$0xf]
        %v2021 = vld [vmem:[#allocation13 + $0x8] sm:$0xf]
        %v2022 = vld [vmem:[#allocation13 + $0xc] sm:$0xf]
        %v2023 = vld [vmem:[#allocation13 + $0x10] sm:$0xf]
        %v2024 = vld [vmem:[#allocation13 + $0x14] sm:$0xf]
        %v2025 = vld [vmem:[#allocation13 + $0x18] sm:$0xf]
        %v2026 = vld [vmem:[#allocation13 + $0x1c] sm:$0xf]
        %v2027 = vld [vmem:[#allocation13 + $0x20] sm:$0xf]
        %v2028 = vld [vmem:[#allocation13 + $0x24] sm:$0xf]
        %v2029 = vld [vmem:[#allocation13 + $0x28] sm:$0xf]
        %v2030 = vld [vmem:[#allocation13 + $0x2c] sm:$0xf]
        %v2031 = vld [vmem:[#allocation13 + $0x30] sm:$0xf]
        %v2032 = vld [vmem:[#allocation13 + $0x34] sm:$0xf]
        %v2033 = vld [vmem:[#allocation13 + $0x38] sm:$0xf]
        %v2034 = vld [vmem:[#allocation13 + $0x3c] sm:$0xf]
        %v2035 = vld [vmem:[%s25] sm:$0x1]
        %v2037 = vperm.slane %v2035, 0
        %v2055 = vunpack.c.l.b16 %v2019
        %v2056 = vunpack.c.l.b16 %v2020
        %v2057 = vunpack.c.l.b16 %v2021
        %v2058 = vunpack.c.l.b16 %v2022
        %v2059 = vunpack.c.l.b16 %v2023
        %v2060 = vunpack.c.l.b16 %v2024
        %v2061 = vunpack.c.l.b16 %v2025
        %v2062 = vunpack.c.l.b16 %v2026
        %v2063 = vunpack.c.l.b16 %v2027
        %v2064 = vunpack.c.l.b16 %v2028
        %v2065 = vunpack.c.l.b16 %v2029
        %v2066 = vunpack.c.l.b16 %v2030
        %v2067 = vunpack.c.l.b16 %v2031
        %v2068 = vunpack.c.l.b16 %v2032
        %v2069 = vunpack.c.l.b16 %v2033
        %v2070 = vunpack.c.l.b16 %v2034
        %v2071 = vpack.c.b16 %v2056, %v2055
        %v2072 = vpack.c.b16 %v2058, %v2057
        %v2073 = vpack.c.b16 %v2060, %v2059
        %v2074 = vpack.c.b16 %v2062, %v2061
        %v2075 = vpack.c.b16 %v2064, %v2063
        %v2076 = vpack.c.b16 %v2066, %v2065
        %v2077 = vpack.c.b16 %v2068, %v2067
        %v2078 = vpack.c.b16 %v2070, %v2069
        %2087 = vmatpush.bf16.msra.mxu0 %v2078
        %2088 = vmatpush.bf16.msra.mxu0 %v2077
        %2089 = vmatpush.bf16.msra.mxu0 %v2076
        %2090 = vmatpush.bf16.msra.mxu0 %v2075
        %2091 = vmatpush.bf16.msra.mxu0 %v2074
        %2092 = vmatpush.bf16.msra.mxu0 %v2073
        %2093 = vmatpush.bf16.msra.mxu0 %v2072
        %2094 = vmatpush.bf16.msra.mxu0 %v2071
        %2095 = vmatmul.bf16.gmra.mxu0 %v2018
        %v2096 = vpop.f32.mrf.mxu0
        %v2097 = vadd.f32 %v2037, %v2096
        %v2098 = vpop.f32.mrf.mxu0
        %2099 = vdwg.mxu0
        %v2100 = vmax.f32 %v2097, 0.0
        %v2101 = vpack.c.bf16 %v2100, %v2100
        %v2102 = vld [vmem:[#allocation14] sm:$0xf]
        %v2103 = vld [vmem:[#allocation14 + $0x4] sm:$0xf]
        %v2104 = vld [vmem:[#allocation14 + $0x8] sm:$0xf]
        %v2105 = vld [vmem:[#allocation14 + $0xc] sm:$0xf]
        %v2106 = vld [vmem:[#allocation14 + $0x10] sm:$0xf]
        %v2107 = vld [vmem:[#allocation14 + $0x14] sm:$0xf]
        %v2108 = vld [vmem:[#allocation14 + $0x18] sm:$0xf]
        %v2109 = vld [vmem:[#allocation14 + $0x1c] sm:$0xf]
        %v2110 = vld [vmem:[#allocation14 + $0x20] sm:$0xf]
        %v2111 = vld [vmem:[#allocation14 + $0x24] sm:$0xf]
        %v2112 = vld [vmem:[#allocation14 + $0x28] sm:$0xf]
        %v2113 = vld [vmem:[#allocation14 + $0x2c] sm:$0xf]
        %v2114 = vld [vmem:[#allocation14 + $0x30] sm:$0xf]
        %v2115 = vld [vmem:[#allocation14 + $0x34] sm:$0xf]
        %v2116 = vld [vmem:[#allocation14 + $0x38] sm:$0xf]
        %v2117 = vld [vmem:[#allocation14 + $0x3c] sm:$0xf]
        %v2118 = vld [vmem:[%s29] sm:$0x1]
        %v2120 = vperm.slane %v2118, 0
        %v2138 = vunpack.c.l.b16 %v2102
        %v2139 = vunpack.c.l.b16 %v2103
        %v2140 = vunpack.c.l.b16 %v2104
        %v2141 = vunpack.c.l.b16 %v2105
        %v2142 = vunpack.c.l.b16 %v2106
        %v2143 = vunpack.c.l.b16 %v2107
        %v2144 = vunpack.c.l.b16 %v2108
        %v2145 = vunpack.c.l.b16 %v2109
        %v2146 = vunpack.c.l.b16 %v2110
        %v2147 = vunpack.c.l.b16 %v2111
        %v2148 = vunpack.c.l.b16 %v2112
        %v2149 = vunpack.c.l.b16 %v2113
        %v2150 = vunpack.c.l.b16 %v2114
        %v2151 = vunpack.c.l.b16 %v2115
        %v2152 = vunpack.c.l.b16 %v2116
        %v2153 = vunpack.c.l.b16 %v2117
        %v2154 = vpack.c.b16 %v2139, %v2138
        %v2155 = vpack.c.b16 %v2141, %v2140
        %v2156 = vpack.c.b16 %v2143, %v2142
        %v2157 = vpack.c.b16 %v2145, %v2144
        %v2158 = vpack.c.b16 %v2147, %v2146
        %v2159 = vpack.c.b16 %v2149, %v2148
        %v2160 = vpack.c.b16 %v2151, %v2150
        %v2161 = vpack.c.b16 %v2153, %v2152
        %2170 = vmatpush.bf16.msra.mxu0 %v2161
        %2171 = vmatpush.bf16.msra.mxu0 %v2160
        %2172 = vmatpush.bf16.msra.mxu0 %v2159
        %2173 = vmatpush.bf16.msra.mxu0 %v2158
        %2174 = vmatpush.bf16.msra.mxu0 %v2157
        %2175 = vmatpush.bf16.msra.mxu0 %v2156
        %2176 = vmatpush.bf16.msra.mxu0 %v2155
        %2177 = vmatpush.bf16.msra.mxu0 %v2154
        %2178 = vmatmul.bf16.gmra.mxu0 %v2101
        %v2179 = vpop.f32.mrf.mxu0
        %v2180 = vadd.f32 %v2120, %v2179
        %v2181 = vpop.f32.mrf.mxu0
        %2182 = vdwg.mxu0
        %v2183 = vadd.f32 %v2017, %v2180
        %v2184 = vld [vmem:[%s35] sm:$0x1]
        %v2185 = vld [vmem:[%s37] sm:$0x1]
        %2186 = vadd.xlane.f32.xlu0 %v2183
        %v2187 = vpop.xlane.xlu0 %2186
        %v2188 = vmul.f32 %v2187, 0.03125
        %v2189 = vsub.f32 %v2183, %v2188
        %v2190 = vmul.f32 %v2189, %v2189
        %v2191 = vmul.f32 %v2190, %v1525
        %2192 = vadd.xlane.f32.xlu0 %v2191
        %v2193 = vpop.xlane.xlu0 %2192
        %v2194 = vmul.f32 %v2193, 0.03125
        %v2195 = vadd.f32 %v2194, 1e-05
        %v2196 = vrsqrt.pop %v2195
        %v2197 = vmul.f32 %v2196, %v2195
        %v2198 = vmul.f32 %v2197, %v2196
        %v2199 = vmul.f32 0.5, %v2198
        %v2200 = vsub.f32 1.5, %v2199
        %v2201 = vmul.f32 %v2196, %v2200
        %vm2202 = vweird.f32 %v2195
        %vm2203 = vweird.f32 %v2196
        %vm2204 = vmor %vm2202, %vm2203
        %v2205 = vsel %vm2204, %v2196, %v2201
        %v2206 = vmul.f32 %v2189, %v2205
        %v2208 = vperm.slane %v2184, 0
        %v2210 = vmul.f32 %v2206, %v2208
        %v2212 = vperm.slane %v2185, 0
        %v2214 = vadd.f32 %v2210, %v2212
        %v2215 = vpack.c.bf16 %v2214, %v2214
        %v2216 = vld [vmem:[#allocation16] sm:$0xf]
        %v2217 = vld [vmem:[#allocation16 + $0x4] sm:$0xf]
        %v2218 = vld [vmem:[#allocation16 + $0x8] sm:$0xf]
        %v2219 = vld [vmem:[#allocation16 + $0xc] sm:$0xf]
        %v2220 = vld [vmem:[#allocation16 + $0x10] sm:$0xf]
        %v2221 = vld [vmem:[#allocation16 + $0x14] sm:$0xf]
        %v2222 = vld [vmem:[#allocation16 + $0x18] sm:$0xf]
        %v2223 = vld [vmem:[#allocation16 + $0x1c] sm:$0xf]
        %v2224 = vld [vmem:[#allocation16 + $0x20] sm:$0xf]
        %v2225 = vld [vmem:[#allocation16 + $0x24] sm:$0xf]
        %v2226 = vld [vmem:[#allocation16 + $0x28] sm:$0xf]
        %v2227 = vld [vmem:[#allocation16 + $0x2c] sm:$0xf]
        %v2228 = vld [vmem:[#allocation16 + $0x30] sm:$0xf]
        %v2229 = vld [vmem:[#allocation16 + $0x34] sm:$0xf]
        %v2230 = vld [vmem:[#allocation16 + $0x38] sm:$0xf]
        %v2231 = vld [vmem:[#allocation16 + $0x3c] sm:$0xf]
        %v2232 = vld [vmem:[%s41] sm:$0x1]
        %v2234 = vperm.slane %v2232, 0
        %v2252 = vunpack.c.l.b16 %v2216
        %v2253 = vunpack.c.l.b16 %v2217
        %v2254 = vunpack.c.l.b16 %v2218
        %v2255 = vunpack.c.l.b16 %v2219
        %v2256 = vunpack.c.l.b16 %v2220
        %v2257 = vunpack.c.l.b16 %v2221
        %v2258 = vunpack.c.l.b16 %v2222
        %v2259 = vunpack.c.l.b16 %v2223
        %v2260 = vunpack.c.l.b16 %v2224
        %v2261 = vunpack.c.l.b16 %v2225
        %v2262 = vunpack.c.l.b16 %v2226
        %v2263 = vunpack.c.l.b16 %v2227
        %v2264 = vunpack.c.l.b16 %v2228
        %v2265 = vunpack.c.l.b16 %v2229
        %v2266 = vunpack.c.l.b16 %v2230
        %v2267 = vunpack.c.l.b16 %v2231
        %v2268 = vpack.c.b16 %v2253, %v2252
        %v2269 = vpack.c.b16 %v2255, %v2254
        %v2270 = vpack.c.b16 %v2257, %v2256
        %v2271 = vpack.c.b16 %v2259, %v2258
        %v2272 = vpack.c.b16 %v2261, %v2260
        %v2273 = vpack.c.b16 %v2263, %v2262
        %v2274 = vpack.c.b16 %v2265, %v2264
        %v2275 = vpack.c.b16 %v2267, %v2266
        %2284 = vmatpush.bf16.msra.mxu0 %v2275
        %2285 = vmatpush.bf16.msra.mxu0 %v2274
        %2286 = vmatpush.bf16.msra.mxu0 %v2273
        %2287 = vmatpush.bf16.msra.mxu0 %v2272
        %2288 = vmatpush.bf16.msra.mxu0 %v2271
        %2289 = vmatpush.bf16.msra.mxu0 %v2270
        %2290 = vmatpush.bf16.msra.mxu0 %v2269
        %2291 = vmatpush.bf16.msra.mxu0 %v2268
        %2292 = vmatmul.bf16.gmra.mxu0 %v2215
        %v2293 = vpop.f32.mrf.mxu0
        %v2294 = vadd.f32 %v2234, %v2293
        %v2295 = vpop.f32.mrf.mxu0
        %2296 = vdwg.mxu0
        %v2297 = vpack.c.bf16 %v2294, %v2294
        %v2298 = vld [vmem:[#allocation17] sm:$0xf]
        %v2299 = vld [vmem:[#allocation17 + $0x4] sm:$0xf]
        %v2300 = vld [vmem:[#allocation17 + $0x8] sm:$0xf]
        %v2301 = vld [vmem:[#allocation17 + $0xc] sm:$0xf]
        %v2302 = vld [vmem:[#allocation17 + $0x10] sm:$0xf]
        %v2303 = vld [vmem:[#allocation17 + $0x14] sm:$0xf]
        %v2304 = vld [vmem:[#allocation17 + $0x18] sm:$0xf]
        %v2305 = vld [vmem:[#allocation17 + $0x1c] sm:$0xf]
        %v2306 = vld [vmem:[#allocation17 + $0x20] sm:$0xf]
        %v2307 = vld [vmem:[#allocation17 + $0x24] sm:$0xf]
        %v2308 = vld [vmem:[#allocation17 + $0x28] sm:$0xf]
        %v2309 = vld [vmem:[#allocation17 + $0x2c] sm:$0xf]
        %v2310 = vld [vmem:[#allocation17 + $0x30] sm:$0xf]
        %v2311 = vld [vmem:[#allocation17 + $0x34] sm:$0xf]
        %v2312 = vld [vmem:[#allocation17 + $0x38] sm:$0xf]
        %v2313 = vld [vmem:[#allocation17 + $0x3c] sm:$0xf]
        %v2314 = vld [vmem:[%s45] sm:$0x1]
        %v2316 = vperm.slane %v2314, 0
        %v2334 = vunpack.c.l.b16 %v2298
        %v2335 = vunpack.c.l.b16 %v2299
        %v2336 = vunpack.c.l.b16 %v2300
        %v2337 = vunpack.c.l.b16 %v2301
        %v2338 = vunpack.c.l.b16 %v2302
        %v2339 = vunpack.c.l.b16 %v2303
        %v2340 = vunpack.c.l.b16 %v2304
        %v2341 = vunpack.c.l.b16 %v2305
        %v2342 = vunpack.c.l.b16 %v2306
        %v2343 = vunpack.c.l.b16 %v2307
        %v2344 = vunpack.c.l.b16 %v2308
        %v2345 = vunpack.c.l.b16 %v2309
        %v2346 = vunpack.c.l.b16 %v2310
        %v2347 = vunpack.c.l.b16 %v2311
        %v2348 = vunpack.c.l.b16 %v2312
        %v2349 = vunpack.c.l.b16 %v2313
        %v2350 = vpack.c.b16 %v2335, %v2334
        %v2351 = vpack.c.b16 %v2337, %v2336
        %v2352 = vpack.c.b16 %v2339, %v2338
        %v2353 = vpack.c.b16 %v2341, %v2340
        %v2354 = vpack.c.b16 %v2343, %v2342
        %v2355 = vpack.c.b16 %v2345, %v2344
        %v2356 = vpack.c.b16 %v2347, %v2346
        %v2357 = vpack.c.b16 %v2349, %v2348
        %2366 = vmatpush.bf16.msra.mxu0 %v2357
        %2367 = vmatpush.bf16.msra.mxu0 %v2356
        %2368 = vmatpush.bf16.msra.mxu0 %v2355
        %2369 = vmatpush.bf16.msra.mxu0 %v2354
        %2370 = vmatpush.bf16.msra.mxu0 %v2353
        %2371 = vmatpush.bf16.msra.mxu0 %v2352
        %2372 = vmatpush.bf16.msra.mxu0 %v2351
        %2373 = vmatpush.bf16.msra.mxu0 %v2350
        %2374 = vmatmul.bf16.gmra.mxu0 %v2297
        %v2375 = vpop.f32.mrf.mxu0
        %v2376 = vadd.f32 %v2316, %v2375
        %v2377 = vpop.f32.mrf.mxu0
        %2378 = vdwg.mxu0
        %v2379 = vmax.f32 %v2376, 0.0
        %v2380 = vpack.c.bf16 %v2379, %v2379
        %v2381 = vld [vmem:[#allocation19] sm:$0xf]
        %v2382 = vld [vmem:[#allocation19 + $0x4] sm:$0xf]
        %v2383 = vld [vmem:[#allocation19 + $0x8] sm:$0xf]
        %v2384 = vld [vmem:[#allocation19 + $0xc] sm:$0xf]
        %v2385 = vld [vmem:[#allocation19 + $0x10] sm:$0xf]
        %v2386 = vld [vmem:[#allocation19 + $0x14] sm:$0xf]
        %v2387 = vld [vmem:[#allocation19 + $0x18] sm:$0xf]
        %v2388 = vld [vmem:[#allocation19 + $0x1c] sm:$0xf]
        %v2389 = vld [vmem:[#allocation19 + $0x20] sm:$0xf]
        %v2390 = vld [vmem:[#allocation19 + $0x24] sm:$0xf]
        %v2391 = vld [vmem:[#allocation19 + $0x28] sm:$0xf]
        %v2392 = vld [vmem:[#allocation19 + $0x2c] sm:$0xf]
        %v2393 = vld [vmem:[#allocation19 + $0x30] sm:$0xf]
        %v2394 = vld [vmem:[#allocation19 + $0x34] sm:$0xf]
        %v2395 = vld [vmem:[#allocation19 + $0x38] sm:$0xf]
        %v2396 = vld [vmem:[#allocation19 + $0x3c] sm:$0xf]
        %v2397 = vld [vmem:[%s55] sm:$0x1]
        %v2399 = vperm.slane %v2397, 0
        %v2417 = vunpack.c.l.b16 %v2381
        %v2418 = vunpack.c.l.b16 %v2382
        %v2419 = vunpack.c.l.b16 %v2383
        %v2420 = vunpack.c.l.b16 %v2384
        %v2421 = vunpack.c.l.b16 %v2385
        %v2422 = vunpack.c.l.b16 %v2386
        %v2423 = vunpack.c.l.b16 %v2387
        %v2424 = vunpack.c.l.b16 %v2388
        %v2425 = vunpack.c.l.b16 %v2389
        %v2426 = vunpack.c.l.b16 %v2390
        %v2427 = vunpack.c.l.b16 %v2391
        %v2428 = vunpack.c.l.b16 %v2392
        %v2429 = vunpack.c.l.b16 %v2393
        %v2430 = vunpack.c.l.b16 %v2394
        %v2431 = vunpack.c.l.b16 %v2395
        %v2432 = vunpack.c.l.b16 %v2396
        %v2433 = vpack.c.b16 %v2418, %v2417
        %v2434 = vpack.c.b16 %v2420, %v2419
        %v2435 = vpack.c.b16 %v2422, %v2421
        %v2436 = vpack.c.b16 %v2424, %v2423
        %v2437 = vpack.c.b16 %v2426, %v2425
        %v2438 = vpack.c.b16 %v2428, %v2427
        %v2439 = vpack.c.b16 %v2430, %v2429
        %v2440 = vpack.c.b16 %v2432, %v2431
        %2449 = vmatpush.bf16.msra.mxu0 %v2440
        %2450 = vmatpush.bf16.msra.mxu0 %v2439
        %2451 = vmatpush.bf16.msra.mxu0 %v2438
        %2452 = vmatpush.bf16.msra.mxu0 %v2437
        %2453 = vmatpush.bf16.msra.mxu0 %v2436
        %2454 = vmatpush.bf16.msra.mxu0 %v2435
        %2455 = vmatpush.bf16.msra.mxu0 %v2434
        %2456 = vmatpush.bf16.msra.mxu0 %v2433
        %2457 = vmatmul.bf16.gmra.mxu0 %v2380
        %v2458 = vpop.f32.mrf.mxu0
        %v2459 = vadd.f32 %v2399, %v2458
        %v2460 = vpop.f32.mrf.mxu0
        %2461 = vdwg.mxu0
        %v2462 = vld [vmem:[#allocation20] sm:$0xf]
        %v2463 = vld [vmem:[#allocation20 + $0x4] sm:$0xf]
        %v2464 = vld [vmem:[#allocation20 + $0x8] sm:$0xf]
        %v2465 = vld [vmem:[#allocation20 + $0xc] sm:$0xf]
        %v2466 = vld [vmem:[#allocation20 + $0x10] sm:$0xf]
        %v2467 = vld [vmem:[#allocation20 + $0x14] sm:$0xf]
        %v2468 = vld [vmem:[#allocation20 + $0x18] sm:$0xf]
        %v2469 = vld [vmem:[#allocation20 + $0x1c] sm:$0xf]
        %v2470 = vld [vmem:[#allocation20 + $0x20] sm:$0xf]
        %v2471 = vld [vmem:[#allocation20 + $0x24] sm:$0xf]
        %v2472 = vld [vmem:[#allocation20 + $0x28] sm:$0xf]
        %v2473 = vld [vmem:[#allocation20 + $0x2c] sm:$0xf]
        %v2474 = vld [vmem:[#allocation20 + $0x30] sm:$0xf]
        %v2475 = vld [vmem:[#allocation20 + $0x34] sm:$0xf]
        %v2476 = vld [vmem:[#allocation20 + $0x38] sm:$0xf]
        %v2477 = vld [vmem:[#allocation20 + $0x3c] sm:$0xf]
        %v2478 = vld [vmem:[%s57] sm:$0x1]
        %v2480 = vperm.slane %v2478, 0
        %v2498 = vunpack.c.l.b16 %v2462
        %v2499 = vunpack.c.l.b16 %v2463
        %v2500 = vunpack.c.l.b16 %v2464
        %v2501 = vunpack.c.l.b16 %v2465
        %v2502 = vunpack.c.l.b16 %v2466
        %v2503 = vunpack.c.l.b16 %v2467
        %v2504 = vunpack.c.l.b16 %v2468
        %v2505 = vunpack.c.l.b16 %v2469
        %v2506 = vunpack.c.l.b16 %v2470
        %v2507 = vunpack.c.l.b16 %v2471
        %v2508 = vunpack.c.l.b16 %v2472
        %v2509 = vunpack.c.l.b16 %v2473
        %v2510 = vunpack.c.l.b16 %v2474
        %v2511 = vunpack.c.l.b16 %v2475
        %v2512 = vunpack.c.l.b16 %v2476
        %v2513 = vunpack.c.l.b16 %v2477
        %v2514 = vpack.c.b16 %v2499, %v2498
        %v2515 = vpack.c.b16 %v2501, %v2500
        %v2516 = vpack.c.b16 %v2503, %v2502
        %v2517 = vpack.c.b16 %v2505, %v2504
        %v2518 = vpack.c.b16 %v2507, %v2506
        %v2519 = vpack.c.b16 %v2509, %v2508
        %v2520 = vpack.c.b16 %v2511, %v2510
        %v2521 = vpack.c.b16 %v2513, %v2512
        %2530 = vmatpush.bf16.msra.mxu0 %v2521
        %2531 = vmatpush.bf16.msra.mxu0 %v2520
        %2532 = vmatpush.bf16.msra.mxu0 %v2519
        %2533 = vmatpush.bf16.msra.mxu0 %v2518
        %2534 = vmatpush.bf16.msra.mxu0 %v2517
        %2535 = vmatpush.bf16.msra.mxu0 %v2516
        %2536 = vmatpush.bf16.msra.mxu0 %v2515
        %2537 = vmatpush.bf16.msra.mxu0 %v2514
        %2538 = vmatmul.bf16.gmra.mxu0 %v2380
        %v2539 = vpop.f32.mrf.mxu0
        %v2540 = vadd.f32 %v2480, %v2539
        %v2541 = vpop.f32.mrf.mxu0
        %2542 = vdwg.mxu0
        %v2543 = vld [vmem:[#allocation22] sm:$0xf]
        %v2544 = vld [vmem:[#allocation22 + $0x4] sm:$0xf]
        %v2545 = vld [vmem:[#allocation22 + $0x8] sm:$0xf]
        %v2546 = vld [vmem:[#allocation22 + $0xc] sm:$0xf]
        %v2547 = vld [vmem:[#allocation22 + $0x10] sm:$0xf]
        %v2548 = vld [vmem:[#allocation22 + $0x14] sm:$0xf]
        %v2549 = vld [vmem:[#allocation22 + $0x18] sm:$0xf]
        %v2550 = vld [vmem:[#allocation22 + $0x1c] sm:$0xf]
        %v2551 = vld [vmem:[#allocation22 + $0x20] sm:$0xf]
        %v2552 = vld [vmem:[#allocation22 + $0x24] sm:$0xf]
        %v2553 = vld [vmem:[#allocation22 + $0x28] sm:$0xf]
        %v2554 = vld [vmem:[#allocation22 + $0x2c] sm:$0xf]
        %v2555 = vld [vmem:[#allocation22 + $0x30] sm:$0xf]
        %v2556 = vld [vmem:[#allocation22 + $0x34] sm:$0xf]
        %v2557 = vld [vmem:[#allocation22 + $0x38] sm:$0xf]
        %v2558 = vld [vmem:[#allocation22 + $0x3c] sm:$0xf]
        %v2559 = vld [vmem:[%s59] sm:$0x1]
        %v2561 = vperm.slane %v2559, 0
        %v2579 = vunpack.c.l.b16 %v2543
        %v2580 = vunpack.c.l.b16 %v2544
        %v2581 = vunpack.c.l.b16 %v2545
        %v2582 = vunpack.c.l.b16 %v2546
        %v2583 = vunpack.c.l.b16 %v2547
        %v2584 = vunpack.c.l.b16 %v2548
        %v2585 = vunpack.c.l.b16 %v2549
        %v2586 = vunpack.c.l.b16 %v2550
        %v2587 = vunpack.c.l.b16 %v2551
        %v2588 = vunpack.c.l.b16 %v2552
        %v2589 = vunpack.c.l.b16 %v2553
        %v2590 = vunpack.c.l.b16 %v2554
        %v2591 = vunpack.c.l.b16 %v2555
        %v2592 = vunpack.c.l.b16 %v2556
        %v2593 = vunpack.c.l.b16 %v2557
        %v2594 = vunpack.c.l.b16 %v2558
        %v2595 = vpack.c.b16 %v2580, %v2579
        %v2596 = vpack.c.b16 %v2582, %v2581
        %v2597 = vpack.c.b16 %v2584, %v2583
        %v2598 = vpack.c.b16 %v2586, %v2585
        %v2599 = vpack.c.b16 %v2588, %v2587
        %v2600 = vpack.c.b16 %v2590, %v2589
        %v2601 = vpack.c.b16 %v2592, %v2591
        %v2602 = vpack.c.b16 %v2594, %v2593
        %2611 = vmatpush.bf16.msra.mxu0 %v2602
        %2612 = vmatpush.bf16.msra.mxu0 %v2601
        %2613 = vmatpush.bf16.msra.mxu0 %v2600
        %2614 = vmatpush.bf16.msra.mxu0 %v2599
        %2615 = vmatpush.bf16.msra.mxu0 %v2598
        %2616 = vmatpush.bf16.msra.mxu0 %v2597
        %2617 = vmatpush.bf16.msra.mxu0 %v2596
        %2618 = vmatpush.bf16.msra.mxu0 %v2595
        %2619 = vmatmul.bf16.gmra.mxu0 %v2380
        %v2620 = vpop.f32.mrf.mxu0
        %v2621 = vadd.f32 %v2561, %v2620
        %v2622 = vpop.f32.mrf.mxu0
        %2623 = vdwg.mxu0
        %v2624 = vmul.f32 %v2459, 0.17677669
        %v2625 = vpack.c.bf16 %v2624, %v2624
        %v2626 = vpack.c.bf16 %v2540, %v2540
        %2627 = vmatpush.bf16.xpose.msra.mxu0 0
        %2628 = vmatpush.bf16.xpose.msra.mxu0 0
        %2629 = vmatpush.bf16.xpose.msra.mxu0 0
        %2630 = vmatpush.bf16.xpose.msra.mxu0 0
        %2631 = vmatpush.bf16.xpose.msra.mxu0 0
        %2632 = vmatpush.bf16.xpose.msra.mxu0 0
        %2633 = vmatpush.bf16.xpose.msra.mxu0 0
        %2634 = vmatpush.bf16.xpose.msra.mxu0 %v2626
        %2635 = vmatmul.bf16.gmra.mxu0 %v2625
        %v2636 = vpop.f32.mrf.mxu0
        %v2637 = vadd.f32 0.0, %v2636
        %v2638 = vpop.f32.mrf.mxu0
        %2639 = vdwg.mxu0
        %v2640 = vsel %vm1870, %v2637, -inf
        %2641 = vmax.xlane.f32.xlu0 %v2640
        %v2642 = vpop.xlane.xlu0 %2641
        %v2643 = vsub.f32 %v2637, %v2642
        %v2644 = vmul.f32 %v2643, 1.442695
        %v2645 = vpow.pop %v2644
        %v2646 = vsel %vm1870, %v2645, 0.0
        %2647 = vadd.xlane.f32.xlu0 %v2646
        %v2648 = vpop.xlane.xlu0 %2647
        %v2649 = vrcp.pop %v2648
        %v2650 = vmul.f32 %v2645, %v2649
        %v2651 = vpack.c.bf16 %v2650, %v2650
        %v2652 = vpack.c.bf16 %v2621, %v2621
        %v2654 = vsel %vm1870, %v2651, 0
        %v2657 = vsel %vm1887, %v2652, 0
        %2659 = vmatpush.bf16.msra.mxu0 0
        %2660 = vmatpush.bf16.msra.mxu0 0
        %2661 = vmatpush.bf16.msra.mxu0 0
        %2662 = vmatpush.bf16.msra.mxu0 0
        %2663 = vmatpush.bf16.msra.mxu0 0
        %2664 = vmatpush.bf16.msra.mxu0 0
        %2665 = vmatpush.bf16.msra.mxu0 0
        %2666 = vmatpush.bf16.msra.mxu0 %v2657
        %2667 = vmatmul.bf16.gmra.mxu0 %v2654
        %v2668 = vpop.f32.mrf.mxu0
        %v2669 = vadd.f32 0.0, %v2668
        %v2670 = vpop.f32.mrf.mxu0
        %2671 = vdwg.mxu0
        %v2672 = vpack.c.bf16 %v2669, %v2669
        %v2673 = vld [vmem:[#allocation23] sm:$0xf]
        %v2674 = vld [vmem:[#allocation23 + $0x4] sm:$0xf]
        %v2675 = vld [vmem:[#allocation23 + $0x8] sm:$0xf]
        %v2676 = vld [vmem:[#allocation23 + $0xc] sm:$0xf]
        %v2677 = vld [vmem:[#allocation23 + $0x10] sm:$0xf]
        %v2678 = vld [vmem:[#allocation23 + $0x14] sm:$0xf]
        %v2679 = vld [vmem:[#allocation23 + $0x18] sm:$0xf]
        %v2680 = vld [vmem:[#allocation23 + $0x1c] sm:$0xf]
        %v2681 = vld [vmem:[#allocation23 + $0x20] sm:$0xf]
        %v2682 = vld [vmem:[#allocation23 + $0x24] sm:$0xf]
        %v2683 = vld [vmem:[#allocation23 + $0x28] sm:$0xf]
        %v2684 = vld [vmem:[#allocation23 + $0x2c] sm:$0xf]
        %v2685 = vld [vmem:[#allocation23 + $0x30] sm:$0xf]
        %v2686 = vld [vmem:[#allocation23 + $0x34] sm:$0xf]
        %v2687 = vld [vmem:[#allocation23 + $0x38] sm:$0xf]
        %v2688 = vld [vmem:[#allocation23 + $0x3c] sm:$0xf]
        %v2689 = vld [vmem:[%s61] sm:$0x1]
        %v2691 = vperm.slane %v2689, 0
        %v2709 = vunpack.c.l.b16 %v2673
        %v2710 = vunpack.c.l.b16 %v2674
        %v2711 = vunpack.c.l.b16 %v2675
        %v2712 = vunpack.c.l.b16 %v2676
        %v2713 = vunpack.c.l.b16 %v2677
        %v2714 = vunpack.c.l.b16 %v2678
        %v2715 = vunpack.c.l.b16 %v2679
        %v2716 = vunpack.c.l.b16 %v2680
        %v2717 = vunpack.c.l.b16 %v2681
        %v2718 = vunpack.c.l.b16 %v2682
        %v2719 = vunpack.c.l.b16 %v2683
        %v2720 = vunpack.c.l.b16 %v2684
        %v2721 = vunpack.c.l.b16 %v2685
        %v2722 = vunpack.c.l.b16 %v2686
        %v2723 = vunpack.c.l.b16 %v2687
        %v2724 = vunpack.c.l.b16 %v2688
        %v2725 = vpack.c.b16 %v2710, %v2709
        %v2726 = vpack.c.b16 %v2712, %v2711
        %v2727 = vpack.c.b16 %v2714, %v2713
        %v2728 = vpack.c.b16 %v2716, %v2715
        %v2729 = vpack.c.b16 %v2718, %v2717
        %v2730 = vpack.c.b16 %v2720, %v2719
        %v2731 = vpack.c.b16 %v2722, %v2721
        %v2732 = vpack.c.b16 %v2724, %v2723
        %2741 = vmatpush.bf16.msra.mxu0 %v2732
        %2742 = vmatpush.bf16.msra.mxu0 %v2731
        %2743 = vmatpush.bf16.msra.mxu0 %v2730
        %2744 = vmatpush.bf16.msra.mxu0 %v2729
        %2745 = vmatpush.bf16.msra.mxu0 %v2728
        %2746 = vmatpush.bf16.msra.mxu0 %v2727
        %2747 = vmatpush.bf16.msra.mxu0 %v2726
        %2748 = vmatpush.bf16.msra.mxu0 %v2725
        %2749 = vmatmul.bf16.gmra.mxu0 %v2672
        %v2750 = vpop.f32.mrf.mxu0
        %v2751 = vadd.f32 %v2691, %v2750
        %v2752 = vpop.f32.mrf.mxu0
        %2753 = vdwg.mxu0
        %v2754 = vadd.f32 %v2379, %v2751
        %v2755 = vld [vmem:[%s71] sm:$0x1]
        %v2756 = vld [vmem:[%s73] sm:$0x1]
        %2757 = vadd.xlane.f32.xlu0 %v2754
        %v2758 = vpop.xlane.xlu0 %2757
        %v2759 = vmul.f32 %v2758, 0.03125
        %v2760 = vsub.f32 %v2754, %v2759
        %v2761 = vmul.f32 %v2760, %v2760
        %v2762 = vmul.f32 %v2761, %v1525
        %2763 = vadd.xlane.f32.xlu0 %v2762
        %v2764 = vpop.xlane.xlu0 %2763
        %v2765 = vmul.f32 %v2764, 0.03125
        %v2766 = vadd.f32 %v2765, 1e-05
        %v2767 = vrsqrt.pop %v2766
        %v2768 = vmul.f32 %v2767, %v2766
        %v2769 = vmul.f32 %v2768, %v2767
        %v2770 = vmul.f32 0.5, %v2769
        %v2771 = vsub.f32 1.5, %v2770
        %v2772 = vmul.f32 %v2767, %v2771
        %vm2773 = vweird.f32 %v2766
        %vm2774 = vweird.f32 %v2767
        %vm2775 = vmor %vm2773, %vm2774
        %v2776 = vsel %vm2775, %v2767, %v2772
        %v2777 = vmul.f32 %v2760, %v2776
        %v2779 = vperm.slane %v2755, 0
        %v2781 = vmul.f32 %v2777, %v2779
        %v2783 = vperm.slane %v2756, 0
        %v2785 = vadd.f32 %v2781, %v2783
        %v2786 = vpack.c.bf16 %v2785, %v2785
        %v2787 = vld [vmem:[#allocation25] sm:$0xf]
        %v2788 = vld [vmem:[#allocation25 + $0x4] sm:$0xf]
        %v2789 = vld [vmem:[#allocation25 + $0x8] sm:$0xf]
        %v2790 = vld [vmem:[#allocation25 + $0xc] sm:$0xf]
        %v2791 = vld [vmem:[#allocation25 + $0x10] sm:$0xf]
        %v2792 = vld [vmem:[#allocation25 + $0x14] sm:$0xf]
        %v2793 = vld [vmem:[#allocation25 + $0x18] sm:$0xf]
        %v2794 = vld [vmem:[#allocation25 + $0x1c] sm:$0xf]
        %v2795 = vld [vmem:[#allocation25 + $0x20] sm:$0xf]
        %v2796 = vld [vmem:[#allocation25 + $0x24] sm:$0xf]
        %v2797 = vld [vmem:[#allocation25 + $0x28] sm:$0xf]
        %v2798 = vld [vmem:[#allocation25 + $0x2c] sm:$0xf]
        %v2799 = vld [vmem:[#allocation25 + $0x30] sm:$0xf]
        %v2800 = vld [vmem:[#allocation25 + $0x34] sm:$0xf]
        %v2801 = vld [vmem:[#allocation25 + $0x38] sm:$0xf]
        %v2802 = vld [vmem:[#allocation25 + $0x3c] sm:$0xf]
        %v2803 = vld [vmem:[%s65] sm:$0x1]
        %v2805 = vperm.slane %v2803, 0
        %v2823 = vunpack.c.l.b16 %v2787
        %v2824 = vunpack.c.l.b16 %v2788
        %v2825 = vunpack.c.l.b16 %v2789
        %v2826 = vunpack.c.l.b16 %v2790
        %v2827 = vunpack.c.l.b16 %v2791
        %v2828 = vunpack.c.l.b16 %v2792
        %v2829 = vunpack.c.l.b16 %v2793
        %v2830 = vunpack.c.l.b16 %v2794
        %v2831 = vunpack.c.l.b16 %v2795
        %v2832 = vunpack.c.l.b16 %v2796
        %v2833 = vunpack.c.l.b16 %v2797
        %v2834 = vunpack.c.l.b16 %v2798
        %v2835 = vunpack.c.l.b16 %v2799
        %v2836 = vunpack.c.l.b16 %v2800
        %v2837 = vunpack.c.l.b16 %v2801
        %v2838 = vunpack.c.l.b16 %v2802
        %v2839 = vpack.c.b16 %v2824, %v2823
        %v2840 = vpack.c.b16 %v2826, %v2825
        %v2841 = vpack.c.b16 %v2828, %v2827
        %v2842 = vpack.c.b16 %v2830, %v2829
        %v2843 = vpack.c.b16 %v2832, %v2831
        %v2844 = vpack.c.b16 %v2834, %v2833
        %v2845 = vpack.c.b16 %v2836, %v2835
        %v2846 = vpack.c.b16 %v2838, %v2837
        %2855 = vmatpush.bf16.msra.mxu0 %v2846
        %2856 = vmatpush.bf16.msra.mxu0 %v2845
        %2857 = vmatpush.bf16.msra.mxu0 %v2844
        %2858 = vmatpush.bf16.msra.mxu0 %v2843
        %2859 = vmatpush.bf16.msra.mxu0 %v2842
        %2860 = vmatpush.bf16.msra.mxu0 %v2841
        %2861 = vmatpush.bf16.msra.mxu0 %v2840
        %2862 = vmatpush.bf16.msra.mxu0 %v2839
        %2863 = vmatmul.bf16.gmra.mxu0 %v2786
        %v2864 = vpop.f32.mrf.mxu0
        %v2865 = vadd.f32 %v2805, %v2864
        %v2866 = vpop.f32.mrf.mxu0
        %2867 = vdwg.mxu0
        %v2868 = vmax.f32 %v2865, 0.0
        %v2869 = vpack.c.bf16 %v2868, %v2868
        %v2870 = vld [vmem:[#allocation26] sm:$0xf]
        %v2871 = vld [vmem:[#allocation26 + $0x4] sm:$0xf]
        %v2872 = vld [vmem:[#allocation26 + $0x8] sm:$0xf]
        %v2873 = vld [vmem:[#allocation26 + $0xc] sm:$0xf]
        %v2874 = vld [vmem:[#allocation26 + $0x10] sm:$0xf]
        %v2875 = vld [vmem:[#allocation26 + $0x14] sm:$0xf]
        %v2876 = vld [vmem:[#allocation26 + $0x18] sm:$0xf]
        %v2877 = vld [vmem:[#allocation26 + $0x1c] sm:$0xf]
        %v2878 = vld [vmem:[#allocation26 + $0x20] sm:$0xf]
        %v2879 = vld [vmem:[#allocation26 + $0x24] sm:$0xf]
        %v2880 = vld [vmem:[#allocation26 + $0x28] sm:$0xf]
        %v2881 = vld [vmem:[#allocation26 + $0x2c] sm:$0xf]
        %v2882 = vld [vmem:[#allocation26 + $0x30] sm:$0xf]
        %v2883 = vld [vmem:[#allocation26 + $0x34] sm:$0xf]
        %v2884 = vld [vmem:[#allocation26 + $0x38] sm:$0xf]
        %v2885 = vld [vmem:[#allocation26 + $0x3c] sm:$0xf]
        %v2886 = vld [vmem:[%s69] sm:$0x1]
        %v2888 = vperm.slane %v2886, 0
        %v2906 = vunpack.c.l.b16 %v2870
        %v2907 = vunpack.c.l.b16 %v2871
        %v2908 = vunpack.c.l.b16 %v2872
        %v2909 = vunpack.c.l.b16 %v2873
        %v2910 = vunpack.c.l.b16 %v2874
        %v2911 = vunpack.c.l.b16 %v2875
        %v2912 = vunpack.c.l.b16 %v2876
        %v2913 = vunpack.c.l.b16 %v2877
        %v2914 = vunpack.c.l.b16 %v2878
        %v2915 = vunpack.c.l.b16 %v2879
        %v2916 = vunpack.c.l.b16 %v2880
        %v2917 = vunpack.c.l.b16 %v2881
        %v2918 = vunpack.c.l.b16 %v2882
        %v2919 = vunpack.c.l.b16 %v2883
        %v2920 = vunpack.c.l.b16 %v2884
        %v2921 = vunpack.c.l.b16 %v2885
        %v2922 = vpack.c.b16 %v2907, %v2906
        %v2923 = vpack.c.b16 %v2909, %v2908
        %v2924 = vpack.c.b16 %v2911, %v2910
        %v2925 = vpack.c.b16 %v2913, %v2912
        %v2926 = vpack.c.b16 %v2915, %v2914
        %v2927 = vpack.c.b16 %v2917, %v2916
        %v2928 = vpack.c.b16 %v2919, %v2918
        %v2929 = vpack.c.b16 %v2921, %v2920
        %2938 = vmatpush.bf16.msra.mxu0 %v2929
        %2939 = vmatpush.bf16.msra.mxu0 %v2928
        %2940 = vmatpush.bf16.msra.mxu0 %v2927
        %2941 = vmatpush.bf16.msra.mxu0 %v2926
        %2942 = vmatpush.bf16.msra.mxu0 %v2925
        %2943 = vmatpush.bf16.msra.mxu0 %v2924
        %2944 = vmatpush.bf16.msra.mxu0 %v2923
        %2945 = vmatpush.bf16.msra.mxu0 %v2922
        %2946 = vmatmul.bf16.gmra.mxu0 %v2869
        %v2947 = vpop.f32.mrf.mxu0
        %v2948 = vadd.f32 %v2888, %v2947
        %v2949 = vpop.f32.mrf.mxu0
        %2950 = vdwg.mxu0
        %v2951 = vadd.f32 %v2785, %v2948
        %v2952 = vld [vmem:[%s75] sm:$0x1]
        %v2953 = vld [vmem:[%s77] sm:$0x1]
        %2954 = vadd.xlane.f32.xlu0 %v2951
        %v2955 = vpop.xlane.xlu0 %2954
        %v2956 = vmul.f32 %v2955, 0.03125
        %v2957 = vsub.f32 %v2951, %v2956
        %v2958 = vmul.f32 %v2957, %v2957
        %v2959 = vmul.f32 %v2958, %v1525
        %2960 = vadd.xlane.f32.xlu0 %v2959
        %v2961 = vpop.xlane.xlu0 %2960
        %v2962 = vmul.f32 %v2961, 0.03125
        %v2963 = vadd.f32 %v2962, 1e-05
        %v2964 = vrsqrt.pop %v2963
        %v2965 = vmul.f32 %v2964, %v2963
        %v2966 = vmul.f32 %v2965, %v2964
        %v2967 = vmul.f32 0.5, %v2966
        %v2968 = vsub.f32 1.5, %v2967
        %v2969 = vmul.f32 %v2964, %v2968
        %vm2970 = vweird.f32 %v2963
        %vm2971 = vweird.f32 %v2964
        %vm2972 = vmor %vm2970, %vm2971
        %v2973 = vsel %vm2972, %v2964, %v2969
        %v2974 = vmul.f32 %v2957, %v2973
        %v2976 = vperm.slane %v2952, 0
        %v2978 = vmul.f32 %v2974, %v2976
        %v2980 = vperm.slane %v2953, 0
        %v2982 = vadd.f32 %v2978, %v2980
        %v2983 = vpack.c.bf16 %v2982, %v2982
        %v2984 = vld [vmem:[#allocation28] sm:$0xf]
        %v2985 = vld [vmem:[#allocation28 + $0x4] sm:$0xf]
        %v2986 = vld [vmem:[#allocation28 + $0x8] sm:$0xf]
        %v2987 = vld [vmem:[#allocation28 + $0xc] sm:$0xf]
        %v2988 = vld [vmem:[#allocation28 + $0x10] sm:$0xf]
        %v2989 = vld [vmem:[#allocation28 + $0x14] sm:$0xf]
        %v2990 = vld [vmem:[#allocation28 + $0x18] sm:$0xf]
        %v2991 = vld [vmem:[#allocation28 + $0x1c] sm:$0xf]
        %v2992 = vld [vmem:[#allocation28 + $0x20] sm:$0xf]
        %v2993 = vld [vmem:[#allocation28 + $0x24] sm:$0xf]
        %v2994 = vld [vmem:[#allocation28 + $0x28] sm:$0xf]
        %v2995 = vld [vmem:[#allocation28 + $0x2c] sm:$0xf]
        %v2996 = vld [vmem:[#allocation28 + $0x30] sm:$0xf]
        %v2997 = vld [vmem:[#allocation28 + $0x34] sm:$0xf]
        %v2998 = vld [vmem:[#allocation28 + $0x38] sm:$0xf]
        %v2999 = vld [vmem:[#allocation28 + $0x3c] sm:$0xf]
        %v3000 = vld [vmem:[%s81] sm:$0x1]
        %v3002 = vperm.slane %v3000, 0
        %v3020 = vunpack.c.l.b16 %v2984
        %v3021 = vunpack.c.l.b16 %v2985
        %v3022 = vunpack.c.l.b16 %v2986
        %v3023 = vunpack.c.l.b16 %v2987
        %v3024 = vunpack.c.l.b16 %v2988
        %v3025 = vunpack.c.l.b16 %v2989
        %v3026 = vunpack.c.l.b16 %v2990
        %v3027 = vunpack.c.l.b16 %v2991
        %v3028 = vunpack.c.l.b16 %v2992
        %v3029 = vunpack.c.l.b16 %v2993
        %v3030 = vunpack.c.l.b16 %v2994
        %v3031 = vunpack.c.l.b16 %v2995
        %v3032 = vunpack.c.l.b16 %v2996
        %v3033 = vunpack.c.l.b16 %v2997
        %v3034 = vunpack.c.l.b16 %v2998
        %v3035 = vunpack.c.l.b16 %v2999
        %v3036 = vpack.c.b16 %v3021, %v3020
        %v3037 = vpack.c.b16 %v3023, %v3022
        %v3038 = vpack.c.b16 %v3025, %v3024
        %v3039 = vpack.c.b16 %v3027, %v3026
        %v3040 = vpack.c.b16 %v3029, %v3028
        %v3041 = vpack.c.b16 %v3031, %v3030
        %v3042 = vpack.c.b16 %v3033, %v3032
        %v3043 = vpack.c.b16 %v3035, %v3034
        %3052 = vmatpush.bf16.msra.mxu0 %v3043
        %3053 = vmatpush.bf16.msra.mxu0 %v3042
        %3054 = vmatpush.bf16.msra.mxu0 %v3041
        %3055 = vmatpush.bf16.msra.mxu0 %v3040
        %3056 = vmatpush.bf16.msra.mxu0 %v3039
        %3057 = vmatpush.bf16.msra.mxu0 %v3038
        %3058 = vmatpush.bf16.msra.mxu0 %v3037
        %3059 = vmatpush.bf16.msra.mxu0 %v3036
        %3060 = vmatmul.bf16.gmra.mxu0 %v2983
        %v3061 = vpop.f32.mrf.mxu0
        %v3062 = vadd.f32 %v3002, %v3061
        %v3063 = vpop.f32.mrf.mxu0
        %3064 = vdwg.mxu0
        %3065 = vst [vmem:[%s1519] sm:$0xff] %v3062
        %s3066 = sand.u32 %s982, 1
        %s3067 = scalar_lea.sflag [#allocation4], %s3066
        %s3068 = sand.u32 %s982, 1
        %s3069 = smul.addr %s3068, 8
        %s3070 = scalar_lea.vmem [#allocation29], %s3069
        // Predicated region
        $region253: #{tpu_custom_call.1} parent=183 // pred_check
          %p3071 = pneg %p992
        $region254: #{tpu_custom_call.1} parent=183 // pred_check_branch
          %3073 = sbr.rel (%p3071) target = $region256
        $region255: #{tpu_custom_call.1} parent=183 // pred_region
          %3075 = vsyncadd %s3067, 0
          %s3076 = smul.addr %s108, 8
          %s3077 = scalar_lea.hbm %s83, %s3076
          %s3079 = sshll.u32 %s3070, 4
          %s3080 = int_to_ptr.vmem [resolvable:$true] %s3079
          %s3081 = sshll.u32 %s3077, 4
          %s3082 = int_to_ptr.hbm [resolvable:$true] %s3081
          %3084 = dma.vmem_to_hbm [thread:$0]  %s3080, 128, %s3082, %s3067
        $region256: #{tpu_custom_call.1} parent=183 // pred_fallthru
          _
      $region184: #{tpu_custom_call.1} parent=5 // pred_fallthru
        _
      %p3085 = scmp.le.s32.totalorder 2, %s103
      // Predicated region
      $region257: #{tpu_custom_call.1} parent=5 // pred_check
        %p3086 = pneg %p3085
      $region258: #{tpu_custom_call.1} parent=5 // pred_check_branch
        %3088 = sbr.rel (%p3086) target = $region260
      $region259: #{tpu_custom_call.1} parent=5 // pred_region
        %s3089 = ssub.s32 %s103, 2
        // Predicated region
        $region261: #{tpu_custom_call.1} parent=259 // pred_check
          %p3090 = pneg %p998
        $region262: #{tpu_custom_call.1} parent=259 // pred_check_branch
          %3092 = sbr.rel (%p3090) target = $region264
        $region263: #{tpu_custom_call.1} parent=259 // pred_region
          %s3093 = sand.u32 %s983, 1
          %s3094 = scalar_lea.sflag [#allocation4], %s3093
          %s3095 = sand.u32 %s983, 1
          %s3096 = smul.addr %s3095, 8
          %s3097 = scalar_lea.vmem [#allocation29], %s3096
          %3099 = dma.done %s3094, 128
        $region264: #{tpu_custom_call.1} parent=259 // pred_fallthru
          _
      $region260: #{tpu_custom_call.1} parent=5 // pred_fallthru
        _
    $region6: #{tpu_custom_call.1} parent=1 // loop_footer
      %s107 = sadd.s32 1, %s103
    $region7: #{tpu_custom_call.1} parent=1 // loop_footer_branch
      %102 = sbr.rel target = $region3
    $region8: #{tpu_custom_call.1} parent=1 // loop_exit
      _
    %3100 = vsyncpa [#allocation3], 1
    %s3101 = scalar_lea.sflag [#allocation3], 1
    %3102 = vsyncpa %s3101, 1
    %3103 = vsyncpa [#allocation6], 1
    %3104 = vsyncpa [#allocation9], 1
    %3105 = vsyncpa [#allocation12], 1
    %3106 = vsyncpa [#allocation15], 1
    %3107 = vsyncpa [#allocation18], 1
    %3108 = vsyncpa [#allocation21], 1
    %3109 = vsyncpa [#allocation24], 1
    %3110 = vsyncpa [#allocation27], 1
    %3111 = vsyncpa [#allocation4], 1
    %s3112 = scalar_lea.sflag [#allocation4], 1
    %3113 = vsyncpa %s3112, 1

</llo_original>
